<compile_context>
chip_gen: v7x
topology: tpu7x:2x2x1
jax: 0.10.0
libtpu: 0.0.40
codegen_flags: <defaults>
</compile_context>

<pallas_src>
import functools

import numpy as np
import jax
import jax.numpy as jnp
from jax.experimental import pallas as pl
from jax.experimental.pallas import tpu as pltpu

_NEG_BIG = -1e30
_LANES = 128


def _supcon_tile_kernel(q_ref, k_ref, gid_col_ref, gid_row_ref, o_ref,
                        m_sc, l_sc, ps_sc, pc_sc, *, inv_temp, block_m, block_k):
    """One (anchor-tile, key-tile) step of the SupCon per-anchor loss.

    q_ref       : (TM, Dpad) bf16  normalized anchor embeddings
    k_ref       : (TK, Dpad) bf16  normalized key embeddings
    gid_col_ref : (TM, 1)    i32   graph id per anchor row (-1 = padding)
    gid_row_ref : (1, TK)    i32   graph id per key column (-1 = padding)
    o_ref       : (TM, 128)  f32   per-anchor loss broadcast across lanes
    scratch     : running max / running sum / pos-logit sum / pos count, all (TM, 1) f32
    """
    i = pl.program_id(0)
    kk = pl.program_id(1)

    @pl.when(kk == 0)
    def _init():
        m_sc[...] = jnp.full(m_sc.shape, _NEG_BIG, jnp.float32)
        l_sc[...] = jnp.zeros(l_sc.shape, jnp.float32)
        ps_sc[...] = jnp.zeros(ps_sc.shape, jnp.float32)
        pc_sc[...] = jnp.zeros(pc_sc.shape, jnp.float32)

    # (TM, TK) scaled cosine similarity on the MXU: bf16 inputs, f32 accumulate.
    s = jax.lax.dot_general(
        q_ref[...], k_ref[...], (((1,), (1,)), ((), ())),
        preferred_element_type=jnp.float32,
    ) * inv_temp

    gid_i = gid_col_ref[...]                                        # (TM, 1)
    gid_j = gid_row_ref[...]                                        # (1, TK)
    row = i * block_m + jax.lax.broadcasted_iota(jnp.int32, (block_m, 1), 0)
    col = kk * block_k + jax.lax.broadcasted_iota(jnp.int32, (1, block_k), 1)
    self_eq = row == col                                            # (TM, TK)
    kill = self_eq | (gid_j < 0)                                    # self + padded keys
    sm = jnp.where(kill, _NEG_BIG, s)                               # masked logits
    pos_f = ((gid_i == gid_j) & jnp.logical_not(self_eq)).astype(jnp.float32)

    # Positive-pair accumulators (independent of the running max).
    ps_sc[...] += jnp.sum(pos_f * sm, axis=-1, keepdims=True)
    pc_sc[...] += jnp.sum(pos_f, axis=-1, keepdims=True)

    # Online logsumexp over non-self, non-padded keys.
    m_prev = m_sc[...]
    m_new = jnp.maximum(m_prev, jnp.max(sm, axis=-1, keepdims=True))
    l_sc[...] = jnp.exp(m_prev - m_new) * l_sc[...] + jnp.sum(
        jnp.exp(sm - m_new), axis=-1, keepdims=True)
    m_sc[...] = m_new

    @pl.when(kk == pl.num_programs(1) - 1)
    def _finalize():
        lse = m_sc[...] + jnp.log(l_sc[...])
        pc = pc_sc[...]
        loss = -(ps_sc[...] - pc * lse) / jnp.maximum(pc, 1.0)
        loss = jnp.where((pc > 0) & (gid_i >= 0), loss, 0.0)
        o_ref[...] = jnp.broadcast_to(loss, o_ref.shape)            # lane-dense store


def structural_loss(graph_states, temperature=0.5, block_m=256, block_k=512):
    """graph_states: list of B arrays, each (n_b, D). Returns a scalar f32 loss."""
    batch_size = len(graph_states)
    d = graph_states[0].shape[1]
    sizes = [int(g.shape[0]) for g in graph_states]
    n_total = sum(sizes)

    x = jnp.concatenate([g.astype(jnp.float32) for g in graph_states], axis=0)
    gid = jnp.concatenate(
        [jnp.full((n,), b, dtype=jnp.int32) for b, n in enumerate(sizes)], axis=0)

    assert block_m % 128 == 0 and block_k % 128 == 0
    big = max(block_m, block_k)
    assert big % block_m == 0 and big % block_k == 0
    n_pad = int(np.ceil(n_total / big) * big)
    d_pad = int(np.ceil(d / _LANES) * _LANES)

    x_pad = jnp.zeros((n_pad, d_pad), jnp.float32).at[:n_total, :d].set(x)
    gid_pad = jnp.full((n_pad,), -1, jnp.int32).at[:n_total].set(gid)

    # L2-normalize once (rsqrt-and-multiply), cast to bf16 for the MXU Gram matmul.
    sumsq = jnp.sum(x_pad * x_pad, axis=-1, keepdims=True)
    zn = (x_pad * jax.lax.rsqrt(jnp.maximum(sumsq, 1e-24))).astype(jnp.bfloat16)

    grid = (n_pad // block_m, n_pad // block_k)
    kernel = functools.partial(_supcon_tile_kernel, inv_temp=1.0 / temperature,
                               block_m=block_m, block_k=block_k)

    per_anchor = pl.pallas_call(
        kernel,
        out_shape=jax.ShapeDtypeStruct((n_pad, _LANES), jnp.float32),
        grid=grid,
        in_specs=[
            pl.BlockSpec((block_m, d_pad), lambda i, k: (i, 0)),    # anchor tile
            pl.BlockSpec((block_k, d_pad), lambda i, k: (k, 0)),    # key tile
            pl.BlockSpec((block_m, 1), lambda i, k: (i, 0)),        # anchor graph ids
            pl.BlockSpec((1, block_k), lambda i, k: (0, k)),        # key graph ids
        ],
        out_specs=pl.BlockSpec((block_m, _LANES), lambda i, k: (i, 0)),
        scratch_shapes=[pltpu.VMEM((block_m, 1), jnp.float32)] * 4,
        compiler_params=pltpu.CompilerParams(
            dimension_semantics=("parallel", "arbitrary"),
            vmem_limit_bytes=32 * 1024 * 1024),
    )(zn, zn, gid_pad.reshape(n_pad, 1), gid_pad.reshape(1, n_pad))

    # ---- glue: per-graph AvgNonZero reduction, then mean over the batch ----
    # TODO(synk): fusing this tiny segment reduction into the kernel would require the
    # anchor axis to be "arbitrary" (shared output block), losing megacore sharding.
    losses = per_anchor[:n_total, 0]
    seg_sum = jax.ops.segment_sum(losses, gid, num_segments=batch_size)
    seg_cnt = jax.ops.segment_sum(
        (losses > 0).astype(jnp.float32), gid, num_segments=batch_size)
    per_graph = jnp.where(seg_cnt > 0, seg_sum / jnp.maximum(seg_cnt, 1.0), 0.0)
    return jnp.mean(per_graph)


def _reference_structural_loss(graph_states, temperature=0.5):
    """Plain-JAX mirror of the PyTorch loop (SupConLoss defaults) for verification."""
    b_total = len(graph_states)
    t_loss = 0.0
    for b in range(b_total):
        pos_emb = graph_states[b]
        neg_emb = jnp.concatenate(
            [graph_states[i] for i in range(b_total) if i != b], axis=0)
        emb = jnp.concatenate([pos_emb, neg_emb], axis=0)
        n_tot, n_pos = emb.shape[0], pos_emb.shape[0]
        labels = jnp.arange(n_tot).at[:n_pos].set(0)
        z = emb / jnp.maximum(jnp.linalg.norm(emb, axis=1, keepdims=True), 1e-12)
        s = (z @ z.T) / temperature
        eye = jnp.eye(n_tot, dtype=bool)
        pos_mask = (labels[:, None] == labels[None, :]) & ~eye
        lse = jax.scipy.special.logsumexp(
            jnp.where(~eye, s, -jnp.inf), axis=1, keepdims=True)
        logp = s - lse
        cnt = pos_mask.sum(axis=1)
        mlp = (pos_mask * logp).sum(axis=1) / jnp.maximum(cnt, 1)
        losses = jnp.where(cnt > 0, -mlp, 0.0)
        nz = (losses > 0).sum()
        t_loss = t_loss + jnp.where(nz > 0, losses.sum() / jnp.maximum(nz, 1), 0.0)
    return t_loss / b_total


if __name__ == "__main__":
    key = jax.random.PRNGKey(0)
    d = 32

    def make_graphs(key, sizes):
        gs = []
        for n in sizes:
            key, sub = jax.random.split(key)
            gs.append(jax.random.normal(sub, (n, d), dtype=jnp.float32))
        return key, gs

    # Case 1: tiny batch (typical module usage); default tiles, single key step.
    key, gs_small = make_graphs(key, [6, 5, 7])
    out_small = jax.block_until_ready(structural_loss(gs_small, temperature=0.5))
    ref_small = _reference_structural_loss(gs_small, temperature=0.5)
    np.testing.assert_allclose(np.asarray(out_small), np.asarray(ref_small),
                               rtol=3e-2, atol=3e-2)

    # Case 2: larger batch so grid=(2,2) and the streaming logsumexp accumulation
    # across key tiles is exercised (bf16 matmul -> loosened tolerance).
    key, gs_big = make_graphs(key, [50, 60, 70])
    out_big = jax.block_until_ready(
        structural_loss(gs_big, temperature=0.5, block_m=128, block_k=128))
    ref_big = _reference_structural_loss(gs_big, temperature=0.5)
    np.testing.assert_allclose(np.asarray(out_big), np.asarray(ref_big),
                               rtol=3e-2, atol=3e-2)

    print("KERNEL_OK")
</pallas_src>

<mosaic_0001>
module attributes {stable_mosaic.version = 11 : i64} {
  func.func @_supcon_tile_kernel(%arg0: i32, %arg1: i32, %arg2: memref<256x128xbf16, #tpu.memory_space<vmem>>, %arg3: memref<512x128xbf16, #tpu.memory_space<vmem>>, %arg4: memref<256x1xi32, #tpu.memory_space<vmem>>, %arg5: memref<1x512xi32, #tpu.memory_space<vmem>>, %arg6: memref<256x128xf32, #tpu.memory_space<vmem>>, %arg7: memref<256x1xf32, #tpu.memory_space<vmem>>, %arg8: memref<256x1xf32, #tpu.memory_space<vmem>>, %arg9: memref<256x1xf32, #tpu.memory_space<vmem>>, %arg10: memref<256x1xf32, #tpu.memory_space<vmem>>) attributes {dimension_semantics = [#tpu.dimension_semantics<parallel>, #tpu.dimension_semantics<arbitrary>], iteration_bounds = array<i64: 2, 1>, scalar_prefetch = 0 : i64, scratch_operands = 4 : i64, tpu.core_type = #tpu.core_type<tc>, window_params = [{transform_indices = @transform_0, window_bounds = array<i64: 256, 128>}, {transform_indices = @transform_1, window_bounds = array<i64: 512, 128>}, {transform_indices = @transform_2, window_bounds = array<i64: 256, 1>}, {transform_indices = @transform_3, window_bounds = array<i64: 1, 512>}, {transform_indices = @transform_4, window_bounds = array<i64: 256, 128>}]} {
    %c0_i32 = arith.constant 0 : i32
    %0 = arith.cmpi eq, %arg1, %c0_i32 : i32
    %1 = arith.extui %0 : i1 to i32
    %c0_i32_0 = arith.constant 0 : i32
    %2 = arith.cmpi ne, %1, %c0_i32_0 : i32
    scf.if %2 {
      %cst_34 = arith.constant -1.000000e+30 : f32
      %64 = vector.broadcast %cst_34 : f32 to vector<256x1xf32>
      %c0_35 = arith.constant 0 : index
      %c0_36 = arith.constant 0 : index
      %65 = vector.load %arg7[%c0_35, %c0_36] : memref<256x1xf32, #tpu.memory_space<vmem>>, vector<256x1xf32>
      tpu.vector_store %arg7[%c0_35, %c0_36], %64 {strides = array<i32>} : memref<256x1xf32, #tpu.memory_space<vmem>>, vector<256x1xf32>,
      %cst_37 = arith.constant 0.000000e+00 : f32
      %66 = vector.broadcast %cst_37 : f32 to vector<256x1xf32>
      %c0_38 = arith.constant 0 : index
      %c0_39 = arith.constant 0 : index
      %67 = vector.load %arg8[%c0_38, %c0_39] : memref<256x1xf32, #tpu.memory_space<vmem>>, vector<256x1xf32>
      tpu.vector_store %arg8[%c0_38, %c0_39], %66 {strides = array<i32>} : memref<256x1xf32, #tpu.memory_space<vmem>>, vector<256x1xf32>,
      %cst_40 = arith.constant 0.000000e+00 : f32
      %68 = vector.broadcast %cst_40 : f32 to vector<256x1xf32>
      %c0_41 = arith.constant 0 : index
      %c0_42 = arith.constant 0 : index
      %69 = vector.load %arg9[%c0_41, %c0_42] : memref<256x1xf32, #tpu.memory_space<vmem>>, vector<256x1xf32>
      tpu.vector_store %arg9[%c0_41, %c0_42], %68 {strides = array<i32>} : memref<256x1xf32, #tpu.memory_space<vmem>>, vector<256x1xf32>,
      %cst_43 = arith.constant 0.000000e+00 : f32
      %70 = vector.broadcast %cst_43 : f32 to vector<256x1xf32>
      %c0_44 = arith.constant 0 : index
      %c0_45 = arith.constant 0 : index
      %71 = vector.load %arg10[%c0_44, %c0_45] : memref<256x1xf32, #tpu.memory_space<vmem>>, vector<256x1xf32>
      tpu.vector_store %arg10[%c0_44, %c0_45], %70 {strides = array<i32>} : memref<256x1xf32, #tpu.memory_space<vmem>>, vector<256x1xf32>,
    } else {
    }
    %c0 = arith.constant 0 : index
    %c0_1 = arith.constant 0 : index
    %3 = vector.load %arg2[%c0, %c0_1] : memref<256x128xbf16, #tpu.memory_space<vmem>>, vector<256x128xbf16>
    %c0_2 = arith.constant 0 : index
    %c0_3 = arith.constant 0 : index
    %4 = vector.load %arg3[%c0_2, %c0_3] : memref<512x128xbf16, #tpu.memory_space<vmem>>, vector<512x128xbf16>
    %cst = arith.constant dense<0.000000e+00> : vector<256x512xf32>
    %5 = tpu.matmul %3, %4, %cst {dimension_numbers = #tpu.dot_dimension_numbers<[1], [1], [0], [0], [0, 0, 1, 0], [], []>} : vector<256x128xbf16>, vector<512x128xbf16>, vector<256x512xf32> -> vector<256x512xf32>
    %cst_4 = arith.constant 2.000000e+00 : f32
    %6 = vector.broadcast %cst_4 : f32 to vector<256x512xf32>
    %7 = arith.mulf %5, %6 : vector<256x512xf32>
    %c0_5 = arith.constant 0 : index
    %c0_6 = arith.constant 0 : index
    %8 = vector.load %arg4[%c0_5, %c0_6] : memref<256x1xi32, #tpu.memory_space<vmem>>, vector<256x1xi32>
    %c0_7 = arith.constant 0 : index
    %c0_8 = arith.constant 0 : index
    %9 = vector.load %arg5[%c0_7, %c0_8] : memref<1x512xi32, #tpu.memory_space<vmem>>, vector<1x512xi32>
    %c256_i32 = arith.constant 256 : i32
    %10 = arith.muli %arg0, %c256_i32 : i32
    %11 = tpu.iota {dimensions = array<i32: 0>} : vector<256x1xi32>
    %12 = vector.broadcast %10 : i32 to vector<256x1xi32>
    %13 = arith.addi %12, %11 : vector<256x1xi32>
    %c512_i32 = arith.constant 512 : i32
    %14 = arith.muli %arg1, %c512_i32 : i32
    %15 = tpu.iota {dimensions = array<i32: 1>} : vector<1x512xi32>
    %16 = vector.broadcast %14 : i32 to vector<1x512xi32>
    %17 = arith.addi %16, %15 : vector<1x512xi32>
    %18 = vector.broadcast %13 : vector<256x1xi32> to vector<256x512xi32>
    %19 = vector.broadcast %17 : vector<1x512xi32> to vector<256x512xi32>
    %20 = arith.cmpi eq, %18, %19 : vector<256x512xi32>
    %c0_i32_9 = arith.constant 0 : i32
    %21 = vector.broadcast %c0_i32_9 : i32 to vector<1x512xi32>
    %22 = arith.cmpi slt, %9, %21 : vector<1x512xi32>
    %23 = vector.broadcast %22 : vector<1x512xi1> to vector<256x512xi1>
    %24 = arith.ori %20, %23 : vector<256x512xi1>
    %cst_10 = arith.constant -1.000000e+30 : f32
    %25 = vector.broadcast %cst_10 : f32 to vector<256x512xf32>
    %26 = arith.select %24, %25, %7 : vector<256x512xi1>, vector<256x512xf32>
    %27 = vector.broadcast %8 : vector<256x1xi32> to vector<256x512xi32>
    %28 = vector.broadcast %9 : vector<1x512xi32> to vector<256x512xi32>
    %29 = arith.cmpi eq, %27, %28 : vector<256x512xi32>
    %cst_11 = arith.constant dense<true> : vector<256x512xi1>
    %30 = arith.xori %20, %cst_11 : vector<256x512xi1>
    %31 = arith.andi %29, %30 : vector<256x512xi1>
    %32 = arith.extui %31 : vector<256x512xi1> to vector<256x512xi32>
    %33 = arith.sitofp %32 : vector<256x512xi32> to vector<256x512xf32>
    %c0_12 = arith.constant 0 : index
    %c0_13 = arith.constant 0 : index
    %34 = vector.load %arg9[%c0_12, %c0_13] : memref<256x1xf32, #tpu.memory_space<vmem>>, vector<256x1xf32>
    %35 = arith.mulf %33, %26 : vector<256x512xf32>
    %cst_14 = arith.constant dense<0.000000e+00> : vector<256xf32>
    %36 = vector.multi_reduction <add>, %35, %cst_14 [1] : vector<256x512xf32> to vector<256xf32>
    %37 = vector.shape_cast %36 : vector<256xf32> to vector<256x1xf32>
    %38 = arith.addf %34, %37 : vector<256x1xf32>
    %c0_15 = arith.constant 0 : index
    %c0_16 = arith.constant 0 : index
    %39 = vector.load %arg9[%c0_15, %c0_16] : memref<256x1xf32, #tpu.memory_space<vmem>>, vector<256x1xf32>
    tpu.vector_store %arg9[%c0_15, %c0_16], %38 {strides = array<i32>} : memref<256x1xf32, #tpu.memory_space<vmem>>, vector<256x1xf32>,
    %c0_17 = arith.constant 0 : index
    %c0_18 = arith.constant 0 : index
    %40 = vector.load %arg10[%c0_17, %c0_18] : memref<256x1xf32, #tpu.memory_space<vmem>>, vector<256x1xf32>
    %cst_19 = arith.constant dense<0.000000e+00> : vector<256xf32>
    %41 = vector.multi_reduction <add>, %33, %cst_19 [1] : vector<256x512xf32> to vector<256xf32>
    %42 = vector.shape_cast %41 : vector<256xf32> to vector<256x1xf32>
    %43 = arith.addf %40, %42 : vector<256x1xf32>
    %c0_20 = arith.constant 0 : index
    %c0_21 = arith.constant 0 : index
    %44 = vector.load %arg10[%c0_20, %c0_21] : memref<256x1xf32, #tpu.memory_space<vmem>>, vector<256x1xf32>
    tpu.vector_store %arg10[%c0_20, %c0_21], %43 {strides = array<i32>} : memref<256x1xf32, #tpu.memory_space<vmem>>, vector<256x1xf32>,
    %c0_22 = arith.constant 0 : index
    %c0_23 = arith.constant 0 : index
    %45 = vector.load %arg7[%c0_22, %c0_23] : memref<256x1xf32, #tpu.memory_space<vmem>>, vector<256x1xf32>
    %cst_24 = arith.constant dense<0xFF800000> : vector<256xf32>
    %46 = vector.multi_reduction <maximumf>, %26, %cst_24 [1] : vector<256x512xf32> to vector<256xf32>
    %47 = vector.shape_cast %46 : vector<256xf32> to vector<256x1xf32>
    %48 = arith.maximumf %45, %47 : vector<256x1xf32>
    %49 = arith.subf %45, %48 : vector<256x1xf32>
    %50 = math.exp %49 : vector<256x1xf32>
    %c0_25 = arith.constant 0 : index
    %c0_26 = arith.constant 0 : index
    %51 = vector.load %arg8[%c0_25, %c0_26] : memref<256x1xf32, #tpu.memory_space<vmem>>, vector<256x1xf32>
    %52 = arith.mulf %50, %51 : vector<256x1xf32>
    %53 = vector.broadcast %48 : vector<256x1xf32> to vector<256x512xf32>
    %54 = arith.subf %26, %53 : vector<256x512xf32>
    %55 = math.exp %54 : vector<256x512xf32>
    %cst_27 = arith.constant dense<0.000000e+00> : vector<256xf32>
    %56 = vector.multi_reduction <add>, %55, %cst_27 [1] : vector<256x512xf32> to vector<256xf32>
    %57 = vector.shape_cast %56 : vector<256xf32> to vector<256x1xf32>
    %58 = arith.addf %52, %57 : vector<256x1xf32>
    %c0_28 = arith.constant 0 : index
    %c0_29 = arith.constant 0 : index
    %59 = vector.load %arg8[%c0_28, %c0_29] : memref<256x1xf32, #tpu.memory_space<vmem>>, vector<256x1xf32>
    tpu.vector_store %arg8[%c0_28, %c0_29], %58 {strides = array<i32>} : memref<256x1xf32, #tpu.memory_space<vmem>>, vector<256x1xf32>,
    %c0_30 = arith.constant 0 : index
    %c0_31 = arith.constant 0 : index
    %60 = vector.load %arg7[%c0_30, %c0_31] : memref<256x1xf32, #tpu.memory_space<vmem>>, vector<256x1xf32>
    tpu.vector_store %arg7[%c0_30, %c0_31], %48 {strides = array<i32>} : memref<256x1xf32, #tpu.memory_space<vmem>>, vector<256x1xf32>,
    %c0_i32_32 = arith.constant 0 : i32
    %61 = arith.cmpi eq, %arg1, %c0_i32_32 : i32
    %62 = arith.extui %61 : i1 to i32
    %c0_i32_33 = arith.constant 0 : i32
    %63 = arith.cmpi ne, %62, %c0_i32_33 : i32
    scf.if %63 {
      %c0_34 = arith.constant 0 : index
      %c0_35 = arith.constant 0 : index
      %64 = vector.load %arg7[%c0_34, %c0_35] : memref<256x1xf32, #tpu.memory_space<vmem>>, vector<256x1xf32>
      %c0_36 = arith.constant 0 : index
      %c0_37 = arith.constant 0 : index
      %65 = vector.load %arg8[%c0_36, %c0_37] : memref<256x1xf32, #tpu.memory_space<vmem>>, vector<256x1xf32>
      %66 = math.log %65 : vector<256x1xf32>
      %67 = arith.addf %64, %66 : vector<256x1xf32>
      %c0_38 = arith.constant 0 : index
      %c0_39 = arith.constant 0 : index
      %68 = vector.load %arg10[%c0_38, %c0_39] : memref<256x1xf32, #tpu.memory_space<vmem>>, vector<256x1xf32>
      %c0_40 = arith.constant 0 : index
      %c0_41 = arith.constant 0 : index
      %69 = vector.load %arg9[%c0_40, %c0_41] : memref<256x1xf32, #tpu.memory_space<vmem>>, vector<256x1xf32>
      %70 = arith.mulf %68, %67 : vector<256x1xf32>
      %71 = arith.subf %69, %70 : vector<256x1xf32>
      %cst_42 = arith.constant 0.000000e+00 : f32
      %72 = vector.broadcast %cst_42 : f32 to vector<256x1xf32>
      %73 = arith.subf %72, %71 : vector<256x1xf32>
      %cst_43 = arith.constant 1.000000e+00 : f32
      %74 = vector.broadcast %cst_43 : f32 to vector<256x1xf32>
      %75 = arith.maximumf %68, %74 : vector<256x1xf32>
      %76 = arith.divf %73, %75 : vector<256x1xf32>
      %cst_44 = arith.constant 0.000000e+00 : f32
      %77 = vector.broadcast %cst_44 : f32 to vector<256x1xf32>
      %78 = arith.cmpf ogt, %68, %77 : vector<256x1xf32>
      %c0_i32_45 = arith.constant 0 : i32
      %79 = vector.broadcast %c0_i32_45 : i32 to vector<256x1xi32>
      %80 = arith.cmpi sge, %8, %79 : vector<256x1xi32>
      %81 = arith.andi %78, %80 : vector<256x1xi1>
      %cst_46 = arith.constant 0.000000e+00 : f32
      %82 = vector.broadcast %cst_46 : f32 to vector<256x1xf32>
      %83 = arith.select %81, %76, %82 : vector<256x1xi1>, vector<256x1xf32>
      %84 = vector.shape_cast %83 : vector<256x1xf32> to vector<256x1xf32>
      %85 = vector.broadcast %84 : vector<256x1xf32> to vector<256x128xf32>
      %c0_47 = arith.constant 0 : index
      %c0_48 = arith.constant 0 : index
      %86 = vector.load %arg6[%c0_47, %c0_48] : memref<256x128xf32, #tpu.memory_space<vmem>>, vector<256x128xf32>
      tpu.vector_store %arg6[%c0_47, %c0_48], %85 {strides = array<i32>} : memref<256x128xf32, #tpu.memory_space<vmem>>, vector<256x128xf32>,
    } else {
    }
    return
  }
  func.func @transform_0(%arg0: i32, %arg1: i32) -> (i32, i32) {
    %c0_i32 = arith.constant 0 : i32
    %c0_i32_0 = arith.constant 0 : i32
    return %arg0, %c0_i32 : i32, i32
  }
  func.func @transform_1(%arg0: i32, %arg1: i32) -> (i32, i32) {
    %c0_i32 = arith.constant 0 : i32
    %c0_i32_0 = arith.constant 0 : i32
    return %arg1, %c0_i32 : i32, i32
  }
  func.func @transform_2(%arg0: i32, %arg1: i32) -> (i32, i32) {
    %c0_i32 = arith.constant 0 : i32
    %c0_i32_0 = arith.constant 0 : i32
    return %arg0, %c0_i32 : i32, i32
  }
  func.func @transform_3(%arg0: i32, %arg1: i32) -> (i32, i32) {
    %c0_i32 = arith.constant 0 : i32
    %c0_i32_0 = arith.constant 0 : i32
    return %c0_i32, %arg1 : i32, i32
  }
  func.func @transform_4(%arg0: i32, %arg1: i32) -> (i32, i32) {
    %c0_i32 = arith.constant 0 : i32
    %c0_i32_0 = arith.constant 0 : i32
    return %arg0, %c0_i32 : i32, i32
  }
}

</mosaic_0001>

<llo_original>
// kernel: tpu_custom_call.1
$region0: #{tpu_custom_call.1}
  #allocation0 [shape = 'u32[]', space=smem, size = 0x4, offset = 0x4, fixed_abs, tag = 'smem constant byte address 0x4 - core index']
  #allocation1 [shape = 'u32[144,128]{1,0:T(1,128)}', space=vmem, size = 0x12000, scoped, tag = 'internal scratch']
  #allocation2 [shape = 'f32[256,1]{1,0:T(8,128)}', space=vmem, size = 0x20000, scoped, tag = 'scratch operand']
  #allocation3 [shape = 'f32[256,1]{1,0:T(8,128)}', space=vmem, size = 0x20000, scoped, tag = 'scratch operand']
  #allocation4 [shape = 'f32[256,1]{1,0:T(8,128)}', space=vmem, size = 0x20000, scoped, tag = 'scratch operand']
  #allocation5 [shape = 'f32[256,1]{1,0:T(8,128)}', space=vmem, size = 0x20000, scoped, tag = 'scratch operand']
  %s0 = inlined_call_operand.vmem [shape: bf16[512,128], index: 0, kind: input, shape index: {}]
  %s1 = inlined_call_operand.vmem [shape: bf16[512,128], index: 1, kind: input, shape index: {}]
  %s2 = inlined_call_operand.vmem [shape: s32[512,1], index: 2, kind: input, shape index: {}]
  %s3 = inlined_call_operand.vmem [shape: s32[1,512], index: 3, kind: input, shape index: {}]
  %s4 = inlined_call_operand.hbm [shape: f32[512,128], index: 4, kind: output, shape index: {}]
  %s5 = sld [smem:[#allocation0]]
  $region57: #{tpu_custom_call.1} parent=0
    _
  %s7 = ssub.s32 1, %s5
  %s8 = scalar_select 0, %s7, %s5
  $region1: #{tpu_custom_call.1} parent=0
    #allocation6 [shape = 'u8[262144]{0}', space=vmem, size = 0x40000, scoped, tag = 'output window, operand 0']
    #allocation7 [shape = 's32[2]{0}', space=sflag, size = 0x8, scoped, tag = 'scoped memory for tpu_custom_call.1']
    %9 = vsyncpa [#allocation7], 0
    %s10 = scalar_lea.sflag [#allocation7], 1
    %11 = vsyncpa %s10, 0
    loop: start=0, step=1, limit=4
    $region2: #{tpu_custom_call.1} parent=1 // loop_pre_header
      _
    $region3: #{tpu_custom_call.1} parent=1 // loop_header
      %s13 = sphi 0, %s17
      %p14 = scmp.ge.s32.totalorder %s13, 4
      %s20 = sphi 0, %s32
      %s21 = sphi 0, %s28
      %s22 = sphi 0, %s20
      %s23 = sphi 0, %s21
      %s24 = sphi 0, %s22
      %s25 = sphi 0, %s23
      %s35 = sphi 0, %s37
      %s38 = sphi 0, %s35
      %s39 = sphi 0, %s38
      %s55 = sphi 0, %s39
      %s61 = sphi 0, %s63
      %s64 = sphi 0, %s61
      %s65 = sphi 0, %s64
      %s81 = sphi 0, %s65
      %s87 = sphi 0, %s89
      %s90 = sphi 0, %s87
      %s91 = sphi 0, %s90
      %s107 = sphi 0, %s91
      %s113 = sphi 0, %s115
      %s116 = sphi 0, %s113
      %s117 = sphi 0, %s116
      %s133 = sphi 0, %s117
      %s139 = sphi 0, %s141
      %s142 = sphi 0, %s139
      %s143 = sphi 0, %s142
      %s159 = sphi 0, %s143
    $region4: #{tpu_custom_call.1} parent=1 // loop_header_branch
      %16 = sbr.rel (%p14) target = $region8
    $region5: #{tpu_custom_call.1} parent=1 // loop_body
      %s18 = ssub.s32 %s13, 1
      %s19 = ssub.s32 %s13, 2
      %s26 = sadd.s32 1, %s21
      %p27 = scmp.ge.s32.totalorder %s26, 1
      %s28 = scalar_select %p27, 0, %s26
      %s29 = sadd.s32 1, %s20
      %s30 = scalar_select %p27, %s29, %s20
      %p31 = scmp.ge.s32.totalorder %s30, 2
      %s32 = scalar_select %p31, 0, %s30
      %s33 = ssub.s32 %s20, %s32
      %p34 = scmp.eq.s32.totalorder %s33, 0
      %s36 = sadd.s32 %s35, 1
      %s37 = scalar_select %p34, %s35, %s36
      %p40 = pneg %p34
      %p41 = scmp.eq.s32.totalorder %s13, 1
      %p42 = por %p40, %p41
      %p43 = scmp.ne.s32.totalorder %s35, %s38
      %p44 = scmp.eq.s32.totalorder %s13, 0
      %p45 = por %p43, %p44
      %p46 = scmp.ne.s32.totalorder %s35, %s38
      %p47 = scmp.eq.s32.totalorder %s18, 1
      %p48 = por %p46, %p47
      %p49 = scmp.ne.s32.totalorder %s38, %s39
      %p50 = scmp.eq.s32.totalorder %s18, 0
      %p51 = por %p49, %p50
      %p52 = scmp.ne.s32.totalorder %s38, %s39
      %p53 = scmp.eq.s32.totalorder %s19, 1
      %p54 = por %p52, %p53
      %p56 = scmp.ne.s32.totalorder %s39, %s55
      %p57 = scmp.eq.s32.totalorder %s19, 0
      %p58 = por %p56, %p57
      %s59 = ssub.s32 %s21, %s28
      %p60 = scmp.eq.s32.totalorder %s59, 0
      %s62 = sadd.s32 %s61, 1
      %s63 = scalar_select %p60, %s61, %s62
      %p66 = pneg %p60
      %p67 = scmp.eq.s32.totalorder %s13, 1
      %p68 = por %p66, %p67
      %p69 = scmp.ne.s32.totalorder %s61, %s64
      %p70 = scmp.eq.s32.totalorder %s13, 0
      %p71 = por %p69, %p70
      %p72 = scmp.ne.s32.totalorder %s61, %s64
      %p73 = scmp.eq.s32.totalorder %s18, 1
      %p74 = por %p72, %p73
      %p75 = scmp.ne.s32.totalorder %s64, %s65
      %p76 = scmp.eq.s32.totalorder %s18, 0
      %p77 = por %p75, %p76
      %p78 = scmp.ne.s32.totalorder %s64, %s65
      %p79 = scmp.eq.s32.totalorder %s19, 1
      %p80 = por %p78, %p79
      %p82 = scmp.ne.s32.totalorder %s65, %s81
      %p83 = scmp.eq.s32.totalorder %s19, 0
      %p84 = por %p82, %p83
      %s85 = ssub.s32 %s20, %s32
      %p86 = scmp.eq.s32.totalorder %s85, 0
      %s88 = sadd.s32 %s87, 1
      %s89 = scalar_select %p86, %s87, %s88
      %p92 = pneg %p86
      %p93 = scmp.eq.s32.totalorder %s13, 1
      %p94 = por %p92, %p93
      %p95 = scmp.ne.s32.totalorder %s87, %s90
      %p96 = scmp.eq.s32.totalorder %s13, 0
      %p97 = por %p95, %p96
      %p98 = scmp.ne.s32.totalorder %s87, %s90
      %p99 = scmp.eq.s32.totalorder %s18, 1
      %p100 = por %p98, %p99
      %p101 = scmp.ne.s32.totalorder %s90, %s91
      %p102 = scmp.eq.s32.totalorder %s18, 0
      %p103 = por %p101, %p102
      %p104 = scmp.ne.s32.totalorder %s90, %s91
      %p105 = scmp.eq.s32.totalorder %s19, 1
      %p106 = por %p104, %p105
      %p108 = scmp.ne.s32.totalorder %s91, %s107
      %p109 = scmp.eq.s32.totalorder %s19, 0
      %p110 = por %p108, %p109
      %s111 = ssub.s32 %s21, %s28
      %p112 = scmp.eq.s32.totalorder %s111, 0
      %s114 = sadd.s32 %s113, 1
      %s115 = scalar_select %p112, %s113, %s114
      %p118 = pneg %p112
      %p119 = scmp.eq.s32.totalorder %s13, 1
      %p120 = por %p118, %p119
      %p121 = scmp.ne.s32.totalorder %s113, %s116
      %p122 = scmp.eq.s32.totalorder %s13, 0
      %p123 = por %p121, %p122
      %p124 = scmp.ne.s32.totalorder %s113, %s116
      %p125 = scmp.eq.s32.totalorder %s18, 1
      %p126 = por %p124, %p125
      %p127 = scmp.ne.s32.totalorder %s116, %s117
      %p128 = scmp.eq.s32.totalorder %s18, 0
      %p129 = por %p127, %p128
      %p130 = scmp.ne.s32.totalorder %s116, %s117
      %p131 = scmp.eq.s32.totalorder %s19, 1
      %p132 = por %p130, %p131
      %p134 = scmp.ne.s32.totalorder %s117, %s133
      %p135 = scmp.eq.s32.totalorder %s19, 0
      %p136 = por %p134, %p135
      %s137 = ssub.s32 %s20, %s32
      %p138 = scmp.eq.s32.totalorder %s137, 0
      %s140 = sadd.s32 %s139, 1
      %s141 = scalar_select %p138, %s139, %s140
      %p144 = pneg %p138
      %p145 = scmp.eq.s32.totalorder %s13, 1
      %p146 = por %p144, %p145
      %p147 = scmp.ne.s32.totalorder %s139, %s142
      %p148 = scmp.eq.s32.totalorder %s13, 0
      %p149 = por %p147, %p148
      %p150 = scmp.ne.s32.totalorder %s139, %s142
      %p151 = scmp.eq.s32.totalorder %s18, 1
      %p152 = por %p150, %p151
      %p153 = scmp.ne.s32.totalorder %s142, %s143
      %p154 = scmp.eq.s32.totalorder %s18, 0
      %p155 = por %p153, %p154
      %p156 = scmp.ne.s32.totalorder %s142, %s143
      %p157 = scmp.eq.s32.totalorder %s19, 1
      %p158 = por %p156, %p157
      %p160 = scmp.ne.s32.totalorder %s143, %s159
      %p161 = scmp.eq.s32.totalorder %s19, 0
      %p162 = por %p160, %p161
      %p163 = scmp.le.s32.totalorder 1, %s13
      %p164 = scmp.lt.s32.totalorder %s13, 3
      %p165 = pnand %p163, %p164
      %p166 = pneg %p165
      // Predicated region
      $region9: #{tpu_custom_call.1} parent=5 // pred_check
        _
      $region10: #{tpu_custom_call.1} parent=5 // pred_check_branch
        %168 = sbr.rel (%p165) target = $region12
      $region11: #{tpu_custom_call.1} parent=5 // pred_region
        %s169 = ssub.s32 %s13, 1
        // Predicated region
        $region13: #{tpu_custom_call.1} parent=11 // pred_check
          %p170 = pneg %p77
        $region14: #{tpu_custom_call.1} parent=11 // pred_check_branch
          %172 = sbr.rel (%p170) target = $region16
        $region15: #{tpu_custom_call.1} parent=11 // pred_region
          %s173 = smul.u32 64, %s23
          %p174 = scmp.lt.s32.totalorder %s173, 63
          %s175 = scalar_select %p174, %s173, 63
          %s176 = smul.addr %s175, 4
          %s177 = scalar_lea.vmem %s1, %s176
          %s178 = smul.u32 64, %s23
        $region16: #{tpu_custom_call.1} parent=11 // pred_fallthru
          _
        // Predicated region
        $region17: #{tpu_custom_call.1} parent=11 // pred_check
          %p179 = pneg %p129
        $region18: #{tpu_custom_call.1} parent=11 // pred_check_branch
          %181 = sbr.rel (%p179) target = $region20
        $region19: #{tpu_custom_call.1} parent=11 // pred_region
          %s182 = smul.u32 4, %s23
          %p183 = scmp.lt.s32.totalorder %s182, 3
          %s184 = scalar_select %p183, %s182, 3
          %s185 = scalar_lea.vmem %s3, %s184
          %s186 = smul.u32 4, %s23
        $region20: #{tpu_custom_call.1} parent=11 // pred_fallthru
          _
      $region12: #{tpu_custom_call.1} parent=5 // pred_fallthru
        _
      %p187 = scmp.lt.s32.totalorder %s13, 2
      // Predicated region
      $region21: #{tpu_custom_call.1} parent=5 // pred_check
        %p188 = pneg %p187
      $region22: #{tpu_custom_call.1} parent=5 // pred_check_branch
        %190 = sbr.rel (%p188) target = $region24
      $region23: #{tpu_custom_call.1} parent=5 // pred_region
        // Predicated region
        $region25: #{tpu_custom_call.1} parent=23 // pred_check
          %p191 = pneg %p45
        $region26: #{tpu_custom_call.1} parent=23 // pred_check_branch
          %193 = sbr.rel (%p191) target = $region28
        $region27: #{tpu_custom_call.1} parent=23 // pred_region
          %s194 = smul.u32 32, %s20
          %p195 = scmp.lt.s32.totalorder %s194, 63
          %s196 = scalar_select %p195, %s194, 63
          %s197 = smul.addr %s196, 4
          %s198 = scalar_lea.vmem %s0, %s197
          %s199 = smul.u32 32, %s20
        $region28: #{tpu_custom_call.1} parent=23 // pred_fallthru
          _
        // Predicated region
        $region29: #{tpu_custom_call.1} parent=23 // pred_check
          %p200 = pneg %p97
        $region30: #{tpu_custom_call.1} parent=23 // pred_check_branch
          %202 = sbr.rel (%p200) target = $region32
        $region31: #{tpu_custom_call.1} parent=23 // pred_region
          %s203 = smul.u32 32, %s20
          %p204 = scmp.lt.s32.totalorder %s203, 63
          %s205 = scalar_select %p204, %s203, 63
          %s206 = smul.addr %s205, 8
          %s207 = scalar_lea.vmem %s2, %s206
          %s208 = smul.u32 32, %s20
        $region32: #{tpu_custom_call.1} parent=23 // pred_fallthru
          _
      $region24: #{tpu_custom_call.1} parent=5 // pred_fallthru
        _
      %p209 = scmp.le.s32.totalorder 1, %s13
      %p210 = scmp.lt.s32.totalorder %s13, 3
      %p211 = pnand %p209, %p210
      %p212 = pneg %p211
      // Predicated region
      $region33: #{tpu_custom_call.1} parent=5 // pred_check
        _
      $region34: #{tpu_custom_call.1} parent=5 // pred_check_branch
        %214 = sbr.rel (%p211) target = $region36
      $region35: #{tpu_custom_call.1} parent=5 // pred_region
        %s215 = ssub.s32 %s13, 1
        %s216 = smul.u32 32, %s22
        %p217 = scmp.lt.s32.totalorder %s216, 63
        %s218 = scalar_select %p217, %s216, 63
        %s219 = smul.addr %s218, 4
        %s220 = scalar_lea.vmem %s0, %s219
        %p221 = pneg %p51
        %p222 = pneg %p48
        %s223 = smul.u32 64, %s23
        %p224 = scmp.lt.s32.totalorder %s223, 63
        %s225 = scalar_select %p224, %s223, 63
        %s226 = smul.addr %s225, 4
        %s227 = scalar_lea.vmem %s1, %s226
        %p228 = pneg %p77
        %p229 = pneg %p74
        %s230 = smul.u32 32, %s22
        %p231 = scmp.lt.s32.totalorder %s230, 63
        %s232 = scalar_select %p231, %s230, 63
        %s233 = smul.addr %s232, 8
        %s234 = scalar_lea.vmem %s2, %s233
        %p235 = pneg %p103
        %p236 = pneg %p100
        %s237 = smul.u32 4, %s23
        %p238 = scmp.lt.s32.totalorder %s237, 3
        %s239 = scalar_select %p238, %s237, 3
        %s240 = scalar_lea.vmem %s3, %s239
        %p241 = pneg %p129
        %p242 = pneg %p126
        %p243 = pneg %p155
        %p244 = pneg %p152
        %s245 = sand.u32 %s142, 1
        %s246 = scalar_lea.sflag [#allocation7], %s245
        %s247 = sand.u32 %s142, 1
        %s248 = smul.addr %s247, 256
        %s249 = scalar_lea.vmem [#allocation6], %s248
        %s250 = smul.u32 32, %s22
        %p251 = scmp.lt.s32.totalorder %s250, 63
        %s252 = scalar_select %p251, %s250, 63
        %s253 = smul.addr %s252, 4
        %s254 = scalar_lea.vmem %s0, %s253
        %s255 = smul.u32 32, %s22
        %s256 = smul.u32 64, %s23
        %p257 = scmp.lt.s32.totalorder %s256, 63
        %s258 = scalar_select %p257, %s256, 63
        %s259 = smul.addr %s258, 4
        %s260 = scalar_lea.vmem %s1, %s259
        %s261 = smul.u32 64, %s23
        %s262 = smul.u32 32, %s22
        %p263 = scmp.lt.s32.totalorder %s262, 63
        %s264 = scalar_select %p263, %s262, 63
        %s265 = smul.addr %s264, 8
        %s266 = scalar_lea.vmem %s2, %s265
        %s267 = smul.u32 32, %s22
        %s268 = smul.u32 4, %s23
        %p269 = scmp.lt.s32.totalorder %s268, 3
        %s270 = scalar_select %p269, %s268, 3
        %s271 = scalar_lea.vmem %s3, %s270
        %s272 = smul.u32 4, %s23
        %s273 = smul.u32 32, %s22
        %p275 = scmp.eq.s32.totalorder %s23, 0
        // Predicated region
        $region37: #{tpu_custom_call.1} parent=35 // pred_check
          %p276 = pneg %p275
        $region38: #{tpu_custom_call.1} parent=35 // pred_check_branch
          %278 = sbr.rel (%p276) target = $region40
        $region39: #{tpu_custom_call.1} parent=35 // pred_region
          %vm279 = vcmask 7168
          %280 = vst.msk [vmem:[#allocation2] sm:$0xff] %vm279, -1e+30
          %281 = vst.msk [vmem:[#allocation2 + $0x8] sm:$0xff] %vm279, -1e+30
          %282 = vst.msk [vmem:[#allocation2 + $0x10] sm:$0xff] %vm279, -1e+30
          %283 = vst.msk [vmem:[#allocation2 + $0x18] sm:$0xff] %vm279, -1e+30
          %284 = vst.msk [vmem:[#allocation2 + $0x20] sm:$0xff] %vm279, -1e+30
          %285 = vst.msk [vmem:[#allocation2 + $0x28] sm:$0xff] %vm279, -1e+30
          %286 = vst.msk [vmem:[#allocation2 + $0x30] sm:$0xff] %vm279, -1e+30
          %287 = vst.msk [vmem:[#allocation2 + $0x38] sm:$0xff] %vm279, -1e+30
          %288 = vst.msk [vmem:[#allocation2 + $0x40] sm:$0xff] %vm279, -1e+30
          %289 = vst.msk [vmem:[#allocation2 + $0x48] sm:$0xff] %vm279, -1e+30
          %290 = vst.msk [vmem:[#allocation2 + $0x50] sm:$0xff] %vm279, -1e+30
          %291 = vst.msk [vmem:[#allocation2 + $0x58] sm:$0xff] %vm279, -1e+30
          %292 = vst.msk [vmem:[#allocation2 + $0x60] sm:$0xff] %vm279, -1e+30
          %293 = vst.msk [vmem:[#allocation2 + $0x68] sm:$0xff] %vm279, -1e+30
          %294 = vst.msk [vmem:[#allocation2 + $0x70] sm:$0xff] %vm279, -1e+30
          %295 = vst.msk [vmem:[#allocation2 + $0x78] sm:$0xff] %vm279, -1e+30
          %296 = vst.msk [vmem:[#allocation2 + $0x80] sm:$0xff] %vm279, -1e+30
          %297 = vst.msk [vmem:[#allocation2 + $0x88] sm:$0xff] %vm279, -1e+30
          %298 = vst.msk [vmem:[#allocation2 + $0x90] sm:$0xff] %vm279, -1e+30
          %299 = vst.msk [vmem:[#allocation2 + $0x98] sm:$0xff] %vm279, -1e+30
          %300 = vst.msk [vmem:[#allocation2 + $0xa0] sm:$0xff] %vm279, -1e+30
          %301 = vst.msk [vmem:[#allocation2 + $0xa8] sm:$0xff] %vm279, -1e+30
          %302 = vst.msk [vmem:[#allocation2 + $0xb0] sm:$0xff] %vm279, -1e+30
          %303 = vst.msk [vmem:[#allocation2 + $0xb8] sm:$0xff] %vm279, -1e+30
          %304 = vst.msk [vmem:[#allocation2 + $0xc0] sm:$0xff] %vm279, -1e+30
          %305 = vst.msk [vmem:[#allocation2 + $0xc8] sm:$0xff] %vm279, -1e+30
          %306 = vst.msk [vmem:[#allocation2 + $0xd0] sm:$0xff] %vm279, -1e+30
          %307 = vst.msk [vmem:[#allocation2 + $0xd8] sm:$0xff] %vm279, -1e+30
          %308 = vst.msk [vmem:[#allocation2 + $0xe0] sm:$0xff] %vm279, -1e+30
          %309 = vst.msk [vmem:[#allocation2 + $0xe8] sm:$0xff] %vm279, -1e+30
          %310 = vst.msk [vmem:[#allocation2 + $0xf0] sm:$0xff] %vm279, -1e+30
          %311 = vst.msk [vmem:[#allocation2 + $0xf8] sm:$0xff] %vm279, -1e+30
          %312 = vst.msk [vmem:[#allocation3] sm:$0xff] %vm279, 0.0
          %313 = vst.msk [vmem:[#allocation3 + $0x8] sm:$0xff] %vm279, 0.0
          %314 = vst.msk [vmem:[#allocation3 + $0x10] sm:$0xff] %vm279, 0.0
          %315 = vst.msk [vmem:[#allocation3 + $0x18] sm:$0xff] %vm279, 0.0
          %316 = vst.msk [vmem:[#allocation3 + $0x20] sm:$0xff] %vm279, 0.0
          %317 = vst.msk [vmem:[#allocation3 + $0x28] sm:$0xff] %vm279, 0.0
          %318 = vst.msk [vmem:[#allocation3 + $0x30] sm:$0xff] %vm279, 0.0
          %319 = vst.msk [vmem:[#allocation3 + $0x38] sm:$0xff] %vm279, 0.0
          %320 = vst.msk [vmem:[#allocation3 + $0x40] sm:$0xff] %vm279, 0.0
          %321 = vst.msk [vmem:[#allocation3 + $0x48] sm:$0xff] %vm279, 0.0
          %322 = vst.msk [vmem:[#allocation3 + $0x50] sm:$0xff] %vm279, 0.0
          %323 = vst.msk [vmem:[#allocation3 + $0x58] sm:$0xff] %vm279, 0.0
          %324 = vst.msk [vmem:[#allocation3 + $0x60] sm:$0xff] %vm279, 0.0
          %325 = vst.msk [vmem:[#allocation3 + $0x68] sm:$0xff] %vm279, 0.0
          %326 = vst.msk [vmem:[#allocation3 + $0x70] sm:$0xff] %vm279, 0.0
          %327 = vst.msk [vmem:[#allocation3 + $0x78] sm:$0xff] %vm279, 0.0
          %328 = vst.msk [vmem:[#allocation3 + $0x80] sm:$0xff] %vm279, 0.0
          %329 = vst.msk [vmem:[#allocation3 + $0x88] sm:$0xff] %vm279, 0.0
          %330 = vst.msk [vmem:[#allocation3 + $0x90] sm:$0xff] %vm279, 0.0
          %331 = vst.msk [vmem:[#allocation3 + $0x98] sm:$0xff] %vm279, 0.0
          %332 = vst.msk [vmem:[#allocation3 + $0xa0] sm:$0xff] %vm279, 0.0
          %333 = vst.msk [vmem:[#allocation3 + $0xa8] sm:$0xff] %vm279, 0.0
          %334 = vst.msk [vmem:[#allocation3 + $0xb0] sm:$0xff] %vm279, 0.0
          %335 = vst.msk [vmem:[#allocation3 + $0xb8] sm:$0xff] %vm279, 0.0
          %336 = vst.msk [vmem:[#allocation3 + $0xc0] sm:$0xff] %vm279, 0.0
          %337 = vst.msk [vmem:[#allocation3 + $0xc8] sm:$0xff] %vm279, 0.0
          %338 = vst.msk [vmem:[#allocation3 + $0xd0] sm:$0xff] %vm279, 0.0
          %339 = vst.msk [vmem:[#allocation3 + $0xd8] sm:$0xff] %vm279, 0.0
          %340 = vst.msk [vmem:[#allocation3 + $0xe0] sm:$0xff] %vm279, 0.0
          %341 = vst.msk [vmem:[#allocation3 + $0xe8] sm:$0xff] %vm279, 0.0
          %342 = vst.msk [vmem:[#allocation3 + $0xf0] sm:$0xff] %vm279, 0.0
          %343 = vst.msk [vmem:[#allocation3 + $0xf8] sm:$0xff] %vm279, 0.0
          %344 = vst.msk [vmem:[#allocation4] sm:$0xff] %vm279, 0.0
          %345 = vst.msk [vmem:[#allocation4 + $0x8] sm:$0xff] %vm279, 0.0
          %346 = vst.msk [vmem:[#allocation4 + $0x10] sm:$0xff] %vm279, 0.0
          %347 = vst.msk [vmem:[#allocation4 + $0x18] sm:$0xff] %vm279, 0.0
          %348 = vst.msk [vmem:[#allocation4 + $0x20] sm:$0xff] %vm279, 0.0
          %349 = vst.msk [vmem:[#allocation4 + $0x28] sm:$0xff] %vm279, 0.0
          %350 = vst.msk [vmem:[#allocation4 + $0x30] sm:$0xff] %vm279, 0.0
          %351 = vst.msk [vmem:[#allocation4 + $0x38] sm:$0xff] %vm279, 0.0
          %352 = vst.msk [vmem:[#allocation4 + $0x40] sm:$0xff] %vm279, 0.0
          %353 = vst.msk [vmem:[#allocation4 + $0x48] sm:$0xff] %vm279, 0.0
          %354 = vst.msk [vmem:[#allocation4 + $0x50] sm:$0xff] %vm279, 0.0
          %355 = vst.msk [vmem:[#allocation4 + $0x58] sm:$0xff] %vm279, 0.0
          %356 = vst.msk [vmem:[#allocation4 + $0x60] sm:$0xff] %vm279, 0.0
          %357 = vst.msk [vmem:[#allocation4 + $0x68] sm:$0xff] %vm279, 0.0
          %358 = vst.msk [vmem:[#allocation4 + $0x70] sm:$0xff] %vm279, 0.0
          %359 = vst.msk [vmem:[#allocation4 + $0x78] sm:$0xff] %vm279, 0.0
          %360 = vst.msk [vmem:[#allocation4 + $0x80] sm:$0xff] %vm279, 0.0
          %361 = vst.msk [vmem:[#allocation4 + $0x88] sm:$0xff] %vm279, 0.0
          %362 = vst.msk [vmem:[#allocation4 + $0x90] sm:$0xff] %vm279, 0.0
          %363 = vst.msk [vmem:[#allocation4 + $0x98] sm:$0xff] %vm279, 0.0
          %364 = vst.msk [vmem:[#allocation4 + $0xa0] sm:$0xff] %vm279, 0.0
          %365 = vst.msk [vmem:[#allocation4 + $0xa8] sm:$0xff] %vm279, 0.0
          %366 = vst.msk [vmem:[#allocation4 + $0xb0] sm:$0xff] %vm279, 0.0
          %367 = vst.msk [vmem:[#allocation4 + $0xb8] sm:$0xff] %vm279, 0.0
          %368 = vst.msk [vmem:[#allocation4 + $0xc0] sm:$0xff] %vm279, 0.0
          %369 = vst.msk [vmem:[#allocation4 + $0xc8] sm:$0xff] %vm279, 0.0
          %370 = vst.msk [vmem:[#allocation4 + $0xd0] sm:$0xff] %vm279, 0.0
          %371 = vst.msk [vmem:[#allocation4 + $0xd8] sm:$0xff] %vm279, 0.0
          %372 = vst.msk [vmem:[#allocation4 + $0xe0] sm:$0xff] %vm279, 0.0
          %373 = vst.msk [vmem:[#allocation4 + $0xe8] sm:$0xff] %vm279, 0.0
          %374 = vst.msk [vmem:[#allocation4 + $0xf0] sm:$0xff] %vm279, 0.0
          %375 = vst.msk [vmem:[#allocation4 + $0xf8] sm:$0xff] %vm279, 0.0
          %376 = vst.msk [vmem:[#allocation5] sm:$0xff] %vm279, 0.0
          %377 = vst.msk [vmem:[#allocation5 + $0x8] sm:$0xff] %vm279, 0.0
          %378 = vst.msk [vmem:[#allocation5 + $0x10] sm:$0xff] %vm279, 0.0
          %379 = vst.msk [vmem:[#allocation5 + $0x18] sm:$0xff] %vm279, 0.0
          %380 = vst.msk [vmem:[#allocation5 + $0x20] sm:$0xff] %vm279, 0.0
          %381 = vst.msk [vmem:[#allocation5 + $0x28] sm:$0xff] %vm279, 0.0
          %382 = vst.msk [vmem:[#allocation5 + $0x30] sm:$0xff] %vm279, 0.0
          %383 = vst.msk [vmem:[#allocation5 + $0x38] sm:$0xff] %vm279, 0.0
          %384 = vst.msk [vmem:[#allocation5 + $0x40] sm:$0xff] %vm279, 0.0
          %385 = vst.msk [vmem:[#allocation5 + $0x48] sm:$0xff] %vm279, 0.0
          %386 = vst.msk [vmem:[#allocation5 + $0x50] sm:$0xff] %vm279, 0.0
          %387 = vst.msk [vmem:[#allocation5 + $0x58] sm:$0xff] %vm279, 0.0
          %388 = vst.msk [vmem:[#allocation5 + $0x60] sm:$0xff] %vm279, 0.0
          %389 = vst.msk [vmem:[#allocation5 + $0x68] sm:$0xff] %vm279, 0.0
          %390 = vst.msk [vmem:[#allocation5 + $0x70] sm:$0xff] %vm279, 0.0
          %391 = vst.msk [vmem:[#allocation5 + $0x78] sm:$0xff] %vm279, 0.0
          %392 = vst.msk [vmem:[#allocation5 + $0x80] sm:$0xff] %vm279, 0.0
          %393 = vst.msk [vmem:[#allocation5 + $0x88] sm:$0xff] %vm279, 0.0
          %394 = vst.msk [vmem:[#allocation5 + $0x90] sm:$0xff] %vm279, 0.0
          %395 = vst.msk [vmem:[#allocation5 + $0x98] sm:$0xff] %vm279, 0.0
          %396 = vst.msk [vmem:[#allocation5 + $0xa0] sm:$0xff] %vm279, 0.0
          %397 = vst.msk [vmem:[#allocation5 + $0xa8] sm:$0xff] %vm279, 0.0
          %398 = vst.msk [vmem:[#allocation5 + $0xb0] sm:$0xff] %vm279, 0.0
          %399 = vst.msk [vmem:[#allocation5 + $0xb8] sm:$0xff] %vm279, 0.0
          %400 = vst.msk [vmem:[#allocation5 + $0xc0] sm:$0xff] %vm279, 0.0
          %401 = vst.msk [vmem:[#allocation5 + $0xc8] sm:$0xff] %vm279, 0.0
          %402 = vst.msk [vmem:[#allocation5 + $0xd0] sm:$0xff] %vm279, 0.0
          %403 = vst.msk [vmem:[#allocation5 + $0xd8] sm:$0xff] %vm279, 0.0
          %404 = vst.msk [vmem:[#allocation5 + $0xe0] sm:$0xff] %vm279, 0.0
          %405 = vst.msk [vmem:[#allocation5 + $0xe8] sm:$0xff] %vm279, 0.0
          %406 = vst.msk [vmem:[#allocation5 + $0xf0] sm:$0xff] %vm279, 0.0
          %407 = vst.msk [vmem:[#allocation5 + $0xf8] sm:$0xff] %vm279, 0.0
        $region40: #{tpu_custom_call.1} parent=35 // pred_fallthru
          _
        %v408 = vld [vmem:[%s254] sm:$0xf]
        %v409 = vld [vmem:[%s254 + $0x4] sm:$0xf]
        %v410 = vld [vmem:[%s254 + $0x8] sm:$0xf]
        %v411 = vld [vmem:[%s254 + $0xc] sm:$0xf]
        %v412 = vld [vmem:[%s254 + $0x10] sm:$0xf]
        %v413 = vld [vmem:[%s254 + $0x14] sm:$0xf]
        %v414 = vld [vmem:[%s254 + $0x18] sm:$0xf]
        %v415 = vld [vmem:[%s254 + $0x1c] sm:$0xf]
        %v416 = vld [vmem:[%s254 + $0x20] sm:$0xf]
        %v417 = vld [vmem:[%s254 + $0x24] sm:$0xf]
        %v418 = vld [vmem:[%s254 + $0x28] sm:$0xf]
        %v419 = vld [vmem:[%s254 + $0x2c] sm:$0xf]
        %v420 = vld [vmem:[%s254 + $0x30] sm:$0xf]
        %v421 = vld [vmem:[%s254 + $0x34] sm:$0xf]
        %v422 = vld [vmem:[%s254 + $0x38] sm:$0xf]
        %v423 = vld [vmem:[%s254 + $0x3c] sm:$0xf]
        %v424 = vld [vmem:[%s254 + $0x40] sm:$0xf]
        %v425 = vld [vmem:[%s254 + $0x44] sm:$0xf]
        %v426 = vld [vmem:[%s254 + $0x48] sm:$0xf]
        %v427 = vld [vmem:[%s254 + $0x4c] sm:$0xf]
        %v428 = vld [vmem:[%s254 + $0x50] sm:$0xf]
        %v429 = vld [vmem:[%s254 + $0x54] sm:$0xf]
        %v430 = vld [vmem:[%s254 + $0x58] sm:$0xf]
        %v431 = vld [vmem:[%s254 + $0x5c] sm:$0xf]
        %v432 = vld [vmem:[%s254 + $0x60] sm:$0xf]
        %v433 = vld [vmem:[%s254 + $0x64] sm:$0xf]
        %v434 = vld [vmem:[%s254 + $0x68] sm:$0xf]
        %v435 = vld [vmem:[%s254 + $0x6c] sm:$0xf]
        %v436 = vld [vmem:[%s254 + $0x70] sm:$0xf]
        %v437 = vld [vmem:[%s254 + $0x74] sm:$0xf]
        %v438 = vld [vmem:[%s254 + $0x78] sm:$0xf]
        %v439 = vld [vmem:[%s254 + $0x7c] sm:$0xf]
        %v440 = vld [vmem:[%s260] sm:$0xf]
        %v441 = vld [vmem:[%s260 + $0x4] sm:$0xf]
        %v442 = vld [vmem:[%s260 + $0x8] sm:$0xf]
        %v443 = vld [vmem:[%s260 + $0xc] sm:$0xf]
        %v444 = vld [vmem:[%s260 + $0x10] sm:$0xf]
        %v445 = vld [vmem:[%s260 + $0x14] sm:$0xf]
        %v446 = vld [vmem:[%s260 + $0x18] sm:$0xf]
        %v447 = vld [vmem:[%s260 + $0x1c] sm:$0xf]
        %v448 = vld [vmem:[%s260 + $0x20] sm:$0xf]
        %v449 = vld [vmem:[%s260 + $0x24] sm:$0xf]
        %v450 = vld [vmem:[%s260 + $0x28] sm:$0xf]
        %v451 = vld [vmem:[%s260 + $0x2c] sm:$0xf]
        %v452 = vld [vmem:[%s260 + $0x30] sm:$0xf]
        %v453 = vld [vmem:[%s260 + $0x34] sm:$0xf]
        %v454 = vld [vmem:[%s260 + $0x38] sm:$0xf]
        %v455 = vld [vmem:[%s260 + $0x3c] sm:$0xf]
        %v456 = vld [vmem:[%s260 + $0x40] sm:$0xf]
        %v457 = vld [vmem:[%s260 + $0x44] sm:$0xf]
        %v458 = vld [vmem:[%s260 + $0x48] sm:$0xf]
        %v459 = vld [vmem:[%s260 + $0x4c] sm:$0xf]
        %v460 = vld [vmem:[%s260 + $0x50] sm:$0xf]
        %v461 = vld [vmem:[%s260 + $0x54] sm:$0xf]
        %v462 = vld [vmem:[%s260 + $0x58] sm:$0xf]
        %v463 = vld [vmem:[%s260 + $0x5c] sm:$0xf]
        %v464 = vld [vmem:[%s260 + $0x60] sm:$0xf]
        %v465 = vld [vmem:[%s260 + $0x64] sm:$0xf]
        %v466 = vld [vmem:[%s260 + $0x68] sm:$0xf]
        %v467 = vld [vmem:[%s260 + $0x6c] sm:$0xf]
        %v468 = vld [vmem:[%s260 + $0x70] sm:$0xf]
        %v469 = vld [vmem:[%s260 + $0x74] sm:$0xf]
        %v470 = vld [vmem:[%s260 + $0x78] sm:$0xf]
        %v471 = vld [vmem:[%s260 + $0x7c] sm:$0xf]
        %v472 = vld [vmem:[%s260 + $0x80] sm:$0xf]
        %v473 = vld [vmem:[%s260 + $0x84] sm:$0xf]
        %v474 = vld [vmem:[%s260 + $0x88] sm:$0xf]
        %v475 = vld [vmem:[%s260 + $0x8c] sm:$0xf]
        %v476 = vld [vmem:[%s260 + $0x90] sm:$0xf]
        %v477 = vld [vmem:[%s260 + $0x94] sm:$0xf]
        %v478 = vld [vmem:[%s260 + $0x98] sm:$0xf]
        %v479 = vld [vmem:[%s260 + $0x9c] sm:$0xf]
        %v480 = vld [vmem:[%s260 + $0xa0] sm:$0xf]
        %v481 = vld [vmem:[%s260 + $0xa4] sm:$0xf]
        %v482 = vld [vmem:[%s260 + $0xa8] sm:$0xf]
        %v483 = vld [vmem:[%s260 + $0xac] sm:$0xf]
        %v484 = vld [vmem:[%s260 + $0xb0] sm:$0xf]
        %v485 = vld [vmem:[%s260 + $0xb4] sm:$0xf]
        %v486 = vld [vmem:[%s260 + $0xb8] sm:$0xf]
        %v487 = vld [vmem:[%s260 + $0xbc] sm:$0xf]
        %v488 = vld [vmem:[%s260 + $0xc0] sm:$0xf]
        %v489 = vld [vmem:[%s260 + $0xc4] sm:$0xf]
        %v490 = vld [vmem:[%s260 + $0xc8] sm:$0xf]
        %v491 = vld [vmem:[%s260 + $0xcc] sm:$0xf]
        %v492 = vld [vmem:[%s260 + $0xd0] sm:$0xf]
        %v493 = vld [vmem:[%s260 + $0xd4] sm:$0xf]
        %v494 = vld [vmem:[%s260 + $0xd8] sm:$0xf]
        %v495 = vld [vmem:[%s260 + $0xdc] sm:$0xf]
        %v496 = vld [vmem:[%s260 + $0xe0] sm:$0xf]
        %v497 = vld [vmem:[%s260 + $0xe4] sm:$0xf]
        %v498 = vld [vmem:[%s260 + $0xe8] sm:$0xf]
        %v499 = vld [vmem:[%s260 + $0xec] sm:$0xf]
        %v500 = vld [vmem:[%s260 + $0xf0] sm:$0xf]
        %v501 = vld [vmem:[%s260 + $0xf4] sm:$0xf]
        %v502 = vld [vmem:[%s260 + $0xf8] sm:$0xf]
        %v503 = vld [vmem:[%s260 + $0xfc] sm:$0xf]
        %v536 = vunpack.c.l.b16 %v408
        %v537 = vunpack.c.l.b16 %v409
        %v538 = vunpack.c.l.b16 %v410
        %v539 = vunpack.c.l.b16 %v411
        %v540 = vunpack.c.l.b16 %v412
        %v541 = vunpack.c.l.b16 %v413
        %v542 = vunpack.c.l.b16 %v414
        %v543 = vunpack.c.l.b16 %v415
        %v544 = vunpack.c.l.b16 %v416
        %v545 = vunpack.c.l.b16 %v417
        %v546 = vunpack.c.l.b16 %v418
        %v547 = vunpack.c.l.b16 %v419
        %v548 = vunpack.c.l.b16 %v420
        %v549 = vunpack.c.l.b16 %v421
        %v550 = vunpack.c.l.b16 %v422
        %v551 = vunpack.c.l.b16 %v423
        %v552 = vunpack.c.l.b16 %v424
        %v553 = vunpack.c.l.b16 %v425
        %v554 = vunpack.c.l.b16 %v426
        %v555 = vunpack.c.l.b16 %v427
        %v556 = vunpack.c.l.b16 %v428
        %v557 = vunpack.c.l.b16 %v429
        %v558 = vunpack.c.l.b16 %v430
        %v559 = vunpack.c.l.b16 %v431
        %v560 = vunpack.c.l.b16 %v432
        %v561 = vunpack.c.l.b16 %v433
        %v562 = vunpack.c.l.b16 %v434
        %v563 = vunpack.c.l.b16 %v435
        %v564 = vunpack.c.l.b16 %v436
        %v565 = vunpack.c.l.b16 %v437
        %v566 = vunpack.c.l.b16 %v438
        %v567 = vunpack.c.l.b16 %v439
        %v568 = vpack.c.b16 %v537, %v536
        %v569 = vpack.c.b16 %v539, %v538
        %v570 = vpack.c.b16 %v541, %v540
        %v571 = vpack.c.b16 %v543, %v542
        %v572 = vpack.c.b16 %v545, %v544
        %v573 = vpack.c.b16 %v547, %v546
        %v574 = vpack.c.b16 %v549, %v548
        %v575 = vpack.c.b16 %v551, %v550
        %v576 = vpack.c.b16 %v553, %v552
        %v577 = vpack.c.b16 %v555, %v554
        %v578 = vpack.c.b16 %v557, %v556
        %v579 = vpack.c.b16 %v559, %v558
        %v580 = vpack.c.b16 %v561, %v560
        %v581 = vpack.c.b16 %v563, %v562
        %v582 = vpack.c.b16 %v565, %v564
        %v583 = vpack.c.b16 %v567, %v566
        %v664 = vunpack.c.l.b16 %v440
        %v665 = vunpack.c.l.b16 %v441
        %v666 = vunpack.c.l.b16 %v442
        %v667 = vunpack.c.l.b16 %v443
        %v668 = vunpack.c.l.b16 %v444
        %v669 = vunpack.c.l.b16 %v445
        %v670 = vunpack.c.l.b16 %v446
        %v671 = vunpack.c.l.b16 %v447
        %v672 = vunpack.c.l.b16 %v448
        %v673 = vunpack.c.l.b16 %v449
        %v674 = vunpack.c.l.b16 %v450
        %v675 = vunpack.c.l.b16 %v451
        %v676 = vunpack.c.l.b16 %v452
        %v677 = vunpack.c.l.b16 %v453
        %v678 = vunpack.c.l.b16 %v454
        %v679 = vunpack.c.l.b16 %v455
        %v680 = vunpack.c.l.b16 %v456
        %v681 = vunpack.c.l.b16 %v457
        %v682 = vunpack.c.l.b16 %v458
        %v683 = vunpack.c.l.b16 %v459
        %v684 = vunpack.c.l.b16 %v460
        %v685 = vunpack.c.l.b16 %v461
        %v686 = vunpack.c.l.b16 %v462
        %v687 = vunpack.c.l.b16 %v463
        %v688 = vunpack.c.l.b16 %v464
        %v689 = vunpack.c.l.b16 %v465
        %v690 = vunpack.c.l.b16 %v466
        %v691 = vunpack.c.l.b16 %v467
        %v692 = vunpack.c.l.b16 %v468
        %v693 = vunpack.c.l.b16 %v469
        %v694 = vunpack.c.l.b16 %v470
        %v695 = vunpack.c.l.b16 %v471
        %v696 = vunpack.c.l.b16 %v472
        %v697 = vunpack.c.l.b16 %v473
        %v698 = vunpack.c.l.b16 %v474
        %v699 = vunpack.c.l.b16 %v475
        %v700 = vunpack.c.l.b16 %v476
        %v701 = vunpack.c.l.b16 %v477
        %v702 = vunpack.c.l.b16 %v478
        %v703 = vunpack.c.l.b16 %v479
        %v704 = vunpack.c.l.b16 %v480
        %v705 = vunpack.c.l.b16 %v481
        %v706 = vunpack.c.l.b16 %v482
        %v707 = vunpack.c.l.b16 %v483
        %v708 = vunpack.c.l.b16 %v484
        %v709 = vunpack.c.l.b16 %v485
        %v710 = vunpack.c.l.b16 %v486
        %v711 = vunpack.c.l.b16 %v487
        %v712 = vunpack.c.l.b16 %v488
        %v713 = vunpack.c.l.b16 %v489
        %v714 = vunpack.c.l.b16 %v490
        %v715 = vunpack.c.l.b16 %v491
        %v716 = vunpack.c.l.b16 %v492
        %v717 = vunpack.c.l.b16 %v493
        %v718 = vunpack.c.l.b16 %v494
        %v719 = vunpack.c.l.b16 %v495
        %v720 = vunpack.c.l.b16 %v496
        %v721 = vunpack.c.l.b16 %v497
        %v722 = vunpack.c.l.b16 %v498
        %v723 = vunpack.c.l.b16 %v499
        %v724 = vunpack.c.l.b16 %v500
        %v725 = vunpack.c.l.b16 %v501
        %v726 = vunpack.c.l.b16 %v502
        %v727 = vunpack.c.l.b16 %v503
        %v728 = vpack.c.b16 %v665, %v664
        %v729 = vpack.c.b16 %v667, %v666
        %v730 = vpack.c.b16 %v669, %v668
        %v731 = vpack.c.b16 %v671, %v670
        %v732 = vpack.c.b16 %v673, %v672
        %v733 = vpack.c.b16 %v675, %v674
        %v734 = vpack.c.b16 %v677, %v676
        %v735 = vpack.c.b16 %v679, %v678
        %v736 = vpack.c.b16 %v681, %v680
        %v737 = vpack.c.b16 %v683, %v682
        %v738 = vpack.c.b16 %v685, %v684
        %v739 = vpack.c.b16 %v687, %v686
        %v740 = vpack.c.b16 %v689, %v688
        %v741 = vpack.c.b16 %v691, %v690
        %v742 = vpack.c.b16 %v693, %v692
        %v743 = vpack.c.b16 %v695, %v694
        %v744 = vpack.c.b16 %v697, %v696
        %v745 = vpack.c.b16 %v699, %v698
        %v746 = vpack.c.b16 %v701, %v700
        %v747 = vpack.c.b16 %v703, %v702
        %v748 = vpack.c.b16 %v705, %v704
        %v749 = vpack.c.b16 %v707, %v706
        %v750 = vpack.c.b16 %v709, %v708
        %v751 = vpack.c.b16 %v711, %v710
        %v752 = vpack.c.b16 %v713, %v712
        %v753 = vpack.c.b16 %v715, %v714
        %v754 = vpack.c.b16 %v717, %v716
        %v755 = vpack.c.b16 %v719, %v718
        %v756 = vpack.c.b16 %v721, %v720
        %v757 = vpack.c.b16 %v723, %v722
        %v758 = vpack.c.b16 %v725, %v724
        %v759 = vpack.c.b16 %v727, %v726
        %792 = vmatprep.subr.bf16.mxu0 0
        %793 = vmatpush1.bf16.xpose.msra.mxu0 %v728
        %794 = vmatprep.subr.bf16.mxu0 0
        %795 = vmatpush1.bf16.xpose.msra.mxu0 %v729
        %796 = vmatprep.subr.bf16.mxu0 0
        %797 = vmatpush1.bf16.xpose.msra.mxu0 %v730
        %798 = vmatprep.subr.bf16.mxu0 0
        %799 = vmatpush1.bf16.xpose.msra.mxu0 %v731
        %800 = vmatprep.subr.bf16.mxu0 0
        %801 = vmatpush1.bf16.xpose.msra.mxu0 %v732
        %802 = vmatprep.subr.bf16.mxu0 0
        %803 = vmatpush1.bf16.xpose.msra.mxu0 %v733
        %804 = vmatprep.subr.bf16.mxu0 0
        %805 = vmatpush1.bf16.xpose.msra.mxu0 %v734
        %806 = vmatprep.subr.bf16.mxu0 0
        %807 = vmatpush1.bf16.xpose.msra.mxu0 %v735
        %808 = vmatprep.subr.bf16.mxu0 0
        %809 = vmatpush1.bf16.xpose.msra.mxu0 %v736
        %810 = vmatprep.subr.bf16.mxu0 0
        %811 = vmatpush1.bf16.xpose.msra.mxu0 %v737
        %812 = vmatprep.subr.bf16.mxu0 0
        %813 = vmatpush1.bf16.xpose.msra.mxu0 %v738
        %814 = vmatprep.subr.bf16.mxu0 0
        %815 = vmatpush1.bf16.xpose.msra.mxu0 %v739
        %816 = vmatprep.subr.bf16.mxu0 0
        %817 = vmatpush1.bf16.xpose.msra.mxu0 %v740
        %818 = vmatprep.subr.bf16.mxu0 0
        %819 = vmatpush1.bf16.xpose.msra.mxu0 %v741
        %820 = vmatprep.subr.bf16.mxu0 0
        %821 = vmatpush1.bf16.xpose.msra.mxu0 %v742
        %822 = vmatprep.subr.bf16.mxu0 0
        %823 = vmatpush1.bf16.xpose.msra.mxu0 %v743
        %824 = vmatprep.mubr.bf16.mxu0 0
        %825 = vmatmul.mubr.bf16.gmra.mrb[0].mxu0 %v568
        %v826 = vpop.f32.mrb[0].mxu0
        %v827 = vadd.f32 0.0, %v826
        %v828 = vpop.f32.mrb[0].mxu0
        %v829 = vadd.f32 0.0, %v828
        %v830 = vpop.f32.mrb[0].mxu0
        %v831 = vadd.f32 0.0, %v830
        %v832 = vpop.f32.mrb[0].mxu0
        %v833 = vadd.f32 0.0, %v832
        %834 = vmatprep.mubr.bf16.mxu0 0
        %835 = vmatmul.mubr.bf16.gmra.mrb[0].mxu0 %v569
        %v836 = vpop.f32.mrb[0].mxu0
        %v837 = vadd.f32 0.0, %v836
        %v838 = vpop.f32.mrb[0].mxu0
        %v839 = vadd.f32 0.0, %v838
        %v840 = vpop.f32.mrb[0].mxu0
        %v841 = vadd.f32 0.0, %v840
        %v842 = vpop.f32.mrb[0].mxu0
        %v843 = vadd.f32 0.0, %v842
        %844 = vmatprep.mubr.bf16.mxu0 0
        %845 = vmatmul.mubr.bf16.gmra.mrb[0].mxu0 %v570
        %v846 = vpop.f32.mrb[0].mxu0
        %v847 = vadd.f32 0.0, %v846
        %v848 = vpop.f32.mrb[0].mxu0
        %v849 = vadd.f32 0.0, %v848
        %v850 = vpop.f32.mrb[0].mxu0
        %v851 = vadd.f32 0.0, %v850
        %v852 = vpop.f32.mrb[0].mxu0
        %v853 = vadd.f32 0.0, %v852
        %854 = vmatprep.mubr.bf16.mxu0 0
        %855 = vmatmul.mubr.bf16.gmra.mrb[0].mxu0 %v571
        %v856 = vpop.f32.mrb[0].mxu0
        %v857 = vadd.f32 0.0, %v856
        %v858 = vpop.f32.mrb[0].mxu0
        %v859 = vadd.f32 0.0, %v858
        %v860 = vpop.f32.mrb[0].mxu0
        %v861 = vadd.f32 0.0, %v860
        %v862 = vpop.f32.mrb[0].mxu0
        %v863 = vadd.f32 0.0, %v862
        %864 = vmatprep.mubr.bf16.mxu0 0
        %865 = vmatmul.mubr.bf16.gmra.mrb[0].mxu0 %v572
        %v866 = vpop.f32.mrb[0].mxu0
        %v867 = vadd.f32 0.0, %v866
        %v868 = vpop.f32.mrb[0].mxu0
        %v869 = vadd.f32 0.0, %v868
        %v870 = vpop.f32.mrb[0].mxu0
        %v871 = vadd.f32 0.0, %v870
        %v872 = vpop.f32.mrb[0].mxu0
        %v873 = vadd.f32 0.0, %v872
        %874 = vmatprep.mubr.bf16.mxu0 0
        %875 = vmatmul.mubr.bf16.gmra.mrb[0].mxu0 %v573
        %v876 = vpop.f32.mrb[0].mxu0
        %v877 = vadd.f32 0.0, %v876
        %v878 = vpop.f32.mrb[0].mxu0
        %v879 = vadd.f32 0.0, %v878
        %v880 = vpop.f32.mrb[0].mxu0
        %v881 = vadd.f32 0.0, %v880
        %v882 = vpop.f32.mrb[0].mxu0
        %v883 = vadd.f32 0.0, %v882
        %884 = vmatprep.mubr.bf16.mxu0 0
        %885 = vmatmul.mubr.bf16.gmra.mrb[0].mxu0 %v574
        %v886 = vpop.f32.mrb[0].mxu0
        %v887 = vadd.f32 0.0, %v886
        %v888 = vpop.f32.mrb[0].mxu0
        %v889 = vadd.f32 0.0, %v888
        %v890 = vpop.f32.mrb[0].mxu0
        %v891 = vadd.f32 0.0, %v890
        %v892 = vpop.f32.mrb[0].mxu0
        %v893 = vadd.f32 0.0, %v892
        %894 = vmatprep.mubr.bf16.mxu0 0
        %895 = vmatmul.mubr.bf16.gmra.mrb[0].mxu0 %v575
        %v896 = vpop.f32.mrb[0].mxu0
        %v897 = vadd.f32 0.0, %v896
        %v898 = vpop.f32.mrb[0].mxu0
        %v899 = vadd.f32 0.0, %v898
        %v900 = vpop.f32.mrb[0].mxu0
        %v901 = vadd.f32 0.0, %v900
        %v902 = vpop.f32.mrb[0].mxu0
        %v903 = vadd.f32 0.0, %v902
        %904 = vmatprep.mubr.bf16.mxu0 0
        %905 = vmatmul.mubr.bf16.gmra.mrb[0].mxu0 %v576
        %v906 = vpop.f32.mrb[0].mxu0
        %v907 = vadd.f32 0.0, %v906
        %v908 = vpop.f32.mrb[0].mxu0
        %v909 = vadd.f32 0.0, %v908
        %v910 = vpop.f32.mrb[0].mxu0
        %v911 = vadd.f32 0.0, %v910
        %v912 = vpop.f32.mrb[0].mxu0
        %v913 = vadd.f32 0.0, %v912
        %914 = vmatprep.mubr.bf16.mxu0 0
        %915 = vmatmul.mubr.bf16.gmra.mrb[0].mxu0 %v577
        %v916 = vpop.f32.mrb[0].mxu0
        %v917 = vadd.f32 0.0, %v916
        %v918 = vpop.f32.mrb[0].mxu0
        %v919 = vadd.f32 0.0, %v918
        %v920 = vpop.f32.mrb[0].mxu0
        %v921 = vadd.f32 0.0, %v920
        %v922 = vpop.f32.mrb[0].mxu0
        %v923 = vadd.f32 0.0, %v922
        %924 = vmatprep.mubr.bf16.mxu0 0
        %925 = vmatmul.mubr.bf16.gmra.mrb[0].mxu0 %v578
        %v926 = vpop.f32.mrb[0].mxu0
        %v927 = vadd.f32 0.0, %v926
        %v928 = vpop.f32.mrb[0].mxu0
        %v929 = vadd.f32 0.0, %v928
        %v930 = vpop.f32.mrb[0].mxu0
        %v931 = vadd.f32 0.0, %v930
        %v932 = vpop.f32.mrb[0].mxu0
        %v933 = vadd.f32 0.0, %v932
        %934 = vmatprep.mubr.bf16.mxu0 0
        %935 = vmatmul.mubr.bf16.gmra.mrb[0].mxu0 %v579
        %v936 = vpop.f32.mrb[0].mxu0
        %v937 = vadd.f32 0.0, %v936
        %v938 = vpop.f32.mrb[0].mxu0
        %v939 = vadd.f32 0.0, %v938
        %v940 = vpop.f32.mrb[0].mxu0
        %v941 = vadd.f32 0.0, %v940
        %v942 = vpop.f32.mrb[0].mxu0
        %v943 = vadd.f32 0.0, %v942
        %944 = vmatprep.mubr.bf16.mxu0 0
        %945 = vmatmul.mubr.bf16.gmra.mrb[0].mxu0 %v580
        %v946 = vpop.f32.mrb[0].mxu0
        %v947 = vadd.f32 0.0, %v946
        %v948 = vpop.f32.mrb[0].mxu0
        %v949 = vadd.f32 0.0, %v948
        %v950 = vpop.f32.mrb[0].mxu0
        %v951 = vadd.f32 0.0, %v950
        %v952 = vpop.f32.mrb[0].mxu0
        %v953 = vadd.f32 0.0, %v952
        %954 = vmatprep.mubr.bf16.mxu0 0
        %955 = vmatmul.mubr.bf16.gmra.mrb[0].mxu0 %v581
        %v956 = vpop.f32.mrb[0].mxu0
        %v957 = vadd.f32 0.0, %v956
        %v958 = vpop.f32.mrb[0].mxu0
        %v959 = vadd.f32 0.0, %v958
        %v960 = vpop.f32.mrb[0].mxu0
        %v961 = vadd.f32 0.0, %v960
        %v962 = vpop.f32.mrb[0].mxu0
        %v963 = vadd.f32 0.0, %v962
        %964 = vmatprep.mubr.bf16.mxu0 0
        %965 = vmatmul.mubr.bf16.gmra.mrb[0].mxu0 %v582
        %v966 = vpop.f32.mrb[0].mxu0
        %v967 = vadd.f32 0.0, %v966
        %v968 = vpop.f32.mrb[0].mxu0
        %v969 = vadd.f32 0.0, %v968
        %v970 = vpop.f32.mrb[0].mxu0
        %v971 = vadd.f32 0.0, %v970
        %v972 = vpop.f32.mrb[0].mxu0
        %v973 = vadd.f32 0.0, %v972
        %974 = vmatprep.mubr.bf16.mxu0 0
        %975 = vmatmul.mubr.bf16.gmra.mrb[0].mxu0 %v583
        %v976 = vpop.f32.mrb[0].mxu0
        %v977 = vadd.f32 0.0, %v976
        %v978 = vpop.f32.mrb[0].mxu0
        %v979 = vadd.f32 0.0, %v978
        %v980 = vpop.f32.mrb[0].mxu0
        %v981 = vadd.f32 0.0, %v980
        %v982 = vpop.f32.mrb[0].mxu0
        %v983 = vadd.f32 0.0, %v982
        %984 = vdwg.mxu0
        %985 = vmatprep.subr.bf16.mxu0 0
        %986 = vmatpush1.bf16.xpose.msra.mxu0 %v744
        %987 = vmatprep.subr.bf16.mxu0 0
        %988 = vmatpush1.bf16.xpose.msra.mxu0 %v745
        %989 = vmatprep.subr.bf16.mxu0 0
        %990 = vmatpush1.bf16.xpose.msra.mxu0 %v746
        %991 = vmatprep.subr.bf16.mxu0 0
        %992 = vmatpush1.bf16.xpose.msra.mxu0 %v747
        %993 = vmatprep.subr.bf16.mxu0 0
        %994 = vmatpush1.bf16.xpose.msra.mxu0 %v748
        %995 = vmatprep.subr.bf16.mxu0 0
        %996 = vmatpush1.bf16.xpose.msra.mxu0 %v749
        %997 = vmatprep.subr.bf16.mxu0 0
        %998 = vmatpush1.bf16.xpose.msra.mxu0 %v750
        %999 = vmatprep.subr.bf16.mxu0 0
        %1000 = vmatpush1.bf16.xpose.msra.mxu0 %v751
        %1001 = vmatprep.subr.bf16.mxu0 0
        %1002 = vmatpush1.bf16.xpose.msra.mxu0 %v752
        %1003 = vmatprep.subr.bf16.mxu0 0
        %1004 = vmatpush1.bf16.xpose.msra.mxu0 %v753
        %1005 = vmatprep.subr.bf16.mxu0 0
        %1006 = vmatpush1.bf16.xpose.msra.mxu0 %v754
        %1007 = vmatprep.subr.bf16.mxu0 0
        %1008 = vmatpush1.bf16.xpose.msra.mxu0 %v755
        %1009 = vmatprep.subr.bf16.mxu0 0
        %1010 = vmatpush1.bf16.xpose.msra.mxu0 %v756
        %1011 = vmatprep.subr.bf16.mxu0 0
        %1012 = vmatpush1.bf16.xpose.msra.mxu0 %v757
        %1013 = vmatprep.subr.bf16.mxu0 0
        %1014 = vmatpush1.bf16.xpose.msra.mxu0 %v758
        %1015 = vmatprep.subr.bf16.mxu0 0
        %1016 = vmatpush1.bf16.xpose.msra.mxu0 %v759
        %1017 = vmatprep.mubr.bf16.mxu0 0
        %1018 = vmatmul.mubr.bf16.gmra.mrb[0].mxu0 %v568
        %v1019 = vpop.f32.mrb[0].mxu0
        %v1020 = vadd.f32 0.0, %v1019
        %v1021 = vpop.f32.mrb[0].mxu0
        %v1022 = vadd.f32 0.0, %v1021
        %v1023 = vpop.f32.mrb[0].mxu0
        %v1024 = vadd.f32 0.0, %v1023
        %v1025 = vpop.f32.mrb[0].mxu0
        %v1026 = vadd.f32 0.0, %v1025
        %1027 = vmatprep.mubr.bf16.mxu0 0
        %1028 = vmatmul.mubr.bf16.gmra.mrb[0].mxu0 %v569
        %v1029 = vpop.f32.mrb[0].mxu0
        %v1030 = vadd.f32 0.0, %v1029
        %v1031 = vpop.f32.mrb[0].mxu0
        %v1032 = vadd.f32 0.0, %v1031
        %v1033 = vpop.f32.mrb[0].mxu0
        %v1034 = vadd.f32 0.0, %v1033
        %v1035 = vpop.f32.mrb[0].mxu0
        %v1036 = vadd.f32 0.0, %v1035
        %1037 = vmatprep.mubr.bf16.mxu0 0
        %1038 = vmatmul.mubr.bf16.gmra.mrb[0].mxu0 %v570
        %v1039 = vpop.f32.mrb[0].mxu0
        %v1040 = vadd.f32 0.0, %v1039
        %v1041 = vpop.f32.mrb[0].mxu0
        %v1042 = vadd.f32 0.0, %v1041
        %v1043 = vpop.f32.mrb[0].mxu0
        %v1044 = vadd.f32 0.0, %v1043
        %v1045 = vpop.f32.mrb[0].mxu0
        %v1046 = vadd.f32 0.0, %v1045
        %1047 = vmatprep.mubr.bf16.mxu0 0
        %1048 = vmatmul.mubr.bf16.gmra.mrb[0].mxu0 %v571
        %v1049 = vpop.f32.mrb[0].mxu0
        %v1050 = vadd.f32 0.0, %v1049
        %v1051 = vpop.f32.mrb[0].mxu0
        %v1052 = vadd.f32 0.0, %v1051
        %v1053 = vpop.f32.mrb[0].mxu0
        %v1054 = vadd.f32 0.0, %v1053
        %v1055 = vpop.f32.mrb[0].mxu0
        %v1056 = vadd.f32 0.0, %v1055
        %1057 = vmatprep.mubr.bf16.mxu0 0
        %1058 = vmatmul.mubr.bf16.gmra.mrb[0].mxu0 %v572
        %v1059 = vpop.f32.mrb[0].mxu0
        %v1060 = vadd.f32 0.0, %v1059
        %v1061 = vpop.f32.mrb[0].mxu0
        %v1062 = vadd.f32 0.0, %v1061
        %v1063 = vpop.f32.mrb[0].mxu0
        %v1064 = vadd.f32 0.0, %v1063
        %v1065 = vpop.f32.mrb[0].mxu0
        %v1066 = vadd.f32 0.0, %v1065
        %1067 = vmatprep.mubr.bf16.mxu0 0
        %1068 = vmatmul.mubr.bf16.gmra.mrb[0].mxu0 %v573
        %v1069 = vpop.f32.mrb[0].mxu0
        %v1070 = vadd.f32 0.0, %v1069
        %v1071 = vpop.f32.mrb[0].mxu0
        %v1072 = vadd.f32 0.0, %v1071
        %v1073 = vpop.f32.mrb[0].mxu0
        %v1074 = vadd.f32 0.0, %v1073
        %v1075 = vpop.f32.mrb[0].mxu0
        %v1076 = vadd.f32 0.0, %v1075
        %1077 = vmatprep.mubr.bf16.mxu0 0
        %1078 = vmatmul.mubr.bf16.gmra.mrb[0].mxu0 %v574
        %v1079 = vpop.f32.mrb[0].mxu0
        %v1080 = vadd.f32 0.0, %v1079
        %v1081 = vpop.f32.mrb[0].mxu0
        %v1082 = vadd.f32 0.0, %v1081
        %v1083 = vpop.f32.mrb[0].mxu0
        %v1084 = vadd.f32 0.0, %v1083
        %v1085 = vpop.f32.mrb[0].mxu0
        %v1086 = vadd.f32 0.0, %v1085
        %1087 = vmatprep.mubr.bf16.mxu0 0
        %1088 = vmatmul.mubr.bf16.gmra.mrb[0].mxu0 %v575
        %v1089 = vpop.f32.mrb[0].mxu0
        %v1090 = vadd.f32 0.0, %v1089
        %v1091 = vpop.f32.mrb[0].mxu0
        %v1092 = vadd.f32 0.0, %v1091
        %v1093 = vpop.f32.mrb[0].mxu0
        %v1094 = vadd.f32 0.0, %v1093
        %v1095 = vpop.f32.mrb[0].mxu0
        %v1096 = vadd.f32 0.0, %v1095
        %1097 = vmatprep.mubr.bf16.mxu0 0
        %1098 = vmatmul.mubr.bf16.gmra.mrb[0].mxu0 %v576
        %v1099 = vpop.f32.mrb[0].mxu0
        %v1100 = vadd.f32 0.0, %v1099
        %v1101 = vpop.f32.mrb[0].mxu0
        %v1102 = vadd.f32 0.0, %v1101
        %v1103 = vpop.f32.mrb[0].mxu0
        %v1104 = vadd.f32 0.0, %v1103
        %v1105 = vpop.f32.mrb[0].mxu0
        %v1106 = vadd.f32 0.0, %v1105
        %1107 = vmatprep.mubr.bf16.mxu0 0
        %1108 = vmatmul.mubr.bf16.gmra.mrb[0].mxu0 %v577
        %v1109 = vpop.f32.mrb[0].mxu0
        %v1110 = vadd.f32 0.0, %v1109
        %v1111 = vpop.f32.mrb[0].mxu0
        %v1112 = vadd.f32 0.0, %v1111
        %v1113 = vpop.f32.mrb[0].mxu0
        %v1114 = vadd.f32 0.0, %v1113
        %v1115 = vpop.f32.mrb[0].mxu0
        %v1116 = vadd.f32 0.0, %v1115
        %1117 = vmatprep.mubr.bf16.mxu0 0
        %1118 = vmatmul.mubr.bf16.gmra.mrb[0].mxu0 %v578
        %v1119 = vpop.f32.mrb[0].mxu0
        %v1120 = vadd.f32 0.0, %v1119
        %v1121 = vpop.f32.mrb[0].mxu0
        %v1122 = vadd.f32 0.0, %v1121
        %v1123 = vpop.f32.mrb[0].mxu0
        %v1124 = vadd.f32 0.0, %v1123
        %v1125 = vpop.f32.mrb[0].mxu0
        %v1126 = vadd.f32 0.0, %v1125
        %1127 = vmatprep.mubr.bf16.mxu0 0
        %1128 = vmatmul.mubr.bf16.gmra.mrb[0].mxu0 %v579
        %v1129 = vpop.f32.mrb[0].mxu0
        %v1130 = vadd.f32 0.0, %v1129
        %v1131 = vpop.f32.mrb[0].mxu0
        %v1132 = vadd.f32 0.0, %v1131
        %v1133 = vpop.f32.mrb[0].mxu0
        %v1134 = vadd.f32 0.0, %v1133
        %v1135 = vpop.f32.mrb[0].mxu0
        %v1136 = vadd.f32 0.0, %v1135
        %1137 = vmatprep.mubr.bf16.mxu0 0
        %1138 = vmatmul.mubr.bf16.gmra.mrb[0].mxu0 %v580
        %v1139 = vpop.f32.mrb[0].mxu0
        %v1140 = vadd.f32 0.0, %v1139
        %v1141 = vpop.f32.mrb[0].mxu0
        %v1142 = vadd.f32 0.0, %v1141
        %v1143 = vpop.f32.mrb[0].mxu0
        %v1144 = vadd.f32 0.0, %v1143
        %v1145 = vpop.f32.mrb[0].mxu0
        %v1146 = vadd.f32 0.0, %v1145
        %1147 = vmatprep.mubr.bf16.mxu0 0
        %1148 = vmatmul.mubr.bf16.gmra.mrb[0].mxu0 %v581
        %v1149 = vpop.f32.mrb[0].mxu0
        %v1150 = vadd.f32 0.0, %v1149
        %v1151 = vpop.f32.mrb[0].mxu0
        %v1152 = vadd.f32 0.0, %v1151
        %v1153 = vpop.f32.mrb[0].mxu0
        %v1154 = vadd.f32 0.0, %v1153
        %v1155 = vpop.f32.mrb[0].mxu0
        %v1156 = vadd.f32 0.0, %v1155
        %1157 = vmatprep.mubr.bf16.mxu0 0
        %1158 = vmatmul.mubr.bf16.gmra.mrb[0].mxu0 %v582
        %v1159 = vpop.f32.mrb[0].mxu0
        %v1160 = vadd.f32 0.0, %v1159
        %v1161 = vpop.f32.mrb[0].mxu0
        %v1162 = vadd.f32 0.0, %v1161
        %v1163 = vpop.f32.mrb[0].mxu0
        %v1164 = vadd.f32 0.0, %v1163
        %v1165 = vpop.f32.mrb[0].mxu0
        %v1166 = vadd.f32 0.0, %v1165
        %1167 = vmatprep.mubr.bf16.mxu0 0
        %1168 = vmatmul.mubr.bf16.gmra.mrb[0].mxu0 %v583
        %v1169 = vpop.f32.mrb[0].mxu0
        %v1170 = vadd.f32 0.0, %v1169
        %v1171 = vpop.f32.mrb[0].mxu0
        %v1172 = vadd.f32 0.0, %v1171
        %v1173 = vpop.f32.mrb[0].mxu0
        %v1174 = vadd.f32 0.0, %v1173
        %v1175 = vpop.f32.mrb[0].mxu0
        %v1176 = vadd.f32 0.0, %v1175
        %1177 = vdwg.mxu0
        %v1178 = vmul.f32 %v827, 2.0
        %v1179 = vmul.f32 %v829, 2.0
        %v1180 = vmul.f32 %v1020, 2.0
        %v1181 = vmul.f32 %v1022, 2.0
        %v1182 = vmul.f32 %v831, 2.0
        %v1183 = vmul.f32 %v833, 2.0
        %v1184 = vmul.f32 %v1024, 2.0
        %v1185 = vmul.f32 %v1026, 2.0
        %v1186 = vmul.f32 %v837, 2.0
        %v1187 = vmul.f32 %v839, 2.0
        %v1188 = vmul.f32 %v1030, 2.0
        %v1189 = vmul.f32 %v1032, 2.0
        %v1190 = vmul.f32 %v841, 2.0
        %v1191 = vmul.f32 %v843, 2.0
        %v1192 = vmul.f32 %v1034, 2.0
        %v1193 = vmul.f32 %v1036, 2.0
        %v1194 = vmul.f32 %v847, 2.0
        %v1195 = vmul.f32 %v849, 2.0
        %v1196 = vmul.f32 %v1040, 2.0
        %v1197 = vmul.f32 %v1042, 2.0
        %v1198 = vmul.f32 %v851, 2.0
        %v1199 = vmul.f32 %v853, 2.0
        %v1200 = vmul.f32 %v1044, 2.0
        %v1201 = vmul.f32 %v1046, 2.0
        %v1202 = vmul.f32 %v857, 2.0
        %v1203 = vmul.f32 %v859, 2.0
        %v1204 = vmul.f32 %v1050, 2.0
        %v1205 = vmul.f32 %v1052, 2.0
        %v1206 = vmul.f32 %v861, 2.0
        %v1207 = vmul.f32 %v863, 2.0
        %v1208 = vmul.f32 %v1054, 2.0
        %v1209 = vmul.f32 %v1056, 2.0
        %v1210 = vmul.f32 %v867, 2.0
        %v1211 = vmul.f32 %v869, 2.0
        %v1212 = vmul.f32 %v1060, 2.0
        %v1213 = vmul.f32 %v1062, 2.0
        %v1214 = vmul.f32 %v871, 2.0
        %v1215 = vmul.f32 %v873, 2.0
        %v1216 = vmul.f32 %v1064, 2.0
        %v1217 = vmul.f32 %v1066, 2.0
        %v1218 = vmul.f32 %v877, 2.0
        %v1219 = vmul.f32 %v879, 2.0
        %v1220 = vmul.f32 %v1070, 2.0
        %v1221 = vmul.f32 %v1072, 2.0
        %v1222 = vmul.f32 %v881, 2.0
        %v1223 = vmul.f32 %v883, 2.0
        %v1224 = vmul.f32 %v1074, 2.0
        %v1225 = vmul.f32 %v1076, 2.0
        %v1226 = vmul.f32 %v887, 2.0
        %v1227 = vmul.f32 %v889, 2.0
        %v1228 = vmul.f32 %v1080, 2.0
        %v1229 = vmul.f32 %v1082, 2.0
        %v1230 = vmul.f32 %v891, 2.0
        %v1231 = vmul.f32 %v893, 2.0
        %v1232 = vmul.f32 %v1084, 2.0
        %v1233 = vmul.f32 %v1086, 2.0
        %v1234 = vmul.f32 %v897, 2.0
        %v1235 = vmul.f32 %v899, 2.0
        %v1236 = vmul.f32 %v1090, 2.0
        %v1237 = vmul.f32 %v1092, 2.0
        %v1238 = vmul.f32 %v901, 2.0
        %v1239 = vmul.f32 %v903, 2.0
        %v1240 = vmul.f32 %v1094, 2.0
        %v1241 = vmul.f32 %v1096, 2.0
        %v1242 = vmul.f32 %v907, 2.0
        %v1243 = vmul.f32 %v909, 2.0
        %v1244 = vmul.f32 %v1100, 2.0
        %v1245 = vmul.f32 %v1102, 2.0
        %v1246 = vmul.f32 %v911, 2.0
        %v1247 = vmul.f32 %v913, 2.0
        %v1248 = vmul.f32 %v1104, 2.0
        %v1249 = vmul.f32 %v1106, 2.0
        %v1250 = vmul.f32 %v917, 2.0
        %v1251 = vmul.f32 %v919, 2.0
        %v1252 = vmul.f32 %v1110, 2.0
        %v1253 = vmul.f32 %v1112, 2.0
        %v1254 = vmul.f32 %v921, 2.0
        %v1255 = vmul.f32 %v923, 2.0
        %v1256 = vmul.f32 %v1114, 2.0
        %v1257 = vmul.f32 %v1116, 2.0
        %v1258 = vmul.f32 %v927, 2.0
        %v1259 = vmul.f32 %v929, 2.0
        %v1260 = vmul.f32 %v1120, 2.0
        %v1261 = vmul.f32 %v1122, 2.0
        %v1262 = vmul.f32 %v931, 2.0
        %v1263 = vmul.f32 %v933, 2.0
        %v1264 = vmul.f32 %v1124, 2.0
        %v1265 = vmul.f32 %v1126, 2.0
        %v1266 = vmul.f32 %v937, 2.0
        %v1267 = vmul.f32 %v939, 2.0
        %v1268 = vmul.f32 %v1130, 2.0
        %v1269 = vmul.f32 %v1132, 2.0
        %v1270 = vmul.f32 %v941, 2.0
        %v1271 = vmul.f32 %v943, 2.0
        %v1272 = vmul.f32 %v1134, 2.0
        %v1273 = vmul.f32 %v1136, 2.0
        %v1274 = vmul.f32 %v947, 2.0
        %v1275 = vmul.f32 %v949, 2.0
        %v1276 = vmul.f32 %v1140, 2.0
        %v1277 = vmul.f32 %v1142, 2.0
        %v1278 = vmul.f32 %v951, 2.0
        %v1279 = vmul.f32 %v953, 2.0
        %v1280 = vmul.f32 %v1144, 2.0
        %v1281 = vmul.f32 %v1146, 2.0
        %v1282 = vmul.f32 %v957, 2.0
        %v1283 = vmul.f32 %v959, 2.0
        %v1284 = vmul.f32 %v1150, 2.0
        %v1285 = vmul.f32 %v1152, 2.0
        %v1286 = vmul.f32 %v961, 2.0
        %v1287 = vmul.f32 %v963, 2.0
        %v1288 = vmul.f32 %v1154, 2.0
        %v1289 = vmul.f32 %v1156, 2.0
        %v1290 = vmul.f32 %v967, 2.0
        %v1291 = vmul.f32 %v969, 2.0
        %v1292 = vmul.f32 %v1160, 2.0
        %v1293 = vmul.f32 %v1162, 2.0
        %v1294 = vmul.f32 %v971, 2.0
        %v1295 = vmul.f32 %v973, 2.0
        %v1296 = vmul.f32 %v1164, 2.0
        %v1297 = vmul.f32 %v1166, 2.0
        %v1298 = vmul.f32 %v977, 2.0
        %v1299 = vmul.f32 %v979, 2.0
        %v1300 = vmul.f32 %v1170, 2.0
        %v1301 = vmul.f32 %v1172, 2.0
        %v1302 = vmul.f32 %v981, 2.0
        %v1303 = vmul.f32 %v983, 2.0
        %v1304 = vmul.f32 %v1174, 2.0
        %v1305 = vmul.f32 %v1176, 2.0
        %v1306 = vld [vmem:[%s266] sm:$0xff]
        %v1307 = vld [vmem:[%s266 + $0x8] sm:$0xff]
        %v1308 = vld [vmem:[%s266 + $0x10] sm:$0xff]
        %v1309 = vld [vmem:[%s266 + $0x18] sm:$0xff]
        %v1310 = vld [vmem:[%s266 + $0x20] sm:$0xff]
        %v1311 = vld [vmem:[%s266 + $0x28] sm:$0xff]
        %v1312 = vld [vmem:[%s266 + $0x30] sm:$0xff]
        %v1313 = vld [vmem:[%s266 + $0x38] sm:$0xff]
        %v1314 = vld [vmem:[%s266 + $0x40] sm:$0xff]
        %v1315 = vld [vmem:[%s266 + $0x48] sm:$0xff]
        %v1316 = vld [vmem:[%s266 + $0x50] sm:$0xff]
        %v1317 = vld [vmem:[%s266 + $0x58] sm:$0xff]
        %v1318 = vld [vmem:[%s266 + $0x60] sm:$0xff]
        %v1319 = vld [vmem:[%s266 + $0x68] sm:$0xff]
        %v1320 = vld [vmem:[%s266 + $0x70] sm:$0xff]
        %v1321 = vld [vmem:[%s266 + $0x78] sm:$0xff]
        %v1322 = vld [vmem:[%s266 + $0x80] sm:$0xff]
        %v1323 = vld [vmem:[%s266 + $0x88] sm:$0xff]
        %v1324 = vld [vmem:[%s266 + $0x90] sm:$0xff]
        %v1325 = vld [vmem:[%s266 + $0x98] sm:$0xff]
        %v1326 = vld [vmem:[%s266 + $0xa0] sm:$0xff]
        %v1327 = vld [vmem:[%s266 + $0xa8] sm:$0xff]
        %v1328 = vld [vmem:[%s266 + $0xb0] sm:$0xff]
        %v1329 = vld [vmem:[%s266 + $0xb8] sm:$0xff]
        %v1330 = vld [vmem:[%s266 + $0xc0] sm:$0xff]
        %v1331 = vld [vmem:[%s266 + $0xc8] sm:$0xff]
        %v1332 = vld [vmem:[%s266 + $0xd0] sm:$0xff]
        %v1333 = vld [vmem:[%s266 + $0xd8] sm:$0xff]
        %v1334 = vld [vmem:[%s266 + $0xe0] sm:$0xff]
        %v1335 = vld [vmem:[%s266 + $0xe8] sm:$0xff]
        %v1336 = vld [vmem:[%s266 + $0xf0] sm:$0xff]
        %v1337 = vld [vmem:[%s266 + $0xf8] sm:$0xff]
        %v1338 = vld [vmem:[%s271] sm:$0xf]
        %s1339 = smul.u32 %s22, 256
        %v1340 = vlaneseq
        %v1341 = vshrl.u32 %v1340, 7
        %v1342 = vadd.s32 %v1341, 8
        %v1343 = vadd.s32 %v1341, 16
        %v1344 = vadd.s32 %v1341, 24
        %v1345 = vadd.s32 %v1341, 32
        %v1346 = vadd.s32 %v1341, 40
        %v1347 = vadd.s32 %v1341, 48
        %v1348 = vadd.s32 %v1341, 56
        %v1349 = vadd.s32 %v1341, 64
        %v1350 = vadd.s32 %v1341, 72
        %v1351 = vadd.s32 %v1341, 80
        %v1352 = vadd.s32 %v1341, 88
        %v1353 = vadd.s32 %v1341, 96
        %v1354 = vadd.s32 %v1341, 104
        %v1355 = vadd.s32 %v1341, 112
        %v1356 = vadd.s32 %v1341, 120
        %v1357 = vadd.s32 %v1341, 128
        %v1358 = vadd.s32 %v1341, 136
        %v1359 = vadd.s32 %v1341, 144
        %v1360 = vadd.s32 %v1341, 152
        %v1361 = vadd.s32 %v1341, 160
        %v1362 = vadd.s32 %v1341, 168
        %v1363 = vadd.s32 %v1341, 176
        %v1364 = vadd.s32 %v1341, 184
        %v1365 = vadd.s32 %v1341, 192
        %v1366 = vadd.s32 %v1341, 200
        %v1367 = vadd.s32 %v1341, 208
        %v1368 = vadd.s32 %v1341, 216
        %v1369 = vadd.s32 %v1341, 224
        %v1370 = vadd.s32 %v1341, 232
        %v1371 = vadd.s32 %v1341, 240
        %v1372 = vadd.s32 %v1341, 248
        %v1373 = vstv %s1339
        %v1374 = vadd.s32 %v1373, %v1341
        %v1375 = vadd.s32 %v1373, %v1342
        %v1376 = vadd.s32 %v1373, %v1343
        %v1377 = vadd.s32 %v1373, %v1344
        %v1378 = vadd.s32 %v1373, %v1345
        %v1379 = vadd.s32 %v1373, %v1346
        %v1380 = vadd.s32 %v1373, %v1347
        %v1381 = vadd.s32 %v1373, %v1348
        %v1382 = vadd.s32 %v1373, %v1349
        %v1383 = vadd.s32 %v1373, %v1350
        %v1384 = vadd.s32 %v1373, %v1351
        %v1385 = vadd.s32 %v1373, %v1352
        %v1386 = vadd.s32 %v1373, %v1353
        %v1387 = vadd.s32 %v1373, %v1354
        %v1388 = vadd.s32 %v1373, %v1355
        %v1389 = vadd.s32 %v1373, %v1356
        %v1390 = vadd.s32 %v1373, %v1357
        %v1391 = vadd.s32 %v1373, %v1358
        %v1392 = vadd.s32 %v1373, %v1359
        %v1393 = vadd.s32 %v1373, %v1360
        %v1394 = vadd.s32 %v1373, %v1361
        %v1395 = vadd.s32 %v1373, %v1362
        %v1396 = vadd.s32 %v1373, %v1363
        %v1397 = vadd.s32 %v1373, %v1364
        %v1398 = vadd.s32 %v1373, %v1365
        %v1399 = vadd.s32 %v1373, %v1366
        %v1400 = vadd.s32 %v1373, %v1367
        %v1401 = vadd.s32 %v1373, %v1368
        %v1402 = vadd.s32 %v1373, %v1369
        %v1403 = vadd.s32 %v1373, %v1370
        %v1404 = vadd.s32 %v1373, %v1371
        %v1405 = vadd.s32 %v1373, %v1372
        %s1406 = smul.u32 %s23, 512
        %v1407 = vlaneseq
        %v1408 = vand.u32 %v1407, 127
        %v1409 = vadd.s32 %v1408, 128
        %v1410 = vadd.s32 %v1408, 256
        %v1411 = vadd.s32 %v1408, 384
        %v1412 = vstv %s1406
        %v1413 = vadd.s32 %v1412, %v1408
        %v1414 = vadd.s32 %v1412, %v1409
        %v1415 = vadd.s32 %v1412, %v1410
        %v1416 = vadd.s32 %v1412, %v1411
        %vm1417 = vcmp.eq.s32.totalorder %v1374, %v1413
        %vm1418 = vcmp.eq.s32.totalorder %v1374, %v1414
        %vm1419 = vcmp.eq.s32.totalorder %v1374, %v1415
        %vm1420 = vcmp.eq.s32.totalorder %v1374, %v1416
        %vm1421 = vcmp.eq.s32.totalorder %v1375, %v1413
        %vm1422 = vcmp.eq.s32.totalorder %v1375, %v1414
        %vm1423 = vcmp.eq.s32.totalorder %v1375, %v1415
        %vm1424 = vcmp.eq.s32.totalorder %v1375, %v1416
        %vm1425 = vcmp.eq.s32.totalorder %v1376, %v1413
        %vm1426 = vcmp.eq.s32.totalorder %v1376, %v1414
        %vm1427 = vcmp.eq.s32.totalorder %v1376, %v1415
        %vm1428 = vcmp.eq.s32.totalorder %v1376, %v1416
        %vm1429 = vcmp.eq.s32.totalorder %v1377, %v1413
        %vm1430 = vcmp.eq.s32.totalorder %v1377, %v1414
        %vm1431 = vcmp.eq.s32.totalorder %v1377, %v1415
        %vm1432 = vcmp.eq.s32.totalorder %v1377, %v1416
        %vm1433 = vcmp.eq.s32.totalorder %v1378, %v1413
        %vm1434 = vcmp.eq.s32.totalorder %v1378, %v1414
        %vm1435 = vcmp.eq.s32.totalorder %v1378, %v1415
        %vm1436 = vcmp.eq.s32.totalorder %v1378, %v1416
        %vm1437 = vcmp.eq.s32.totalorder %v1379, %v1413
        %vm1438 = vcmp.eq.s32.totalorder %v1379, %v1414
        %vm1439 = vcmp.eq.s32.totalorder %v1379, %v1415
        %vm1440 = vcmp.eq.s32.totalorder %v1379, %v1416
        %vm1441 = vcmp.eq.s32.totalorder %v1380, %v1413
        %vm1442 = vcmp.eq.s32.totalorder %v1380, %v1414
        %vm1443 = vcmp.eq.s32.totalorder %v1380, %v1415
        %vm1444 = vcmp.eq.s32.totalorder %v1380, %v1416
        %vm1445 = vcmp.eq.s32.totalorder %v1381, %v1413
        %vm1446 = vcmp.eq.s32.totalorder %v1381, %v1414
        %vm1447 = vcmp.eq.s32.totalorder %v1381, %v1415
        %vm1448 = vcmp.eq.s32.totalorder %v1381, %v1416
        %vm1449 = vcmp.eq.s32.totalorder %v1382, %v1413
        %vm1450 = vcmp.eq.s32.totalorder %v1382, %v1414
        %vm1451 = vcmp.eq.s32.totalorder %v1382, %v1415
        %vm1452 = vcmp.eq.s32.totalorder %v1382, %v1416
        %vm1453 = vcmp.eq.s32.totalorder %v1383, %v1413
        %vm1454 = vcmp.eq.s32.totalorder %v1383, %v1414
        %vm1455 = vcmp.eq.s32.totalorder %v1383, %v1415
        %vm1456 = vcmp.eq.s32.totalorder %v1383, %v1416
        %vm1457 = vcmp.eq.s32.totalorder %v1384, %v1413
        %vm1458 = vcmp.eq.s32.totalorder %v1384, %v1414
        %vm1459 = vcmp.eq.s32.totalorder %v1384, %v1415
        %vm1460 = vcmp.eq.s32.totalorder %v1384, %v1416
        %vm1461 = vcmp.eq.s32.totalorder %v1385, %v1413
        %vm1462 = vcmp.eq.s32.totalorder %v1385, %v1414
        %vm1463 = vcmp.eq.s32.totalorder %v1385, %v1415
        %vm1464 = vcmp.eq.s32.totalorder %v1385, %v1416
        %vm1465 = vcmp.eq.s32.totalorder %v1386, %v1413
        %vm1466 = vcmp.eq.s32.totalorder %v1386, %v1414
        %vm1467 = vcmp.eq.s32.totalorder %v1386, %v1415
        %vm1468 = vcmp.eq.s32.totalorder %v1386, %v1416
        %vm1469 = vcmp.eq.s32.totalorder %v1387, %v1413
        %vm1470 = vcmp.eq.s32.totalorder %v1387, %v1414
        %vm1471 = vcmp.eq.s32.totalorder %v1387, %v1415
        %vm1472 = vcmp.eq.s32.totalorder %v1387, %v1416
        %vm1473 = vcmp.eq.s32.totalorder %v1388, %v1413
        %vm1474 = vcmp.eq.s32.totalorder %v1388, %v1414
        %vm1475 = vcmp.eq.s32.totalorder %v1388, %v1415
        %vm1476 = vcmp.eq.s32.totalorder %v1388, %v1416
        %vm1477 = vcmp.eq.s32.totalorder %v1389, %v1413
        %vm1478 = vcmp.eq.s32.totalorder %v1389, %v1414
        %vm1479 = vcmp.eq.s32.totalorder %v1389, %v1415
        %vm1480 = vcmp.eq.s32.totalorder %v1389, %v1416
        %vm1481 = vcmp.eq.s32.totalorder %v1390, %v1413
        %vm1482 = vcmp.eq.s32.totalorder %v1390, %v1414
        %vm1483 = vcmp.eq.s32.totalorder %v1390, %v1415
        %vm1484 = vcmp.eq.s32.totalorder %v1390, %v1416
        %vm1485 = vcmp.eq.s32.totalorder %v1391, %v1413
        %vm1486 = vcmp.eq.s32.totalorder %v1391, %v1414
        %vm1487 = vcmp.eq.s32.totalorder %v1391, %v1415
        %vm1488 = vcmp.eq.s32.totalorder %v1391, %v1416
        %vm1489 = vcmp.eq.s32.totalorder %v1392, %v1413
        %vm1490 = vcmp.eq.s32.totalorder %v1392, %v1414
        %vm1491 = vcmp.eq.s32.totalorder %v1392, %v1415
        %vm1492 = vcmp.eq.s32.totalorder %v1392, %v1416
        %vm1493 = vcmp.eq.s32.totalorder %v1393, %v1413
        %vm1494 = vcmp.eq.s32.totalorder %v1393, %v1414
        %vm1495 = vcmp.eq.s32.totalorder %v1393, %v1415
        %vm1496 = vcmp.eq.s32.totalorder %v1393, %v1416
        %vm1497 = vcmp.eq.s32.totalorder %v1394, %v1413
        %vm1498 = vcmp.eq.s32.totalorder %v1394, %v1414
        %vm1499 = vcmp.eq.s32.totalorder %v1394, %v1415
        %vm1500 = vcmp.eq.s32.totalorder %v1394, %v1416
        %vm1501 = vcmp.eq.s32.totalorder %v1395, %v1413
        %vm1502 = vcmp.eq.s32.totalorder %v1395, %v1414
        %vm1503 = vcmp.eq.s32.totalorder %v1395, %v1415
        %vm1504 = vcmp.eq.s32.totalorder %v1395, %v1416
        %vm1505 = vcmp.eq.s32.totalorder %v1396, %v1413
        %vm1506 = vcmp.eq.s32.totalorder %v1396, %v1414
        %vm1507 = vcmp.eq.s32.totalorder %v1396, %v1415
        %vm1508 = vcmp.eq.s32.totalorder %v1396, %v1416
        %vm1509 = vcmp.eq.s32.totalorder %v1397, %v1413
        %vm1510 = vcmp.eq.s32.totalorder %v1397, %v1414
        %vm1511 = vcmp.eq.s32.totalorder %v1397, %v1415
        %vm1512 = vcmp.eq.s32.totalorder %v1397, %v1416
        %vm1513 = vcmp.eq.s32.totalorder %v1398, %v1413
        %vm1514 = vcmp.eq.s32.totalorder %v1398, %v1414
        %vm1515 = vcmp.eq.s32.totalorder %v1398, %v1415
        %vm1516 = vcmp.eq.s32.totalorder %v1398, %v1416
        %vm1517 = vcmp.eq.s32.totalorder %v1399, %v1413
        %vm1518 = vcmp.eq.s32.totalorder %v1399, %v1414
        %vm1519 = vcmp.eq.s32.totalorder %v1399, %v1415
        %vm1520 = vcmp.eq.s32.totalorder %v1399, %v1416
        %vm1521 = vcmp.eq.s32.totalorder %v1400, %v1413
        %vm1522 = vcmp.eq.s32.totalorder %v1400, %v1414
        %vm1523 = vcmp.eq.s32.totalorder %v1400, %v1415
        %vm1524 = vcmp.eq.s32.totalorder %v1400, %v1416
        %vm1525 = vcmp.eq.s32.totalorder %v1401, %v1413
        %vm1526 = vcmp.eq.s32.totalorder %v1401, %v1414
        %vm1527 = vcmp.eq.s32.totalorder %v1401, %v1415
        %vm1528 = vcmp.eq.s32.totalorder %v1401, %v1416
        %vm1529 = vcmp.eq.s32.totalorder %v1402, %v1413
        %vm1530 = vcmp.eq.s32.totalorder %v1402, %v1414
        %vm1531 = vcmp.eq.s32.totalorder %v1402, %v1415
        %vm1532 = vcmp.eq.s32.totalorder %v1402, %v1416
        %vm1533 = vcmp.eq.s32.totalorder %v1403, %v1413
        %vm1534 = vcmp.eq.s32.totalorder %v1403, %v1414
        %vm1535 = vcmp.eq.s32.totalorder %v1403, %v1415
        %vm1536 = vcmp.eq.s32.totalorder %v1403, %v1416
        %vm1537 = vcmp.eq.s32.totalorder %v1404, %v1413
        %vm1538 = vcmp.eq.s32.totalorder %v1404, %v1414
        %vm1539 = vcmp.eq.s32.totalorder %v1404, %v1415
        %vm1540 = vcmp.eq.s32.totalorder %v1404, %v1416
        %vm1541 = vcmp.eq.s32.totalorder %v1405, %v1413
        %vm1542 = vcmp.eq.s32.totalorder %v1405, %v1414
        %vm1543 = vcmp.eq.s32.totalorder %v1405, %v1415
        %vm1544 = vcmp.eq.s32.totalorder %v1405, %v1416
        %vm1545 = vcmp.lt.s32.totalorder %v1338, 0
        %v1546 = vsel %vm1545, 1, 0
        %v1547 = vlaneseq
        %v1548 = vshrl.u32 %v1547, 7
        %v1549 = vsub.s32 0, %v1548
        %v1550 = vrot.slane %v1546, %v1549
        %v1551 = vlaneseq
        %v1552 = vshrl.u32 %v1551, 7
        %v1553 = vsub.s32 1, %v1552
        %v1554 = vrot.slane %v1546, %v1553
        %v1555 = vlaneseq
        %v1556 = vshrl.u32 %v1555, 7
        %v1557 = vsub.s32 2, %v1556
        %v1558 = vrot.slane %v1546, %v1557
        %v1559 = vlaneseq
        %v1560 = vshrl.u32 %v1559, 7
        %v1561 = vsub.s32 3, %v1560
        %v1562 = vrot.slane %v1546, %v1561
        %vm1563 = vcmp.eq.s32.totalorder %v1550, 1
        %vm1564 = vcmp.eq.s32.totalorder %v1554, 1
        %vm1565 = vcmp.eq.s32.totalorder %v1558, 1
        %vm1566 = vcmp.eq.s32.totalorder %v1562, 1
        %vm1567 = vmor %vm1417, %vm1563
        %vm1568 = vmor %vm1418, %vm1564
        %vm1569 = vmor %vm1419, %vm1565
        %vm1570 = vmor %vm1420, %vm1566
        %vm1571 = vmor %vm1421, %vm1563
        %vm1572 = vmor %vm1422, %vm1564
        %vm1573 = vmor %vm1423, %vm1565
        %vm1574 = vmor %vm1424, %vm1566
        %vm1575 = vmor %vm1425, %vm1563
        %vm1576 = vmor %vm1426, %vm1564
        %vm1577 = vmor %vm1427, %vm1565
        %vm1578 = vmor %vm1428, %vm1566
        %vm1579 = vmor %vm1429, %vm1563
        %vm1580 = vmor %vm1430, %vm1564
        %vm1581 = vmor %vm1431, %vm1565
        %vm1582 = vmor %vm1432, %vm1566
        %vm1583 = vmor %vm1433, %vm1563
        %vm1584 = vmor %vm1434, %vm1564
        %vm1585 = vmor %vm1435, %vm1565
        %vm1586 = vmor %vm1436, %vm1566
        %vm1587 = vmor %vm1437, %vm1563
        %vm1588 = vmor %vm1438, %vm1564
        %vm1589 = vmor %vm1439, %vm1565
        %vm1590 = vmor %vm1440, %vm1566
        %vm1591 = vmor %vm1441, %vm1563
        %vm1592 = vmor %vm1442, %vm1564
        %vm1593 = vmor %vm1443, %vm1565
        %vm1594 = vmor %vm1444, %vm1566
        %vm1595 = vmor %vm1445, %vm1563
        %vm1596 = vmor %vm1446, %vm1564
        %vm1597 = vmor %vm1447, %vm1565
        %vm1598 = vmor %vm1448, %vm1566
        %vm1599 = vmor %vm1449, %vm1563
        %vm1600 = vmor %vm1450, %vm1564
        %vm1601 = vmor %vm1451, %vm1565
        %vm1602 = vmor %vm1452, %vm1566
        %vm1603 = vmor %vm1453, %vm1563
        %vm1604 = vmor %vm1454, %vm1564
        %vm1605 = vmor %vm1455, %vm1565
        %vm1606 = vmor %vm1456, %vm1566
        %vm1607 = vmor %vm1457, %vm1563
        %vm1608 = vmor %vm1458, %vm1564
        %vm1609 = vmor %vm1459, %vm1565
        %vm1610 = vmor %vm1460, %vm1566
        %vm1611 = vmor %vm1461, %vm1563
        %vm1612 = vmor %vm1462, %vm1564
        %vm1613 = vmor %vm1463, %vm1565
        %vm1614 = vmor %vm1464, %vm1566
        %vm1615 = vmor %vm1465, %vm1563
        %vm1616 = vmor %vm1466, %vm1564
        %vm1617 = vmor %vm1467, %vm1565
        %vm1618 = vmor %vm1468, %vm1566
        %vm1619 = vmor %vm1469, %vm1563
        %vm1620 = vmor %vm1470, %vm1564
        %vm1621 = vmor %vm1471, %vm1565
        %vm1622 = vmor %vm1472, %vm1566
        %vm1623 = vmor %vm1473, %vm1563
        %vm1624 = vmor %vm1474, %vm1564
        %vm1625 = vmor %vm1475, %vm1565
        %vm1626 = vmor %vm1476, %vm1566
        %vm1627 = vmor %vm1477, %vm1563
        %vm1628 = vmor %vm1478, %vm1564
        %vm1629 = vmor %vm1479, %vm1565
        %vm1630 = vmor %vm1480, %vm1566
        %vm1631 = vmor %vm1481, %vm1563
        %vm1632 = vmor %vm1482, %vm1564
        %vm1633 = vmor %vm1483, %vm1565
        %vm1634 = vmor %vm1484, %vm1566
        %vm1635 = vmor %vm1485, %vm1563
        %vm1636 = vmor %vm1486, %vm1564
        %vm1637 = vmor %vm1487, %vm1565
        %vm1638 = vmor %vm1488, %vm1566
        %vm1639 = vmor %vm1489, %vm1563
        %vm1640 = vmor %vm1490, %vm1564
        %vm1641 = vmor %vm1491, %vm1565
        %vm1642 = vmor %vm1492, %vm1566
        %vm1643 = vmor %vm1493, %vm1563
        %vm1644 = vmor %vm1494, %vm1564
        %vm1645 = vmor %vm1495, %vm1565
        %vm1646 = vmor %vm1496, %vm1566
        %vm1647 = vmor %vm1497, %vm1563
        %vm1648 = vmor %vm1498, %vm1564
        %vm1649 = vmor %vm1499, %vm1565
        %vm1650 = vmor %vm1500, %vm1566
        %vm1651 = vmor %vm1501, %vm1563
        %vm1652 = vmor %vm1502, %vm1564
        %vm1653 = vmor %vm1503, %vm1565
        %vm1654 = vmor %vm1504, %vm1566
        %vm1655 = vmor %vm1505, %vm1563
        %vm1656 = vmor %vm1506, %vm1564
        %vm1657 = vmor %vm1507, %vm1565
        %vm1658 = vmor %vm1508, %vm1566
        %vm1659 = vmor %vm1509, %vm1563
        %vm1660 = vmor %vm1510, %vm1564
        %vm1661 = vmor %vm1511, %vm1565
        %vm1662 = vmor %vm1512, %vm1566
        %vm1663 = vmor %vm1513, %vm1563
        %vm1664 = vmor %vm1514, %vm1564
        %vm1665 = vmor %vm1515, %vm1565
        %vm1666 = vmor %vm1516, %vm1566
        %vm1667 = vmor %vm1517, %vm1563
        %vm1668 = vmor %vm1518, %vm1564
        %vm1669 = vmor %vm1519, %vm1565
        %vm1670 = vmor %vm1520, %vm1566
        %vm1671 = vmor %vm1521, %vm1563
        %vm1672 = vmor %vm1522, %vm1564
        %vm1673 = vmor %vm1523, %vm1565
        %vm1674 = vmor %vm1524, %vm1566
        %vm1675 = vmor %vm1525, %vm1563
        %vm1676 = vmor %vm1526, %vm1564
        %vm1677 = vmor %vm1527, %vm1565
        %vm1678 = vmor %vm1528, %vm1566
        %vm1679 = vmor %vm1529, %vm1563
        %vm1680 = vmor %vm1530, %vm1564
        %vm1681 = vmor %vm1531, %vm1565
        %vm1682 = vmor %vm1532, %vm1566
        %vm1683 = vmor %vm1533, %vm1563
        %vm1684 = vmor %vm1534, %vm1564
        %vm1685 = vmor %vm1535, %vm1565
        %vm1686 = vmor %vm1536, %vm1566
        %vm1687 = vmor %vm1537, %vm1563
        %vm1688 = vmor %vm1538, %vm1564
        %vm1689 = vmor %vm1539, %vm1565
        %vm1690 = vmor %vm1540, %vm1566
        %vm1691 = vmor %vm1541, %vm1563
        %vm1692 = vmor %vm1542, %vm1564
        %vm1693 = vmor %vm1543, %vm1565
        %vm1694 = vmor %vm1544, %vm1566
        %v1695 = vsel %vm1567, -1e+30, %v1178
        %v1696 = vsel %vm1568, -1e+30, %v1179
        %v1697 = vsel %vm1569, -1e+30, %v1180
        %v1698 = vsel %vm1570, -1e+30, %v1181
        %v1699 = vsel %vm1571, -1e+30, %v1182
        %v1700 = vsel %vm1572, -1e+30, %v1183
        %v1701 = vsel %vm1573, -1e+30, %v1184
        %v1702 = vsel %vm1574, -1e+30, %v1185
        %v1703 = vsel %vm1575, -1e+30, %v1186
        %v1704 = vsel %vm1576, -1e+30, %v1187
        %v1705 = vsel %vm1577, -1e+30, %v1188
        %v1706 = vsel %vm1578, -1e+30, %v1189
        %v1707 = vsel %vm1579, -1e+30, %v1190
        %v1708 = vsel %vm1580, -1e+30, %v1191
        %v1709 = vsel %vm1581, -1e+30, %v1192
        %v1710 = vsel %vm1582, -1e+30, %v1193
        %v1711 = vsel %vm1583, -1e+30, %v1194
        %v1712 = vsel %vm1584, -1e+30, %v1195
        %v1713 = vsel %vm1585, -1e+30, %v1196
        %v1714 = vsel %vm1586, -1e+30, %v1197
        %v1715 = vsel %vm1587, -1e+30, %v1198
        %v1716 = vsel %vm1588, -1e+30, %v1199
        %v1717 = vsel %vm1589, -1e+30, %v1200
        %v1718 = vsel %vm1590, -1e+30, %v1201
        %v1719 = vsel %vm1591, -1e+30, %v1202
        %v1720 = vsel %vm1592, -1e+30, %v1203
        %v1721 = vsel %vm1593, -1e+30, %v1204
        %v1722 = vsel %vm1594, -1e+30, %v1205
        %v1723 = vsel %vm1595, -1e+30, %v1206
        %v1724 = vsel %vm1596, -1e+30, %v1207
        %v1725 = vsel %vm1597, -1e+30, %v1208
        %v1726 = vsel %vm1598, -1e+30, %v1209
        %v1727 = vsel %vm1599, -1e+30, %v1210
        %v1728 = vsel %vm1600, -1e+30, %v1211
        %v1729 = vsel %vm1601, -1e+30, %v1212
        %v1730 = vsel %vm1602, -1e+30, %v1213
        %v1731 = vsel %vm1603, -1e+30, %v1214
        %v1732 = vsel %vm1604, -1e+30, %v1215
        %v1733 = vsel %vm1605, -1e+30, %v1216
        %v1734 = vsel %vm1606, -1e+30, %v1217
        %v1735 = vsel %vm1607, -1e+30, %v1218
        %v1736 = vsel %vm1608, -1e+30, %v1219
        %v1737 = vsel %vm1609, -1e+30, %v1220
        %v1738 = vsel %vm1610, -1e+30, %v1221
        %v1739 = vsel %vm1611, -1e+30, %v1222
        %v1740 = vsel %vm1612, -1e+30, %v1223
        %v1741 = vsel %vm1613, -1e+30, %v1224
        %v1742 = vsel %vm1614, -1e+30, %v1225
        %v1743 = vsel %vm1615, -1e+30, %v1226
        %v1744 = vsel %vm1616, -1e+30, %v1227
        %v1745 = vsel %vm1617, -1e+30, %v1228
        %v1746 = vsel %vm1618, -1e+30, %v1229
        %v1747 = vsel %vm1619, -1e+30, %v1230
        %v1748 = vsel %vm1620, -1e+30, %v1231
        %v1749 = vsel %vm1621, -1e+30, %v1232
        %v1750 = vsel %vm1622, -1e+30, %v1233
        %v1751 = vsel %vm1623, -1e+30, %v1234
        %v1752 = vsel %vm1624, -1e+30, %v1235
        %v1753 = vsel %vm1625, -1e+30, %v1236
        %v1754 = vsel %vm1626, -1e+30, %v1237
        %v1755 = vsel %vm1627, -1e+30, %v1238
        %v1756 = vsel %vm1628, -1e+30, %v1239
        %v1757 = vsel %vm1629, -1e+30, %v1240
        %v1758 = vsel %vm1630, -1e+30, %v1241
        %v1759 = vsel %vm1631, -1e+30, %v1242
        %v1760 = vsel %vm1632, -1e+30, %v1243
        %v1761 = vsel %vm1633, -1e+30, %v1244
        %v1762 = vsel %vm1634, -1e+30, %v1245
        %v1763 = vsel %vm1635, -1e+30, %v1246
        %v1764 = vsel %vm1636, -1e+30, %v1247
        %v1765 = vsel %vm1637, -1e+30, %v1248
        %v1766 = vsel %vm1638, -1e+30, %v1249
        %v1767 = vsel %vm1639, -1e+30, %v1250
        %v1768 = vsel %vm1640, -1e+30, %v1251
        %v1769 = vsel %vm1641, -1e+30, %v1252
        %v1770 = vsel %vm1642, -1e+30, %v1253
        %v1771 = vsel %vm1643, -1e+30, %v1254
        %v1772 = vsel %vm1644, -1e+30, %v1255
        %v1773 = vsel %vm1645, -1e+30, %v1256
        %v1774 = vsel %vm1646, -1e+30, %v1257
        %v1775 = vsel %vm1647, -1e+30, %v1258
        %v1776 = vsel %vm1648, -1e+30, %v1259
        %v1777 = vsel %vm1649, -1e+30, %v1260
        %v1778 = vsel %vm1650, -1e+30, %v1261
        %v1779 = vsel %vm1651, -1e+30, %v1262
        %v1780 = vsel %vm1652, -1e+30, %v1263
        %v1781 = vsel %vm1653, -1e+30, %v1264
        %v1782 = vsel %vm1654, -1e+30, %v1265
        %v1783 = vsel %vm1655, -1e+30, %v1266
        %v1784 = vsel %vm1656, -1e+30, %v1267
        %v1785 = vsel %vm1657, -1e+30, %v1268
        %v1786 = vsel %vm1658, -1e+30, %v1269
        %v1787 = vsel %vm1659, -1e+30, %v1270
        %v1788 = vsel %vm1660, -1e+30, %v1271
        %v1789 = vsel %vm1661, -1e+30, %v1272
        %v1790 = vsel %vm1662, -1e+30, %v1273
        %v1791 = vsel %vm1663, -1e+30, %v1274
        %v1792 = vsel %vm1664, -1e+30, %v1275
        %v1793 = vsel %vm1665, -1e+30, %v1276
        %v1794 = vsel %vm1666, -1e+30, %v1277
        %v1795 = vsel %vm1667, -1e+30, %v1278
        %v1796 = vsel %vm1668, -1e+30, %v1279
        %v1797 = vsel %vm1669, -1e+30, %v1280
        %v1798 = vsel %vm1670, -1e+30, %v1281
        %v1799 = vsel %vm1671, -1e+30, %v1282
        %v1800 = vsel %vm1672, -1e+30, %v1283
        %v1801 = vsel %vm1673, -1e+30, %v1284
        %v1802 = vsel %vm1674, -1e+30, %v1285
        %v1803 = vsel %vm1675, -1e+30, %v1286
        %v1804 = vsel %vm1676, -1e+30, %v1287
        %v1805 = vsel %vm1677, -1e+30, %v1288
        %v1806 = vsel %vm1678, -1e+30, %v1289
        %v1807 = vsel %vm1679, -1e+30, %v1290
        %v1808 = vsel %vm1680, -1e+30, %v1291
        %v1809 = vsel %vm1681, -1e+30, %v1292
        %v1810 = vsel %vm1682, -1e+30, %v1293
        %v1811 = vsel %vm1683, -1e+30, %v1294
        %v1812 = vsel %vm1684, -1e+30, %v1295
        %v1813 = vsel %vm1685, -1e+30, %v1296
        %v1814 = vsel %vm1686, -1e+30, %v1297
        %v1815 = vsel %vm1687, -1e+30, %v1298
        %v1816 = vsel %vm1688, -1e+30, %v1299
        %v1817 = vsel %vm1689, -1e+30, %v1300
        %v1818 = vsel %vm1690, -1e+30, %v1301
        %v1819 = vsel %vm1691, -1e+30, %v1302
        %v1820 = vsel %vm1692, -1e+30, %v1303
        %v1821 = vsel %vm1693, -1e+30, %v1304
        %v1822 = vsel %vm1694, -1e+30, %v1305
        %1823 = vset.pattern.permute.xlu0 0
        %1824 = vperm.xlu0 %1823, %v1306
        %v1825 = vpop.permute.xlu0 %1824
        %1826 = vset.pattern.permute.xlu0 0
        %1827 = vperm.xlu0 %1826, %v1307
        %v1828 = vpop.permute.xlu0 %1827
        %1829 = vset.pattern.permute.xlu0 0
        %1830 = vperm.xlu0 %1829, %v1308
        %v1831 = vpop.permute.xlu0 %1830
        %1832 = vset.pattern.permute.xlu0 0
        %1833 = vperm.xlu0 %1832, %v1309
        %v1834 = vpop.permute.xlu0 %1833
        %1835 = vset.pattern.permute.xlu0 0
        %1836 = vperm.xlu0 %1835, %v1310
        %v1837 = vpop.permute.xlu0 %1836
        %1838 = vset.pattern.permute.xlu0 0
        %1839 = vperm.xlu0 %1838, %v1311
        %v1840 = vpop.permute.xlu0 %1839
        %1841 = vset.pattern.permute.xlu0 0
        %1842 = vperm.xlu0 %1841, %v1312
        %v1843 = vpop.permute.xlu0 %1842
        %1844 = vset.pattern.permute.xlu0 0
        %1845 = vperm.xlu0 %1844, %v1313
        %v1846 = vpop.permute.xlu0 %1845
        %1847 = vset.pattern.permute.xlu0 0
        %1848 = vperm.xlu0 %1847, %v1314
        %v1849 = vpop.permute.xlu0 %1848
        %1850 = vset.pattern.permute.xlu0 0
        %1851 = vperm.xlu0 %1850, %v1315
        %v1852 = vpop.permute.xlu0 %1851
        %1853 = vset.pattern.permute.xlu0 0
        %1854 = vperm.xlu0 %1853, %v1316
        %v1855 = vpop.permute.xlu0 %1854
        %1856 = vset.pattern.permute.xlu0 0
        %1857 = vperm.xlu0 %1856, %v1317
        %v1858 = vpop.permute.xlu0 %1857
        %1859 = vset.pattern.permute.xlu0 0
        %1860 = vperm.xlu0 %1859, %v1318
        %v1861 = vpop.permute.xlu0 %1860
        %1862 = vset.pattern.permute.xlu0 0
        %1863 = vperm.xlu0 %1862, %v1319
        %v1864 = vpop.permute.xlu0 %1863
        %1865 = vset.pattern.permute.xlu0 0
        %1866 = vperm.xlu0 %1865, %v1320
        %v1867 = vpop.permute.xlu0 %1866
        %1868 = vset.pattern.permute.xlu0 0
        %1869 = vperm.xlu0 %1868, %v1321
        %v1870 = vpop.permute.xlu0 %1869
        %1871 = vset.pattern.permute.xlu0 0
        %1872 = vperm.xlu0 %1871, %v1322
        %v1873 = vpop.permute.xlu0 %1872
        %1874 = vset.pattern.permute.xlu0 0
        %1875 = vperm.xlu0 %1874, %v1323
        %v1876 = vpop.permute.xlu0 %1875
        %1877 = vset.pattern.permute.xlu0 0
        %1878 = vperm.xlu0 %1877, %v1324
        %v1879 = vpop.permute.xlu0 %1878
        %1880 = vset.pattern.permute.xlu0 0
        %1881 = vperm.xlu0 %1880, %v1325
        %v1882 = vpop.permute.xlu0 %1881
        %1883 = vset.pattern.permute.xlu0 0
        %1884 = vperm.xlu0 %1883, %v1326
        %v1885 = vpop.permute.xlu0 %1884
        %1886 = vset.pattern.permute.xlu0 0
        %1887 = vperm.xlu0 %1886, %v1327
        %v1888 = vpop.permute.xlu0 %1887
        %1889 = vset.pattern.permute.xlu0 0
        %1890 = vperm.xlu0 %1889, %v1328
        %v1891 = vpop.permute.xlu0 %1890
        %1892 = vset.pattern.permute.xlu0 0
        %1893 = vperm.xlu0 %1892, %v1329
        %v1894 = vpop.permute.xlu0 %1893
        %1895 = vset.pattern.permute.xlu0 0
        %1896 = vperm.xlu0 %1895, %v1330
        %v1897 = vpop.permute.xlu0 %1896
        %1898 = vset.pattern.permute.xlu0 0
        %1899 = vperm.xlu0 %1898, %v1331
        %v1900 = vpop.permute.xlu0 %1899
        %1901 = vset.pattern.permute.xlu0 0
        %1902 = vperm.xlu0 %1901, %v1332
        %v1903 = vpop.permute.xlu0 %1902
        %1904 = vset.pattern.permute.xlu0 0
        %1905 = vperm.xlu0 %1904, %v1333
        %v1906 = vpop.permute.xlu0 %1905
        %1907 = vset.pattern.permute.xlu0 0
        %1908 = vperm.xlu0 %1907, %v1334
        %v1909 = vpop.permute.xlu0 %1908
        %1910 = vset.pattern.permute.xlu0 0
        %1911 = vperm.xlu0 %1910, %v1335
        %v1912 = vpop.permute.xlu0 %1911
        %1913 = vset.pattern.permute.xlu0 0
        %1914 = vperm.xlu0 %1913, %v1336
        %v1915 = vpop.permute.xlu0 %1914
        %1916 = vset.pattern.permute.xlu0 0
        %1917 = vperm.xlu0 %1916, %v1337
        %v1918 = vpop.permute.xlu0 %1917
        %v1919 = vlaneseq
        %v1920 = vshrl.u32 %v1919, 7
        %v1921 = vsub.s32 0, %v1920
        %v1922 = vrot.slane %v1338, %v1921
        %v1923 = vlaneseq
        %v1924 = vshrl.u32 %v1923, 7
        %v1925 = vsub.s32 1, %v1924
        %v1926 = vrot.slane %v1338, %v1925
        %v1927 = vlaneseq
        %v1928 = vshrl.u32 %v1927, 7
        %v1929 = vsub.s32 2, %v1928
        %v1930 = vrot.slane %v1338, %v1929
        %v1931 = vlaneseq
        %v1932 = vshrl.u32 %v1931, 7
        %v1933 = vsub.s32 3, %v1932
        %v1934 = vrot.slane %v1338, %v1933
        %vm1935 = vcmp.eq.s32.totalorder %v1825, %v1922
        %vm1936 = vcmp.eq.s32.totalorder %v1825, %v1926
        %vm1937 = vcmp.eq.s32.totalorder %v1825, %v1930
        %vm1938 = vcmp.eq.s32.totalorder %v1825, %v1934
        %vm1939 = vcmp.eq.s32.totalorder %v1828, %v1922
        %vm1940 = vcmp.eq.s32.totalorder %v1828, %v1926
        %vm1941 = vcmp.eq.s32.totalorder %v1828, %v1930
        %vm1942 = vcmp.eq.s32.totalorder %v1828, %v1934
        %vm1943 = vcmp.eq.s32.totalorder %v1831, %v1922
        %vm1944 = vcmp.eq.s32.totalorder %v1831, %v1926
        %vm1945 = vcmp.eq.s32.totalorder %v1831, %v1930
        %vm1946 = vcmp.eq.s32.totalorder %v1831, %v1934
        %vm1947 = vcmp.eq.s32.totalorder %v1834, %v1922
        %vm1948 = vcmp.eq.s32.totalorder %v1834, %v1926
        %vm1949 = vcmp.eq.s32.totalorder %v1834, %v1930
        %vm1950 = vcmp.eq.s32.totalorder %v1834, %v1934
        %vm1951 = vcmp.eq.s32.totalorder %v1837, %v1922
        %vm1952 = vcmp.eq.s32.totalorder %v1837, %v1926
        %vm1953 = vcmp.eq.s32.totalorder %v1837, %v1930
        %vm1954 = vcmp.eq.s32.totalorder %v1837, %v1934
        %vm1955 = vcmp.eq.s32.totalorder %v1840, %v1922
        %vm1956 = vcmp.eq.s32.totalorder %v1840, %v1926
        %vm1957 = vcmp.eq.s32.totalorder %v1840, %v1930
        %vm1958 = vcmp.eq.s32.totalorder %v1840, %v1934
        %vm1959 = vcmp.eq.s32.totalorder %v1843, %v1922
        %vm1960 = vcmp.eq.s32.totalorder %v1843, %v1926
        %vm1961 = vcmp.eq.s32.totalorder %v1843, %v1930
        %vm1962 = vcmp.eq.s32.totalorder %v1843, %v1934
        %vm1963 = vcmp.eq.s32.totalorder %v1846, %v1922
        %vm1964 = vcmp.eq.s32.totalorder %v1846, %v1926
        %vm1965 = vcmp.eq.s32.totalorder %v1846, %v1930
        %vm1966 = vcmp.eq.s32.totalorder %v1846, %v1934
        %vm1967 = vcmp.eq.s32.totalorder %v1849, %v1922
        %vm1968 = vcmp.eq.s32.totalorder %v1849, %v1926
        %vm1969 = vcmp.eq.s32.totalorder %v1849, %v1930
        %vm1970 = vcmp.eq.s32.totalorder %v1849, %v1934
        %vm1971 = vcmp.eq.s32.totalorder %v1852, %v1922
        %vm1972 = vcmp.eq.s32.totalorder %v1852, %v1926
        %vm1973 = vcmp.eq.s32.totalorder %v1852, %v1930
        %vm1974 = vcmp.eq.s32.totalorder %v1852, %v1934
        %vm1975 = vcmp.eq.s32.totalorder %v1855, %v1922
        %vm1976 = vcmp.eq.s32.totalorder %v1855, %v1926
        %vm1977 = vcmp.eq.s32.totalorder %v1855, %v1930
        %vm1978 = vcmp.eq.s32.totalorder %v1855, %v1934
        %vm1979 = vcmp.eq.s32.totalorder %v1858, %v1922
        %vm1980 = vcmp.eq.s32.totalorder %v1858, %v1926
        %vm1981 = vcmp.eq.s32.totalorder %v1858, %v1930
        %vm1982 = vcmp.eq.s32.totalorder %v1858, %v1934
        %vm1983 = vcmp.eq.s32.totalorder %v1861, %v1922
        %vm1984 = vcmp.eq.s32.totalorder %v1861, %v1926
        %vm1985 = vcmp.eq.s32.totalorder %v1861, %v1930
        %vm1986 = vcmp.eq.s32.totalorder %v1861, %v1934
        %vm1987 = vcmp.eq.s32.totalorder %v1864, %v1922
        %vm1988 = vcmp.eq.s32.totalorder %v1864, %v1926
        %vm1989 = vcmp.eq.s32.totalorder %v1864, %v1930
        %vm1990 = vcmp.eq.s32.totalorder %v1864, %v1934
        %vm1991 = vcmp.eq.s32.totalorder %v1867, %v1922
        %vm1992 = vcmp.eq.s32.totalorder %v1867, %v1926
        %vm1993 = vcmp.eq.s32.totalorder %v1867, %v1930
        %vm1994 = vcmp.eq.s32.totalorder %v1867, %v1934
        %vm1995 = vcmp.eq.s32.totalorder %v1870, %v1922
        %vm1996 = vcmp.eq.s32.totalorder %v1870, %v1926
        %vm1997 = vcmp.eq.s32.totalorder %v1870, %v1930
        %vm1998 = vcmp.eq.s32.totalorder %v1870, %v1934
        %vm1999 = vcmp.eq.s32.totalorder %v1873, %v1922
        %vm2000 = vcmp.eq.s32.totalorder %v1873, %v1926
        %vm2001 = vcmp.eq.s32.totalorder %v1873, %v1930
        %vm2002 = vcmp.eq.s32.totalorder %v1873, %v1934
        %vm2003 = vcmp.eq.s32.totalorder %v1876, %v1922
        %vm2004 = vcmp.eq.s32.totalorder %v1876, %v1926
        %vm2005 = vcmp.eq.s32.totalorder %v1876, %v1930
        %vm2006 = vcmp.eq.s32.totalorder %v1876, %v1934
        %vm2007 = vcmp.eq.s32.totalorder %v1879, %v1922
        %vm2008 = vcmp.eq.s32.totalorder %v1879, %v1926
        %vm2009 = vcmp.eq.s32.totalorder %v1879, %v1930
        %vm2010 = vcmp.eq.s32.totalorder %v1879, %v1934
        %vm2011 = vcmp.eq.s32.totalorder %v1882, %v1922
        %vm2012 = vcmp.eq.s32.totalorder %v1882, %v1926
        %vm2013 = vcmp.eq.s32.totalorder %v1882, %v1930
        %vm2014 = vcmp.eq.s32.totalorder %v1882, %v1934
        %vm2015 = vcmp.eq.s32.totalorder %v1885, %v1922
        %vm2016 = vcmp.eq.s32.totalorder %v1885, %v1926
        %vm2017 = vcmp.eq.s32.totalorder %v1885, %v1930
        %vm2018 = vcmp.eq.s32.totalorder %v1885, %v1934
        %vm2019 = vcmp.eq.s32.totalorder %v1888, %v1922
        %vm2020 = vcmp.eq.s32.totalorder %v1888, %v1926
        %vm2021 = vcmp.eq.s32.totalorder %v1888, %v1930
        %vm2022 = vcmp.eq.s32.totalorder %v1888, %v1934
        %vm2023 = vcmp.eq.s32.totalorder %v1891, %v1922
        %vm2024 = vcmp.eq.s32.totalorder %v1891, %v1926
        %vm2025 = vcmp.eq.s32.totalorder %v1891, %v1930
        %vm2026 = vcmp.eq.s32.totalorder %v1891, %v1934
        %vm2027 = vcmp.eq.s32.totalorder %v1894, %v1922
        %vm2028 = vcmp.eq.s32.totalorder %v1894, %v1926
        %vm2029 = vcmp.eq.s32.totalorder %v1894, %v1930
        %vm2030 = vcmp.eq.s32.totalorder %v1894, %v1934
        %vm2031 = vcmp.eq.s32.totalorder %v1897, %v1922
        %vm2032 = vcmp.eq.s32.totalorder %v1897, %v1926
        %vm2033 = vcmp.eq.s32.totalorder %v1897, %v1930
        %vm2034 = vcmp.eq.s32.totalorder %v1897, %v1934
        %vm2035 = vcmp.eq.s32.totalorder %v1900, %v1922
        %vm2036 = vcmp.eq.s32.totalorder %v1900, %v1926
        %vm2037 = vcmp.eq.s32.totalorder %v1900, %v1930
        %vm2038 = vcmp.eq.s32.totalorder %v1900, %v1934
        %vm2039 = vcmp.eq.s32.totalorder %v1903, %v1922
        %vm2040 = vcmp.eq.s32.totalorder %v1903, %v1926
        %vm2041 = vcmp.eq.s32.totalorder %v1903, %v1930
        %vm2042 = vcmp.eq.s32.totalorder %v1903, %v1934
        %vm2043 = vcmp.eq.s32.totalorder %v1906, %v1922
        %vm2044 = vcmp.eq.s32.totalorder %v1906, %v1926
        %vm2045 = vcmp.eq.s32.totalorder %v1906, %v1930
        %vm2046 = vcmp.eq.s32.totalorder %v1906, %v1934
        %vm2047 = vcmp.eq.s32.totalorder %v1909, %v1922
        %vm2048 = vcmp.eq.s32.totalorder %v1909, %v1926
        %vm2049 = vcmp.eq.s32.totalorder %v1909, %v1930
        %vm2050 = vcmp.eq.s32.totalorder %v1909, %v1934
        %vm2051 = vcmp.eq.s32.totalorder %v1912, %v1922
        %vm2052 = vcmp.eq.s32.totalorder %v1912, %v1926
        %vm2053 = vcmp.eq.s32.totalorder %v1912, %v1930
        %vm2054 = vcmp.eq.s32.totalorder %v1912, %v1934
        %vm2055 = vcmp.eq.s32.totalorder %v1915, %v1922
        %vm2056 = vcmp.eq.s32.totalorder %v1915, %v1926
        %vm2057 = vcmp.eq.s32.totalorder %v1915, %v1930
        %vm2058 = vcmp.eq.s32.totalorder %v1915, %v1934
        %vm2059 = vcmp.eq.s32.totalorder %v1918, %v1922
        %vm2060 = vcmp.eq.s32.totalorder %v1918, %v1926
        %vm2061 = vcmp.eq.s32.totalorder %v1918, %v1930
        %vm2062 = vcmp.eq.s32.totalorder %v1918, %v1934
        %vm2063 = vmxor %vm1417, 1
        %vm2064 = vmxor %vm1418, 1
        %vm2065 = vmxor %vm1419, 1
        %vm2066 = vmxor %vm1420, 1
        %vm2067 = vmxor %vm1421, 1
        %vm2068 = vmxor %vm1422, 1
        %vm2069 = vmxor %vm1423, 1
        %vm2070 = vmxor %vm1424, 1
        %vm2071 = vmxor %vm1425, 1
        %vm2072 = vmxor %vm1426, 1
        %vm2073 = vmxor %vm1427, 1
        %vm2074 = vmxor %vm1428, 1
        %vm2075 = vmxor %vm1429, 1
        %vm2076 = vmxor %vm1430, 1
        %vm2077 = vmxor %vm1431, 1
        %vm2078 = vmxor %vm1432, 1
        %vm2079 = vmxor %vm1433, 1
        %vm2080 = vmxor %vm1434, 1
        %vm2081 = vmxor %vm1435, 1
        %vm2082 = vmxor %vm1436, 1
        %vm2083 = vmxor %vm1437, 1
        %vm2084 = vmxor %vm1438, 1
        %vm2085 = vmxor %vm1439, 1
        %vm2086 = vmxor %vm1440, 1
        %vm2087 = vmxor %vm1441, 1
        %vm2088 = vmxor %vm1442, 1
        %vm2089 = vmxor %vm1443, 1
        %vm2090 = vmxor %vm1444, 1
        %vm2091 = vmxor %vm1445, 1
        %vm2092 = vmxor %vm1446, 1
        %vm2093 = vmxor %vm1447, 1
        %vm2094 = vmxor %vm1448, 1
        %vm2095 = vmxor %vm1449, 1
        %vm2096 = vmxor %vm1450, 1
        %vm2097 = vmxor %vm1451, 1
        %vm2098 = vmxor %vm1452, 1
        %vm2099 = vmxor %vm1453, 1
        %vm2100 = vmxor %vm1454, 1
        %vm2101 = vmxor %vm1455, 1
        %vm2102 = vmxor %vm1456, 1
        %vm2103 = vmxor %vm1457, 1
        %vm2104 = vmxor %vm1458, 1
        %vm2105 = vmxor %vm1459, 1
        %vm2106 = vmxor %vm1460, 1
        %vm2107 = vmxor %vm1461, 1
        %vm2108 = vmxor %vm1462, 1
        %vm2109 = vmxor %vm1463, 1
        %vm2110 = vmxor %vm1464, 1
        %vm2111 = vmxor %vm1465, 1
        %vm2112 = vmxor %vm1466, 1
        %vm2113 = vmxor %vm1467, 1
        %vm2114 = vmxor %vm1468, 1
        %vm2115 = vmxor %vm1469, 1
        %vm2116 = vmxor %vm1470, 1
        %vm2117 = vmxor %vm1471, 1
        %vm2118 = vmxor %vm1472, 1
        %vm2119 = vmxor %vm1473, 1
        %vm2120 = vmxor %vm1474, 1
        %vm2121 = vmxor %vm1475, 1
        %vm2122 = vmxor %vm1476, 1
        %vm2123 = vmxor %vm1477, 1
        %vm2124 = vmxor %vm1478, 1
        %vm2125 = vmxor %vm1479, 1
        %vm2126 = vmxor %vm1480, 1
        %vm2127 = vmxor %vm1481, 1
        %vm2128 = vmxor %vm1482, 1
        %vm2129 = vmxor %vm1483, 1
        %vm2130 = vmxor %vm1484, 1
        %vm2131 = vmxor %vm1485, 1
        %vm2132 = vmxor %vm1486, 1
        %vm2133 = vmxor %vm1487, 1
        %vm2134 = vmxor %vm1488, 1
        %vm2135 = vmxor %vm1489, 1
        %vm2136 = vmxor %vm1490, 1
        %vm2137 = vmxor %vm1491, 1
        %vm2138 = vmxor %vm1492, 1
        %vm2139 = vmxor %vm1493, 1
        %vm2140 = vmxor %vm1494, 1
        %vm2141 = vmxor %vm1495, 1
        %vm2142 = vmxor %vm1496, 1
        %vm2143 = vmxor %vm1497, 1
        %vm2144 = vmxor %vm1498, 1
        %vm2145 = vmxor %vm1499, 1
        %vm2146 = vmxor %vm1500, 1
        %vm2147 = vmxor %vm1501, 1
        %vm2148 = vmxor %vm1502, 1
        %vm2149 = vmxor %vm1503, 1
        %vm2150 = vmxor %vm1504, 1
        %vm2151 = vmxor %vm1505, 1
        %vm2152 = vmxor %vm1506, 1
        %vm2153 = vmxor %vm1507, 1
        %vm2154 = vmxor %vm1508, 1
        %vm2155 = vmxor %vm1509, 1
        %vm2156 = vmxor %vm1510, 1
        %vm2157 = vmxor %vm1511, 1
        %vm2158 = vmxor %vm1512, 1
        %vm2159 = vmxor %vm1513, 1
        %vm2160 = vmxor %vm1514, 1
        %vm2161 = vmxor %vm1515, 1
        %vm2162 = vmxor %vm1516, 1
        %vm2163 = vmxor %vm1517, 1
        %vm2164 = vmxor %vm1518, 1
        %vm2165 = vmxor %vm1519, 1
        %vm2166 = vmxor %vm1520, 1
        %vm2167 = vmxor %vm1521, 1
        %vm2168 = vmxor %vm1522, 1
        %vm2169 = vmxor %vm1523, 1
        %vm2170 = vmxor %vm1524, 1
        %vm2171 = vmxor %vm1525, 1
        %vm2172 = vmxor %vm1526, 1
        %vm2173 = vmxor %vm1527, 1
        %vm2174 = vmxor %vm1528, 1
        %vm2175 = vmxor %vm1529, 1
        %vm2176 = vmxor %vm1530, 1
        %vm2177 = vmxor %vm1531, 1
        %vm2178 = vmxor %vm1532, 1
        %vm2179 = vmxor %vm1533, 1
        %vm2180 = vmxor %vm1534, 1
        %vm2181 = vmxor %vm1535, 1
        %vm2182 = vmxor %vm1536, 1
        %vm2183 = vmxor %vm1537, 1
        %vm2184 = vmxor %vm1538, 1
        %vm2185 = vmxor %vm1539, 1
        %vm2186 = vmxor %vm1540, 1
        %vm2187 = vmxor %vm1541, 1
        %vm2188 = vmxor %vm1542, 1
        %vm2189 = vmxor %vm1543, 1
        %vm2190 = vmxor %vm1544, 1
        %vm2191 = vmand %vm1935, %vm2063
        %vm2192 = vmand %vm1936, %vm2064
        %vm2193 = vmand %vm1937, %vm2065
        %vm2194 = vmand %vm1938, %vm2066
        %vm2195 = vmand %vm1939, %vm2067
        %vm2196 = vmand %vm1940, %vm2068
        %vm2197 = vmand %vm1941, %vm2069
        %vm2198 = vmand %vm1942, %vm2070
        %vm2199 = vmand %vm1943, %vm2071
        %vm2200 = vmand %vm1944, %vm2072
        %vm2201 = vmand %vm1945, %vm2073
        %vm2202 = vmand %vm1946, %vm2074
        %vm2203 = vmand %vm1947, %vm2075
        %vm2204 = vmand %vm1948, %vm2076
        %vm2205 = vmand %vm1949, %vm2077
        %vm2206 = vmand %vm1950, %vm2078
        %vm2207 = vmand %vm1951, %vm2079
        %vm2208 = vmand %vm1952, %vm2080
        %vm2209 = vmand %vm1953, %vm2081
        %vm2210 = vmand %vm1954, %vm2082
        %vm2211 = vmand %vm1955, %vm2083
        %vm2212 = vmand %vm1956, %vm2084
        %vm2213 = vmand %vm1957, %vm2085
        %vm2214 = vmand %vm1958, %vm2086
        %vm2215 = vmand %vm1959, %vm2087
        %vm2216 = vmand %vm1960, %vm2088
        %vm2217 = vmand %vm1961, %vm2089
        %vm2218 = vmand %vm1962, %vm2090
        %vm2219 = vmand %vm1963, %vm2091
        %vm2220 = vmand %vm1964, %vm2092
        %vm2221 = vmand %vm1965, %vm2093
        %vm2222 = vmand %vm1966, %vm2094
        %vm2223 = vmand %vm1967, %vm2095
        %vm2224 = vmand %vm1968, %vm2096
        %vm2225 = vmand %vm1969, %vm2097
        %vm2226 = vmand %vm1970, %vm2098
        %vm2227 = vmand %vm1971, %vm2099
        %vm2228 = vmand %vm1972, %vm2100
        %vm2229 = vmand %vm1973, %vm2101
        %vm2230 = vmand %vm1974, %vm2102
        %vm2231 = vmand %vm1975, %vm2103
        %vm2232 = vmand %vm1976, %vm2104
        %vm2233 = vmand %vm1977, %vm2105
        %vm2234 = vmand %vm1978, %vm2106
        %vm2235 = vmand %vm1979, %vm2107
        %vm2236 = vmand %vm1980, %vm2108
        %vm2237 = vmand %vm1981, %vm2109
        %vm2238 = vmand %vm1982, %vm2110
        %vm2239 = vmand %vm1983, %vm2111
        %vm2240 = vmand %vm1984, %vm2112
        %vm2241 = vmand %vm1985, %vm2113
        %vm2242 = vmand %vm1986, %vm2114
        %vm2243 = vmand %vm1987, %vm2115
        %vm2244 = vmand %vm1988, %vm2116
        %vm2245 = vmand %vm1989, %vm2117
        %vm2246 = vmand %vm1990, %vm2118
        %vm2247 = vmand %vm1991, %vm2119
        %vm2248 = vmand %vm1992, %vm2120
        %vm2249 = vmand %vm1993, %vm2121
        %vm2250 = vmand %vm1994, %vm2122
        %vm2251 = vmand %vm1995, %vm2123
        %vm2252 = vmand %vm1996, %vm2124
        %vm2253 = vmand %vm1997, %vm2125
        %vm2254 = vmand %vm1998, %vm2126
        %vm2255 = vmand %vm1999, %vm2127
        %vm2256 = vmand %vm2000, %vm2128
        %vm2257 = vmand %vm2001, %vm2129
        %vm2258 = vmand %vm2002, %vm2130
        %vm2259 = vmand %vm2003, %vm2131
        %vm2260 = vmand %vm2004, %vm2132
        %vm2261 = vmand %vm2005, %vm2133
        %vm2262 = vmand %vm2006, %vm2134
        %vm2263 = vmand %vm2007, %vm2135
        %vm2264 = vmand %vm2008, %vm2136
        %vm2265 = vmand %vm2009, %vm2137
        %vm2266 = vmand %vm2010, %vm2138
        %vm2267 = vmand %vm2011, %vm2139
        %vm2268 = vmand %vm2012, %vm2140
        %vm2269 = vmand %vm2013, %vm2141
        %vm2270 = vmand %vm2014, %vm2142
        %vm2271 = vmand %vm2015, %vm2143
        %vm2272 = vmand %vm2016, %vm2144
        %vm2273 = vmand %vm2017, %vm2145
        %vm2274 = vmand %vm2018, %vm2146
        %vm2275 = vmand %vm2019, %vm2147
        %vm2276 = vmand %vm2020, %vm2148
        %vm2277 = vmand %vm2021, %vm2149
        %vm2278 = vmand %vm2022, %vm2150
        %vm2279 = vmand %vm2023, %vm2151
        %vm2280 = vmand %vm2024, %vm2152
        %vm2281 = vmand %vm2025, %vm2153
        %vm2282 = vmand %vm2026, %vm2154
        %vm2283 = vmand %vm2027, %vm2155
        %vm2284 = vmand %vm2028, %vm2156
        %vm2285 = vmand %vm2029, %vm2157
        %vm2286 = vmand %vm2030, %vm2158
        %vm2287 = vmand %vm2031, %vm2159
        %vm2288 = vmand %vm2032, %vm2160
        %vm2289 = vmand %vm2033, %vm2161
        %vm2290 = vmand %vm2034, %vm2162
        %vm2291 = vmand %vm2035, %vm2163
        %vm2292 = vmand %vm2036, %vm2164
        %vm2293 = vmand %vm2037, %vm2165
        %vm2294 = vmand %vm2038, %vm2166
        %vm2295 = vmand %vm2039, %vm2167
        %vm2296 = vmand %vm2040, %vm2168
        %vm2297 = vmand %vm2041, %vm2169
        %vm2298 = vmand %vm2042, %vm2170
        %vm2299 = vmand %vm2043, %vm2171
        %vm2300 = vmand %vm2044, %vm2172
        %vm2301 = vmand %vm2045, %vm2173
        %vm2302 = vmand %vm2046, %vm2174
        %vm2303 = vmand %vm2047, %vm2175
        %vm2304 = vmand %vm2048, %vm2176
        %vm2305 = vmand %vm2049, %vm2177
        %vm2306 = vmand %vm2050, %vm2178
        %vm2307 = vmand %vm2051, %vm2179
        %vm2308 = vmand %vm2052, %vm2180
        %vm2309 = vmand %vm2053, %vm2181
        %vm2310 = vmand %vm2054, %vm2182
        %vm2311 = vmand %vm2055, %vm2183
        %vm2312 = vmand %vm2056, %vm2184
        %vm2313 = vmand %vm2057, %vm2185
        %vm2314 = vmand %vm2058, %vm2186
        %vm2315 = vmand %vm2059, %vm2187
        %vm2316 = vmand %vm2060, %vm2188
        %vm2317 = vmand %vm2061, %vm2189
        %vm2318 = vmand %vm2062, %vm2190
        %v2319 = vsel %vm2191, 1, 0
        %v2320 = vsel %vm2192, 1, 0
        %v2321 = vsel %vm2193, 1, 0
        %v2322 = vsel %vm2194, 1, 0
        %v2323 = vsel %vm2195, 1, 0
        %v2324 = vsel %vm2196, 1, 0
        %v2325 = vsel %vm2197, 1, 0
        %v2326 = vsel %vm2198, 1, 0
        %v2327 = vsel %vm2199, 1, 0
        %v2328 = vsel %vm2200, 1, 0
        %v2329 = vsel %vm2201, 1, 0
        %v2330 = vsel %vm2202, 1, 0
        %v2331 = vsel %vm2203, 1, 0
        %v2332 = vsel %vm2204, 1, 0
        %v2333 = vsel %vm2205, 1, 0
        %v2334 = vsel %vm2206, 1, 0
        %v2335 = vsel %vm2207, 1, 0
        %v2336 = vsel %vm2208, 1, 0
        %v2337 = vsel %vm2209, 1, 0
        %v2338 = vsel %vm2210, 1, 0
        %v2339 = vsel %vm2211, 1, 0
        %v2340 = vsel %vm2212, 1, 0
        %v2341 = vsel %vm2213, 1, 0
        %v2342 = vsel %vm2214, 1, 0
        %v2343 = vsel %vm2215, 1, 0
        %v2344 = vsel %vm2216, 1, 0
        %v2345 = vsel %vm2217, 1, 0
        %v2346 = vsel %vm2218, 1, 0
        %v2347 = vsel %vm2219, 1, 0
        %v2348 = vsel %vm2220, 1, 0
        %v2349 = vsel %vm2221, 1, 0
        %v2350 = vsel %vm2222, 1, 0
        %v2351 = vsel %vm2223, 1, 0
        %v2352 = vsel %vm2224, 1, 0
        %v2353 = vsel %vm2225, 1, 0
        %v2354 = vsel %vm2226, 1, 0
        %v2355 = vsel %vm2227, 1, 0
        %v2356 = vsel %vm2228, 1, 0
        %v2357 = vsel %vm2229, 1, 0
        %v2358 = vsel %vm2230, 1, 0
        %v2359 = vsel %vm2231, 1, 0
        %v2360 = vsel %vm2232, 1, 0
        %v2361 = vsel %vm2233, 1, 0
        %v2362 = vsel %vm2234, 1, 0
        %v2363 = vsel %vm2235, 1, 0
        %v2364 = vsel %vm2236, 1, 0
        %v2365 = vsel %vm2237, 1, 0
        %v2366 = vsel %vm2238, 1, 0
        %v2367 = vsel %vm2239, 1, 0
        %v2368 = vsel %vm2240, 1, 0
        %v2369 = vsel %vm2241, 1, 0
        %v2370 = vsel %vm2242, 1, 0
        %v2371 = vsel %vm2243, 1, 0
        %v2372 = vsel %vm2244, 1, 0
        %v2373 = vsel %vm2245, 1, 0
        %v2374 = vsel %vm2246, 1, 0
        %v2375 = vsel %vm2247, 1, 0
        %v2376 = vsel %vm2248, 1, 0
        %v2377 = vsel %vm2249, 1, 0
        %v2378 = vsel %vm2250, 1, 0
        %v2379 = vsel %vm2251, 1, 0
        %v2380 = vsel %vm2252, 1, 0
        %v2381 = vsel %vm2253, 1, 0
        %v2382 = vsel %vm2254, 1, 0
        %v2383 = vsel %vm2255, 1, 0
        %v2384 = vsel %vm2256, 1, 0
        %v2385 = vsel %vm2257, 1, 0
        %v2386 = vsel %vm2258, 1, 0
        %v2387 = vsel %vm2259, 1, 0
        %v2388 = vsel %vm2260, 1, 0
        %v2389 = vsel %vm2261, 1, 0
        %v2390 = vsel %vm2262, 1, 0
        %v2391 = vsel %vm2263, 1, 0
        %v2392 = vsel %vm2264, 1, 0
        %v2393 = vsel %vm2265, 1, 0
        %v2394 = vsel %vm2266, 1, 0
        %v2395 = vsel %vm2267, 1, 0
        %v2396 = vsel %vm2268, 1, 0
        %v2397 = vsel %vm2269, 1, 0
        %v2398 = vsel %vm2270, 1, 0
        %v2399 = vsel %vm2271, 1, 0
        %v2400 = vsel %vm2272, 1, 0
        %v2401 = vsel %vm2273, 1, 0
        %v2402 = vsel %vm2274, 1, 0
        %v2403 = vsel %vm2275, 1, 0
        %v2404 = vsel %vm2276, 1, 0
        %v2405 = vsel %vm2277, 1, 0
        %v2406 = vsel %vm2278, 1, 0
        %v2407 = vsel %vm2279, 1, 0
        %v2408 = vsel %vm2280, 1, 0
        %v2409 = vsel %vm2281, 1, 0
        %v2410 = vsel %vm2282, 1, 0
        %v2411 = vsel %vm2283, 1, 0
        %v2412 = vsel %vm2284, 1, 0
        %v2413 = vsel %vm2285, 1, 0
        %v2414 = vsel %vm2286, 1, 0
        %v2415 = vsel %vm2287, 1, 0
        %v2416 = vsel %vm2288, 1, 0
        %v2417 = vsel %vm2289, 1, 0
        %v2418 = vsel %vm2290, 1, 0
        %v2419 = vsel %vm2291, 1, 0
        %v2420 = vsel %vm2292, 1, 0
        %v2421 = vsel %vm2293, 1, 0
        %v2422 = vsel %vm2294, 1, 0
        %v2423 = vsel %vm2295, 1, 0
        %v2424 = vsel %vm2296, 1, 0
        %v2425 = vsel %vm2297, 1, 0
        %v2426 = vsel %vm2298, 1, 0
        %v2427 = vsel %vm2299, 1, 0
        %v2428 = vsel %vm2300, 1, 0
        %v2429 = vsel %vm2301, 1, 0
        %v2430 = vsel %vm2302, 1, 0
        %v2431 = vsel %vm2303, 1, 0
        %v2432 = vsel %vm2304, 1, 0
        %v2433 = vsel %vm2305, 1, 0
        %v2434 = vsel %vm2306, 1, 0
        %v2435 = vsel %vm2307, 1, 0
        %v2436 = vsel %vm2308, 1, 0
        %v2437 = vsel %vm2309, 1, 0
        %v2438 = vsel %vm2310, 1, 0
        %v2439 = vsel %vm2311, 1, 0
        %v2440 = vsel %vm2312, 1, 0
        %v2441 = vsel %vm2313, 1, 0
        %v2442 = vsel %vm2314, 1, 0
        %v2443 = vsel %vm2315, 1, 0
        %v2444 = vsel %vm2316, 1, 0
        %v2445 = vsel %vm2317, 1, 0
        %v2446 = vsel %vm2318, 1, 0
        %v2447 = vcvt.s32.f32 %v2319
        %v2448 = vcvt.s32.f32 %v2320
        %v2449 = vcvt.s32.f32 %v2321
        %v2450 = vcvt.s32.f32 %v2322
        %v2451 = vcvt.s32.f32 %v2323
        %v2452 = vcvt.s32.f32 %v2324
        %v2453 = vcvt.s32.f32 %v2325
        %v2454 = vcvt.s32.f32 %v2326
        %v2455 = vcvt.s32.f32 %v2327
        %v2456 = vcvt.s32.f32 %v2328
        %v2457 = vcvt.s32.f32 %v2329
        %v2458 = vcvt.s32.f32 %v2330
        %v2459 = vcvt.s32.f32 %v2331
        %v2460 = vcvt.s32.f32 %v2332
        %v2461 = vcvt.s32.f32 %v2333
        %v2462 = vcvt.s32.f32 %v2334
        %v2463 = vcvt.s32.f32 %v2335
        %v2464 = vcvt.s32.f32 %v2336
        %v2465 = vcvt.s32.f32 %v2337
        %v2466 = vcvt.s32.f32 %v2338
        %v2467 = vcvt.s32.f32 %v2339
        %v2468 = vcvt.s32.f32 %v2340
        %v2469 = vcvt.s32.f32 %v2341
        %v2470 = vcvt.s32.f32 %v2342
        %v2471 = vcvt.s32.f32 %v2343
        %v2472 = vcvt.s32.f32 %v2344
        %v2473 = vcvt.s32.f32 %v2345
        %v2474 = vcvt.s32.f32 %v2346
        %v2475 = vcvt.s32.f32 %v2347
        %v2476 = vcvt.s32.f32 %v2348
        %v2477 = vcvt.s32.f32 %v2349
        %v2478 = vcvt.s32.f32 %v2350
        %v2479 = vcvt.s32.f32 %v2351
        %v2480 = vcvt.s32.f32 %v2352
        %v2481 = vcvt.s32.f32 %v2353
        %v2482 = vcvt.s32.f32 %v2354
        %v2483 = vcvt.s32.f32 %v2355
        %v2484 = vcvt.s32.f32 %v2356
        %v2485 = vcvt.s32.f32 %v2357
        %v2486 = vcvt.s32.f32 %v2358
        %v2487 = vcvt.s32.f32 %v2359
        %v2488 = vcvt.s32.f32 %v2360
        %v2489 = vcvt.s32.f32 %v2361
        %v2490 = vcvt.s32.f32 %v2362
        %v2491 = vcvt.s32.f32 %v2363
        %v2492 = vcvt.s32.f32 %v2364
        %v2493 = vcvt.s32.f32 %v2365
        %v2494 = vcvt.s32.f32 %v2366
        %v2495 = vcvt.s32.f32 %v2367
        %v2496 = vcvt.s32.f32 %v2368
        %v2497 = vcvt.s32.f32 %v2369
        %v2498 = vcvt.s32.f32 %v2370
        %v2499 = vcvt.s32.f32 %v2371
        %v2500 = vcvt.s32.f32 %v2372
        %v2501 = vcvt.s32.f32 %v2373
        %v2502 = vcvt.s32.f32 %v2374
        %v2503 = vcvt.s32.f32 %v2375
        %v2504 = vcvt.s32.f32 %v2376
        %v2505 = vcvt.s32.f32 %v2377
        %v2506 = vcvt.s32.f32 %v2378
        %v2507 = vcvt.s32.f32 %v2379
        %v2508 = vcvt.s32.f32 %v2380
        %v2509 = vcvt.s32.f32 %v2381
        %v2510 = vcvt.s32.f32 %v2382
        %v2511 = vcvt.s32.f32 %v2383
        %v2512 = vcvt.s32.f32 %v2384
        %v2513 = vcvt.s32.f32 %v2385
        %v2514 = vcvt.s32.f32 %v2386
        %v2515 = vcvt.s32.f32 %v2387
        %v2516 = vcvt.s32.f32 %v2388
        %v2517 = vcvt.s32.f32 %v2389
        %v2518 = vcvt.s32.f32 %v2390
        %v2519 = vcvt.s32.f32 %v2391
        %v2520 = vcvt.s32.f32 %v2392
        %v2521 = vcvt.s32.f32 %v2393
        %v2522 = vcvt.s32.f32 %v2394
        %v2523 = vcvt.s32.f32 %v2395
        %v2524 = vcvt.s32.f32 %v2396
        %v2525 = vcvt.s32.f32 %v2397
        %v2526 = vcvt.s32.f32 %v2398
        %v2527 = vcvt.s32.f32 %v2399
        %v2528 = vcvt.s32.f32 %v2400
        %v2529 = vcvt.s32.f32 %v2401
        %v2530 = vcvt.s32.f32 %v2402
        %v2531 = vcvt.s32.f32 %v2403
        %v2532 = vcvt.s32.f32 %v2404
        %v2533 = vcvt.s32.f32 %v2405
        %v2534 = vcvt.s32.f32 %v2406
        %v2535 = vcvt.s32.f32 %v2407
        %v2536 = vcvt.s32.f32 %v2408
        %v2537 = vcvt.s32.f32 %v2409
        %v2538 = vcvt.s32.f32 %v2410
        %v2539 = vcvt.s32.f32 %v2411
        %v2540 = vcvt.s32.f32 %v2412
        %v2541 = vcvt.s32.f32 %v2413
        %v2542 = vcvt.s32.f32 %v2414
        %v2543 = vcvt.s32.f32 %v2415
        %v2544 = vcvt.s32.f32 %v2416
        %v2545 = vcvt.s32.f32 %v2417
        %v2546 = vcvt.s32.f32 %v2418
        %v2547 = vcvt.s32.f32 %v2419
        %v2548 = vcvt.s32.f32 %v2420
        %v2549 = vcvt.s32.f32 %v2421
        %v2550 = vcvt.s32.f32 %v2422
        %v2551 = vcvt.s32.f32 %v2423
        %v2552 = vcvt.s32.f32 %v2424
        %v2553 = vcvt.s32.f32 %v2425
        %v2554 = vcvt.s32.f32 %v2426
        %v2555 = vcvt.s32.f32 %v2427
        %v2556 = vcvt.s32.f32 %v2428
        %v2557 = vcvt.s32.f32 %v2429
        %v2558 = vcvt.s32.f32 %v2430
        %v2559 = vcvt.s32.f32 %v2431
        %v2560 = vcvt.s32.f32 %v2432
        %v2561 = vcvt.s32.f32 %v2433
        %v2562 = vcvt.s32.f32 %v2434
        %v2563 = vcvt.s32.f32 %v2435
        %v2564 = vcvt.s32.f32 %v2436
        %v2565 = vcvt.s32.f32 %v2437
        %v2566 = vcvt.s32.f32 %v2438
        %v2567 = vcvt.s32.f32 %v2439
        %v2568 = vcvt.s32.f32 %v2440
        %v2569 = vcvt.s32.f32 %v2441
        %v2570 = vcvt.s32.f32 %v2442
        %v2571 = vcvt.s32.f32 %v2443
        %v2572 = vcvt.s32.f32 %v2444
        %v2573 = vcvt.s32.f32 %v2445
        %v2574 = vcvt.s32.f32 %v2446
        %v2575 = vld [vmem:[#allocation4] sm:$0xff]
        %v2576 = vld [vmem:[#allocation4 + $0x8] sm:$0xff]
        %v2577 = vld [vmem:[#allocation4 + $0x10] sm:$0xff]
        %v2578 = vld [vmem:[#allocation4 + $0x18] sm:$0xff]
        %v2579 = vld [vmem:[#allocation4 + $0x20] sm:$0xff]
        %v2580 = vld [vmem:[#allocation4 + $0x28] sm:$0xff]
        %v2581 = vld [vmem:[#allocation4 + $0x30] sm:$0xff]
        %v2582 = vld [vmem:[#allocation4 + $0x38] sm:$0xff]
        %v2583 = vld [vmem:[#allocation4 + $0x40] sm:$0xff]
        %v2584 = vld [vmem:[#allocation4 + $0x48] sm:$0xff]
        %v2585 = vld [vmem:[#allocation4 + $0x50] sm:$0xff]
        %v2586 = vld [vmem:[#allocation4 + $0x58] sm:$0xff]
        %v2587 = vld [vmem:[#allocation4 + $0x60] sm:$0xff]
        %v2588 = vld [vmem:[#allocation4 + $0x68] sm:$0xff]
        %v2589 = vld [vmem:[#allocation4 + $0x70] sm:$0xff]
        %v2590 = vld [vmem:[#allocation4 + $0x78] sm:$0xff]
        %v2591 = vld [vmem:[#allocation4 + $0x80] sm:$0xff]
        %v2592 = vld [vmem:[#allocation4 + $0x88] sm:$0xff]
        %v2593 = vld [vmem:[#allocation4 + $0x90] sm:$0xff]
        %v2594 = vld [vmem:[#allocation4 + $0x98] sm:$0xff]
        %v2595 = vld [vmem:[#allocation4 + $0xa0] sm:$0xff]
        %v2596 = vld [vmem:[#allocation4 + $0xa8] sm:$0xff]
        %v2597 = vld [vmem:[#allocation4 + $0xb0] sm:$0xff]
        %v2598 = vld [vmem:[#allocation4 + $0xb8] sm:$0xff]
        %v2599 = vld [vmem:[#allocation4 + $0xc0] sm:$0xff]
        %v2600 = vld [vmem:[#allocation4 + $0xc8] sm:$0xff]
        %v2601 = vld [vmem:[#allocation4 + $0xd0] sm:$0xff]
        %v2602 = vld [vmem:[#allocation4 + $0xd8] sm:$0xff]
        %v2603 = vld [vmem:[#allocation4 + $0xe0] sm:$0xff]
        %v2604 = vld [vmem:[#allocation4 + $0xe8] sm:$0xff]
        %v2605 = vld [vmem:[#allocation4 + $0xf0] sm:$0xff]
        %v2606 = vld [vmem:[#allocation4 + $0xf8] sm:$0xff]
        %v2607 = vmul.f32 %v2447, %v1695
        %v2608 = vmul.f32 %v2448, %v1696
        %v2609 = vmul.f32 %v2449, %v1697
        %v2610 = vmul.f32 %v2450, %v1698
        %v2611 = vmul.f32 %v2451, %v1699
        %v2612 = vmul.f32 %v2452, %v1700
        %v2613 = vmul.f32 %v2453, %v1701
        %v2614 = vmul.f32 %v2454, %v1702
        %v2615 = vmul.f32 %v2455, %v1703
        %v2616 = vmul.f32 %v2456, %v1704
        %v2617 = vmul.f32 %v2457, %v1705
        %v2618 = vmul.f32 %v2458, %v1706
        %v2619 = vmul.f32 %v2459, %v1707
        %v2620 = vmul.f32 %v2460, %v1708
        %v2621 = vmul.f32 %v2461, %v1709
        %v2622 = vmul.f32 %v2462, %v1710
        %v2623 = vmul.f32 %v2463, %v1711
        %v2624 = vmul.f32 %v2464, %v1712
        %v2625 = vmul.f32 %v2465, %v1713
        %v2626 = vmul.f32 %v2466, %v1714
        %v2627 = vmul.f32 %v2467, %v1715
        %v2628 = vmul.f32 %v2468, %v1716
        %v2629 = vmul.f32 %v2469, %v1717
        %v2630 = vmul.f32 %v2470, %v1718
        %v2631 = vmul.f32 %v2471, %v1719
        %v2632 = vmul.f32 %v2472, %v1720
        %v2633 = vmul.f32 %v2473, %v1721
        %v2634 = vmul.f32 %v2474, %v1722
        %v2635 = vmul.f32 %v2475, %v1723
        %v2636 = vmul.f32 %v2476, %v1724
        %v2637 = vmul.f32 %v2477, %v1725
        %v2638 = vmul.f32 %v2478, %v1726
        %v2639 = vmul.f32 %v2479, %v1727
        %v2640 = vmul.f32 %v2480, %v1728
        %v2641 = vmul.f32 %v2481, %v1729
        %v2642 = vmul.f32 %v2482, %v1730
        %v2643 = vmul.f32 %v2483, %v1731
        %v2644 = vmul.f32 %v2484, %v1732
        %v2645 = vmul.f32 %v2485, %v1733
        %v2646 = vmul.f32 %v2486, %v1734
        %v2647 = vmul.f32 %v2487, %v1735
        %v2648 = vmul.f32 %v2488, %v1736
        %v2649 = vmul.f32 %v2489, %v1737
        %v2650 = vmul.f32 %v2490, %v1738
        %v2651 = vmul.f32 %v2491, %v1739
        %v2652 = vmul.f32 %v2492, %v1740
        %v2653 = vmul.f32 %v2493, %v1741
        %v2654 = vmul.f32 %v2494, %v1742
        %v2655 = vmul.f32 %v2495, %v1743
        %v2656 = vmul.f32 %v2496, %v1744
        %v2657 = vmul.f32 %v2497, %v1745
        %v2658 = vmul.f32 %v2498, %v1746
        %v2659 = vmul.f32 %v2499, %v1747
        %v2660 = vmul.f32 %v2500, %v1748
        %v2661 = vmul.f32 %v2501, %v1749
        %v2662 = vmul.f32 %v2502, %v1750
        %v2663 = vmul.f32 %v2503, %v1751
        %v2664 = vmul.f32 %v2504, %v1752
        %v2665 = vmul.f32 %v2505, %v1753
        %v2666 = vmul.f32 %v2506, %v1754
        %v2667 = vmul.f32 %v2507, %v1755
        %v2668 = vmul.f32 %v2508, %v1756
        %v2669 = vmul.f32 %v2509, %v1757
        %v2670 = vmul.f32 %v2510, %v1758
        %v2671 = vmul.f32 %v2511, %v1759
        %v2672 = vmul.f32 %v2512, %v1760
        %v2673 = vmul.f32 %v2513, %v1761
        %v2674 = vmul.f32 %v2514, %v1762
        %v2675 = vmul.f32 %v2515, %v1763
        %v2676 = vmul.f32 %v2516, %v1764
        %v2677 = vmul.f32 %v2517, %v1765
        %v2678 = vmul.f32 %v2518, %v1766
        %v2679 = vmul.f32 %v2519, %v1767
        %v2680 = vmul.f32 %v2520, %v1768
        %v2681 = vmul.f32 %v2521, %v1769
        %v2682 = vmul.f32 %v2522, %v1770
        %v2683 = vmul.f32 %v2523, %v1771
        %v2684 = vmul.f32 %v2524, %v1772
        %v2685 = vmul.f32 %v2525, %v1773
        %v2686 = vmul.f32 %v2526, %v1774
        %v2687 = vmul.f32 %v2527, %v1775
        %v2688 = vmul.f32 %v2528, %v1776
        %v2689 = vmul.f32 %v2529, %v1777
        %v2690 = vmul.f32 %v2530, %v1778
        %v2691 = vmul.f32 %v2531, %v1779
        %v2692 = vmul.f32 %v2532, %v1780
        %v2693 = vmul.f32 %v2533, %v1781
        %v2694 = vmul.f32 %v2534, %v1782
        %v2695 = vmul.f32 %v2535, %v1783
        %v2696 = vmul.f32 %v2536, %v1784
        %v2697 = vmul.f32 %v2537, %v1785
        %v2698 = vmul.f32 %v2538, %v1786
        %v2699 = vmul.f32 %v2539, %v1787
        %v2700 = vmul.f32 %v2540, %v1788
        %v2701 = vmul.f32 %v2541, %v1789
        %v2702 = vmul.f32 %v2542, %v1790
        %v2703 = vmul.f32 %v2543, %v1791
        %v2704 = vmul.f32 %v2544, %v1792
        %v2705 = vmul.f32 %v2545, %v1793
        %v2706 = vmul.f32 %v2546, %v1794
        %v2707 = vmul.f32 %v2547, %v1795
        %v2708 = vmul.f32 %v2548, %v1796
        %v2709 = vmul.f32 %v2549, %v1797
        %v2710 = vmul.f32 %v2550, %v1798
        %v2711 = vmul.f32 %v2551, %v1799
        %v2712 = vmul.f32 %v2552, %v1800
        %v2713 = vmul.f32 %v2553, %v1801
        %v2714 = vmul.f32 %v2554, %v1802
        %v2715 = vmul.f32 %v2555, %v1803
        %v2716 = vmul.f32 %v2556, %v1804
        %v2717 = vmul.f32 %v2557, %v1805
        %v2718 = vmul.f32 %v2558, %v1806
        %v2719 = vmul.f32 %v2559, %v1807
        %v2720 = vmul.f32 %v2560, %v1808
        %v2721 = vmul.f32 %v2561, %v1809
        %v2722 = vmul.f32 %v2562, %v1810
        %v2723 = vmul.f32 %v2563, %v1811
        %v2724 = vmul.f32 %v2564, %v1812
        %v2725 = vmul.f32 %v2565, %v1813
        %v2726 = vmul.f32 %v2566, %v1814
        %v2727 = vmul.f32 %v2567, %v1815
        %v2728 = vmul.f32 %v2568, %v1816
        %v2729 = vmul.f32 %v2569, %v1817
        %v2730 = vmul.f32 %v2570, %v1818
        %v2731 = vmul.f32 %v2571, %v1819
        %v2732 = vmul.f32 %v2572, %v1820
        %v2733 = vmul.f32 %v2573, %v1821
        %v2734 = vmul.f32 %v2574, %v1822
        %v2735 = vadd.f32 %v2607, %v2608
        %v2736 = vadd.f32 %v2735, %v2609
        %v2737 = vadd.f32 %v2736, %v2610
        %2738 = vadd.xlane.f32.xlu0 %v2737
        %v2739 = vpop.xlane.xlu0 %2738
        %v2740 = vadd.f32 %v2611, %v2612
        %v2741 = vadd.f32 %v2740, %v2613
        %v2742 = vadd.f32 %v2741, %v2614
        %2743 = vadd.xlane.f32.xlu0 %v2742
        %v2744 = vpop.xlane.xlu0 %2743
        %v2745 = vadd.f32 %v2615, %v2616
        %v2746 = vadd.f32 %v2745, %v2617
        %v2747 = vadd.f32 %v2746, %v2618
        %2748 = vadd.xlane.f32.xlu0 %v2747
        %v2749 = vpop.xlane.xlu0 %2748
        %v2750 = vadd.f32 %v2619, %v2620
        %v2751 = vadd.f32 %v2750, %v2621
        %v2752 = vadd.f32 %v2751, %v2622
        %2753 = vadd.xlane.f32.xlu0 %v2752
        %v2754 = vpop.xlane.xlu0 %2753
        %v2755 = vadd.f32 %v2623, %v2624
        %v2756 = vadd.f32 %v2755, %v2625
        %v2757 = vadd.f32 %v2756, %v2626
        %2758 = vadd.xlane.f32.xlu0 %v2757
        %v2759 = vpop.xlane.xlu0 %2758
        %v2760 = vadd.f32 %v2627, %v2628
        %v2761 = vadd.f32 %v2760, %v2629
        %v2762 = vadd.f32 %v2761, %v2630
        %2763 = vadd.xlane.f32.xlu0 %v2762
        %v2764 = vpop.xlane.xlu0 %2763
        %v2765 = vadd.f32 %v2631, %v2632
        %v2766 = vadd.f32 %v2765, %v2633
        %v2767 = vadd.f32 %v2766, %v2634
        %2768 = vadd.xlane.f32.xlu0 %v2767
        %v2769 = vpop.xlane.xlu0 %2768
        %v2770 = vadd.f32 %v2635, %v2636
        %v2771 = vadd.f32 %v2770, %v2637
        %v2772 = vadd.f32 %v2771, %v2638
        %2773 = vadd.xlane.f32.xlu0 %v2772
        %v2774 = vpop.xlane.xlu0 %2773
        %v2775 = vadd.f32 %v2639, %v2640
        %v2776 = vadd.f32 %v2775, %v2641
        %v2777 = vadd.f32 %v2776, %v2642
        %2778 = vadd.xlane.f32.xlu0 %v2777
        %v2779 = vpop.xlane.xlu0 %2778
        %v2780 = vadd.f32 %v2643, %v2644
        %v2781 = vadd.f32 %v2780, %v2645
        %v2782 = vadd.f32 %v2781, %v2646
        %2783 = vadd.xlane.f32.xlu0 %v2782
        %v2784 = vpop.xlane.xlu0 %2783
        %v2785 = vadd.f32 %v2647, %v2648
        %v2786 = vadd.f32 %v2785, %v2649
        %v2787 = vadd.f32 %v2786, %v2650
        %2788 = vadd.xlane.f32.xlu0 %v2787
        %v2789 = vpop.xlane.xlu0 %2788
        %v2790 = vadd.f32 %v2651, %v2652
        %v2791 = vadd.f32 %v2790, %v2653
        %v2792 = vadd.f32 %v2791, %v2654
        %2793 = vadd.xlane.f32.xlu0 %v2792
        %v2794 = vpop.xlane.xlu0 %2793
        %v2795 = vadd.f32 %v2655, %v2656
        %v2796 = vadd.f32 %v2795, %v2657
        %v2797 = vadd.f32 %v2796, %v2658
        %2798 = vadd.xlane.f32.xlu0 %v2797
        %v2799 = vpop.xlane.xlu0 %2798
        %v2800 = vadd.f32 %v2659, %v2660
        %v2801 = vadd.f32 %v2800, %v2661
        %v2802 = vadd.f32 %v2801, %v2662
        %2803 = vadd.xlane.f32.xlu0 %v2802
        %v2804 = vpop.xlane.xlu0 %2803
        %v2805 = vadd.f32 %v2663, %v2664
        %v2806 = vadd.f32 %v2805, %v2665
        %v2807 = vadd.f32 %v2806, %v2666
        %2808 = vadd.xlane.f32.xlu0 %v2807
        %v2809 = vpop.xlane.xlu0 %2808
        %v2810 = vadd.f32 %v2667, %v2668
        %v2811 = vadd.f32 %v2810, %v2669
        %v2812 = vadd.f32 %v2811, %v2670
        %2813 = vadd.xlane.f32.xlu0 %v2812
        %v2814 = vpop.xlane.xlu0 %2813
        %v2815 = vadd.f32 %v2671, %v2672
        %v2816 = vadd.f32 %v2815, %v2673
        %v2817 = vadd.f32 %v2816, %v2674
        %2818 = vadd.xlane.f32.xlu0 %v2817
        %v2819 = vpop.xlane.xlu0 %2818
        %v2820 = vadd.f32 %v2675, %v2676
        %v2821 = vadd.f32 %v2820, %v2677
        %v2822 = vadd.f32 %v2821, %v2678
        %2823 = vadd.xlane.f32.xlu0 %v2822
        %v2824 = vpop.xlane.xlu0 %2823
        %v2825 = vadd.f32 %v2679, %v2680
        %v2826 = vadd.f32 %v2825, %v2681
        %v2827 = vadd.f32 %v2826, %v2682
        %2828 = vadd.xlane.f32.xlu0 %v2827
        %v2829 = vpop.xlane.xlu0 %2828
        %v2830 = vadd.f32 %v2683, %v2684
        %v2831 = vadd.f32 %v2830, %v2685
        %v2832 = vadd.f32 %v2831, %v2686
        %2833 = vadd.xlane.f32.xlu0 %v2832
        %v2834 = vpop.xlane.xlu0 %2833
        %v2835 = vadd.f32 %v2687, %v2688
        %v2836 = vadd.f32 %v2835, %v2689
        %v2837 = vadd.f32 %v2836, %v2690
        %2838 = vadd.xlane.f32.xlu0 %v2837
        %v2839 = vpop.xlane.xlu0 %2838
        %v2840 = vadd.f32 %v2691, %v2692
        %v2841 = vadd.f32 %v2840, %v2693
        %v2842 = vadd.f32 %v2841, %v2694
        %2843 = vadd.xlane.f32.xlu0 %v2842
        %v2844 = vpop.xlane.xlu0 %2843
        %v2845 = vadd.f32 %v2695, %v2696
        %v2846 = vadd.f32 %v2845, %v2697
        %v2847 = vadd.f32 %v2846, %v2698
        %2848 = vadd.xlane.f32.xlu0 %v2847
        %v2849 = vpop.xlane.xlu0 %2848
        %v2850 = vadd.f32 %v2699, %v2700
        %v2851 = vadd.f32 %v2850, %v2701
        %v2852 = vadd.f32 %v2851, %v2702
        %2853 = vadd.xlane.f32.xlu0 %v2852
        %v2854 = vpop.xlane.xlu0 %2853
        %v2855 = vadd.f32 %v2703, %v2704
        %v2856 = vadd.f32 %v2855, %v2705
        %v2857 = vadd.f32 %v2856, %v2706
        %2858 = vadd.xlane.f32.xlu0 %v2857
        %v2859 = vpop.xlane.xlu0 %2858
        %v2860 = vadd.f32 %v2707, %v2708
        %v2861 = vadd.f32 %v2860, %v2709
        %v2862 = vadd.f32 %v2861, %v2710
        %2863 = vadd.xlane.f32.xlu0 %v2862
        %v2864 = vpop.xlane.xlu0 %2863
        %v2865 = vadd.f32 %v2711, %v2712
        %v2866 = vadd.f32 %v2865, %v2713
        %v2867 = vadd.f32 %v2866, %v2714
        %2868 = vadd.xlane.f32.xlu0 %v2867
        %v2869 = vpop.xlane.xlu0 %2868
        %v2870 = vadd.f32 %v2715, %v2716
        %v2871 = vadd.f32 %v2870, %v2717
        %v2872 = vadd.f32 %v2871, %v2718
        %2873 = vadd.xlane.f32.xlu0 %v2872
        %v2874 = vpop.xlane.xlu0 %2873
        %v2875 = vadd.f32 %v2719, %v2720
        %v2876 = vadd.f32 %v2875, %v2721
        %v2877 = vadd.f32 %v2876, %v2722
        %2878 = vadd.xlane.f32.xlu0 %v2877
        %v2879 = vpop.xlane.xlu0 %2878
        %v2880 = vadd.f32 %v2723, %v2724
        %v2881 = vadd.f32 %v2880, %v2725
        %v2882 = vadd.f32 %v2881, %v2726
        %2883 = vadd.xlane.f32.xlu0 %v2882
        %v2884 = vpop.xlane.xlu0 %2883
        %v2885 = vadd.f32 %v2727, %v2728
        %v2886 = vadd.f32 %v2885, %v2729
        %v2887 = vadd.f32 %v2886, %v2730
        %2888 = vadd.xlane.f32.xlu0 %v2887
        %v2889 = vpop.xlane.xlu0 %2888
        %v2890 = vadd.f32 %v2731, %v2732
        %v2891 = vadd.f32 %v2890, %v2733
        %v2892 = vadd.f32 %v2891, %v2734
        %2893 = vadd.xlane.f32.xlu0 %v2892
        %v2894 = vpop.xlane.xlu0 %2893
        %v2895 = vadd.f32 %v2575, %v2739
        %v2896 = vadd.f32 %v2576, %v2744
        %v2897 = vadd.f32 %v2577, %v2749
        %v2898 = vadd.f32 %v2578, %v2754
        %v2899 = vadd.f32 %v2579, %v2759
        %v2900 = vadd.f32 %v2580, %v2764
        %v2901 = vadd.f32 %v2581, %v2769
        %v2902 = vadd.f32 %v2582, %v2774
        %v2903 = vadd.f32 %v2583, %v2779
        %v2904 = vadd.f32 %v2584, %v2784
        %v2905 = vadd.f32 %v2585, %v2789
        %v2906 = vadd.f32 %v2586, %v2794
        %v2907 = vadd.f32 %v2587, %v2799
        %v2908 = vadd.f32 %v2588, %v2804
        %v2909 = vadd.f32 %v2589, %v2809
        %v2910 = vadd.f32 %v2590, %v2814
        %v2911 = vadd.f32 %v2591, %v2819
        %v2912 = vadd.f32 %v2592, %v2824
        %v2913 = vadd.f32 %v2593, %v2829
        %v2914 = vadd.f32 %v2594, %v2834
        %v2915 = vadd.f32 %v2595, %v2839
        %v2916 = vadd.f32 %v2596, %v2844
        %v2917 = vadd.f32 %v2597, %v2849
        %v2918 = vadd.f32 %v2598, %v2854
        %v2919 = vadd.f32 %v2599, %v2859
        %v2920 = vadd.f32 %v2600, %v2864
        %v2921 = vadd.f32 %v2601, %v2869
        %v2922 = vadd.f32 %v2602, %v2874
        %v2923 = vadd.f32 %v2603, %v2879
        %v2924 = vadd.f32 %v2604, %v2884
        %v2925 = vadd.f32 %v2605, %v2889
        %v2926 = vadd.f32 %v2606, %v2894
        %vm2927 = vcmask 7168
        %2928 = vst.msk [vmem:[#allocation4] sm:$0xff] %vm2927, %v2895
        %2929 = vst.msk [vmem:[#allocation4 + $0x8] sm:$0xff] %vm2927, %v2896
        %2930 = vst.msk [vmem:[#allocation4 + $0x10] sm:$0xff] %vm2927, %v2897
        %2931 = vst.msk [vmem:[#allocation4 + $0x18] sm:$0xff] %vm2927, %v2898
        %2932 = vst.msk [vmem:[#allocation4 + $0x20] sm:$0xff] %vm2927, %v2899
        %2933 = vst.msk [vmem:[#allocation4 + $0x28] sm:$0xff] %vm2927, %v2900
        %2934 = vst.msk [vmem:[#allocation4 + $0x30] sm:$0xff] %vm2927, %v2901
        %2935 = vst.msk [vmem:[#allocation4 + $0x38] sm:$0xff] %vm2927, %v2902
        %2936 = vst.msk [vmem:[#allocation4 + $0x40] sm:$0xff] %vm2927, %v2903
        %2937 = vst.msk [vmem:[#allocation4 + $0x48] sm:$0xff] %vm2927, %v2904
        %2938 = vst.msk [vmem:[#allocation4 + $0x50] sm:$0xff] %vm2927, %v2905
        %2939 = vst.msk [vmem:[#allocation4 + $0x58] sm:$0xff] %vm2927, %v2906
        %2940 = vst.msk [vmem:[#allocation4 + $0x60] sm:$0xff] %vm2927, %v2907
        %2941 = vst.msk [vmem:[#allocation4 + $0x68] sm:$0xff] %vm2927, %v2908
        %2942 = vst.msk [vmem:[#allocation4 + $0x70] sm:$0xff] %vm2927, %v2909
        %2943 = vst.msk [vmem:[#allocation4 + $0x78] sm:$0xff] %vm2927, %v2910
        %2944 = vst.msk [vmem:[#allocation4 + $0x80] sm:$0xff] %vm2927, %v2911
        %2945 = vst.msk [vmem:[#allocation4 + $0x88] sm:$0xff] %vm2927, %v2912
        %2946 = vst.msk [vmem:[#allocation4 + $0x90] sm:$0xff] %vm2927, %v2913
        %2947 = vst.msk [vmem:[#allocation4 + $0x98] sm:$0xff] %vm2927, %v2914
        %2948 = vst.msk [vmem:[#allocation4 + $0xa0] sm:$0xff] %vm2927, %v2915
        %2949 = vst.msk [vmem:[#allocation4 + $0xa8] sm:$0xff] %vm2927, %v2916
        %2950 = vst.msk [vmem:[#allocation4 + $0xb0] sm:$0xff] %vm2927, %v2917
        %2951 = vst.msk [vmem:[#allocation4 + $0xb8] sm:$0xff] %vm2927, %v2918
        %2952 = vst.msk [vmem:[#allocation4 + $0xc0] sm:$0xff] %vm2927, %v2919
        %2953 = vst.msk [vmem:[#allocation4 + $0xc8] sm:$0xff] %vm2927, %v2920
        %2954 = vst.msk [vmem:[#allocation4 + $0xd0] sm:$0xff] %vm2927, %v2921
        %2955 = vst.msk [vmem:[#allocation4 + $0xd8] sm:$0xff] %vm2927, %v2922
        %2956 = vst.msk [vmem:[#allocation4 + $0xe0] sm:$0xff] %vm2927, %v2923
        %2957 = vst.msk [vmem:[#allocation4 + $0xe8] sm:$0xff] %vm2927, %v2924
        %2958 = vst.msk [vmem:[#allocation4 + $0xf0] sm:$0xff] %vm2927, %v2925
        %2959 = vst.msk [vmem:[#allocation4 + $0xf8] sm:$0xff] %vm2927, %v2926
        %v2960 = vld [vmem:[#allocation5] sm:$0xff]
        %v2961 = vld [vmem:[#allocation5 + $0x8] sm:$0xff]
        %v2962 = vld [vmem:[#allocation5 + $0x10] sm:$0xff]
        %v2963 = vld [vmem:[#allocation5 + $0x18] sm:$0xff]
        %v2964 = vld [vmem:[#allocation5 + $0x20] sm:$0xff]
        %v2965 = vld [vmem:[#allocation5 + $0x28] sm:$0xff]
        %v2966 = vld [vmem:[#allocation5 + $0x30] sm:$0xff]
        %v2967 = vld [vmem:[#allocation5 + $0x38] sm:$0xff]
        %v2968 = vld [vmem:[#allocation5 + $0x40] sm:$0xff]
        %v2969 = vld [vmem:[#allocation5 + $0x48] sm:$0xff]
        %v2970 = vld [vmem:[#allocation5 + $0x50] sm:$0xff]
        %v2971 = vld [vmem:[#allocation5 + $0x58] sm:$0xff]
        %v2972 = vld [vmem:[#allocation5 + $0x60] sm:$0xff]
        %v2973 = vld [vmem:[#allocation5 + $0x68] sm:$0xff]
        %v2974 = vld [vmem:[#allocation5 + $0x70] sm:$0xff]
        %v2975 = vld [vmem:[#allocation5 + $0x78] sm:$0xff]
        %v2976 = vld [vmem:[#allocation5 + $0x80] sm:$0xff]
        %v2977 = vld [vmem:[#allocation5 + $0x88] sm:$0xff]
        %v2978 = vld [vmem:[#allocation5 + $0x90] sm:$0xff]
        %v2979 = vld [vmem:[#allocation5 + $0x98] sm:$0xff]
        %v2980 = vld [vmem:[#allocation5 + $0xa0] sm:$0xff]
        %v2981 = vld [vmem:[#allocation5 + $0xa8] sm:$0xff]
        %v2982 = vld [vmem:[#allocation5 + $0xb0] sm:$0xff]
        %v2983 = vld [vmem:[#allocation5 + $0xb8] sm:$0xff]
        %v2984 = vld [vmem:[#allocation5 + $0xc0] sm:$0xff]
        %v2985 = vld [vmem:[#allocation5 + $0xc8] sm:$0xff]
        %v2986 = vld [vmem:[#allocation5 + $0xd0] sm:$0xff]
        %v2987 = vld [vmem:[#allocation5 + $0xd8] sm:$0xff]
        %v2988 = vld [vmem:[#allocation5 + $0xe0] sm:$0xff]
        %v2989 = vld [vmem:[#allocation5 + $0xe8] sm:$0xff]
        %v2990 = vld [vmem:[#allocation5 + $0xf0] sm:$0xff]
        %v2991 = vld [vmem:[#allocation5 + $0xf8] sm:$0xff]
        %v2992 = vadd.f32 %v2447, %v2448
        %v2993 = vadd.f32 %v2992, %v2449
        %v2994 = vadd.f32 %v2993, %v2450
        %2995 = vadd.xlane.f32.xlu0 %v2994
        %v2996 = vpop.xlane.xlu0 %2995
        %v2997 = vadd.f32 %v2451, %v2452
        %v2998 = vadd.f32 %v2997, %v2453
        %v2999 = vadd.f32 %v2998, %v2454
        %3000 = vadd.xlane.f32.xlu0 %v2999
        %v3001 = vpop.xlane.xlu0 %3000
        %v3002 = vadd.f32 %v2455, %v2456
        %v3003 = vadd.f32 %v3002, %v2457
        %v3004 = vadd.f32 %v3003, %v2458
        %3005 = vadd.xlane.f32.xlu0 %v3004
        %v3006 = vpop.xlane.xlu0 %3005
        %v3007 = vadd.f32 %v2459, %v2460
        %v3008 = vadd.f32 %v3007, %v2461
        %v3009 = vadd.f32 %v3008, %v2462
        %3010 = vadd.xlane.f32.xlu0 %v3009
        %v3011 = vpop.xlane.xlu0 %3010
        %v3012 = vadd.f32 %v2463, %v2464
        %v3013 = vadd.f32 %v3012, %v2465
        %v3014 = vadd.f32 %v3013, %v2466
        %3015 = vadd.xlane.f32.xlu0 %v3014
        %v3016 = vpop.xlane.xlu0 %3015
        %v3017 = vadd.f32 %v2467, %v2468
        %v3018 = vadd.f32 %v3017, %v2469
        %v3019 = vadd.f32 %v3018, %v2470
        %3020 = vadd.xlane.f32.xlu0 %v3019
        %v3021 = vpop.xlane.xlu0 %3020
        %v3022 = vadd.f32 %v2471, %v2472
        %v3023 = vadd.f32 %v3022, %v2473
        %v3024 = vadd.f32 %v3023, %v2474
        %3025 = vadd.xlane.f32.xlu0 %v3024
        %v3026 = vpop.xlane.xlu0 %3025
        %v3027 = vadd.f32 %v2475, %v2476
        %v3028 = vadd.f32 %v3027, %v2477
        %v3029 = vadd.f32 %v3028, %v2478
        %3030 = vadd.xlane.f32.xlu0 %v3029
        %v3031 = vpop.xlane.xlu0 %3030
        %v3032 = vadd.f32 %v2479, %v2480
        %v3033 = vadd.f32 %v3032, %v2481
        %v3034 = vadd.f32 %v3033, %v2482
        %3035 = vadd.xlane.f32.xlu0 %v3034
        %v3036 = vpop.xlane.xlu0 %3035
        %v3037 = vadd.f32 %v2483, %v2484
        %v3038 = vadd.f32 %v3037, %v2485
        %v3039 = vadd.f32 %v3038, %v2486
        %3040 = vadd.xlane.f32.xlu0 %v3039
        %v3041 = vpop.xlane.xlu0 %3040
        %v3042 = vadd.f32 %v2487, %v2488
        %v3043 = vadd.f32 %v3042, %v2489
        %v3044 = vadd.f32 %v3043, %v2490
        %3045 = vadd.xlane.f32.xlu0 %v3044
        %v3046 = vpop.xlane.xlu0 %3045
        %v3047 = vadd.f32 %v2491, %v2492
        %v3048 = vadd.f32 %v3047, %v2493
        %v3049 = vadd.f32 %v3048, %v2494
        %3050 = vadd.xlane.f32.xlu0 %v3049
        %v3051 = vpop.xlane.xlu0 %3050
        %v3052 = vadd.f32 %v2495, %v2496
        %v3053 = vadd.f32 %v3052, %v2497
        %v3054 = vadd.f32 %v3053, %v2498
        %3055 = vadd.xlane.f32.xlu0 %v3054
        %v3056 = vpop.xlane.xlu0 %3055
        %v3057 = vadd.f32 %v2499, %v2500
        %v3058 = vadd.f32 %v3057, %v2501
        %v3059 = vadd.f32 %v3058, %v2502
        %3060 = vadd.xlane.f32.xlu0 %v3059
        %v3061 = vpop.xlane.xlu0 %3060
        %v3062 = vadd.f32 %v2503, %v2504
        %v3063 = vadd.f32 %v3062, %v2505
        %v3064 = vadd.f32 %v3063, %v2506
        %3065 = vadd.xlane.f32.xlu0 %v3064
        %v3066 = vpop.xlane.xlu0 %3065
        %v3067 = vadd.f32 %v2507, %v2508
        %v3068 = vadd.f32 %v3067, %v2509
        %v3069 = vadd.f32 %v3068, %v2510
        %3070 = vadd.xlane.f32.xlu0 %v3069
        %v3071 = vpop.xlane.xlu0 %3070
        %v3072 = vadd.f32 %v2511, %v2512
        %v3073 = vadd.f32 %v3072, %v2513
        %v3074 = vadd.f32 %v3073, %v2514
        %3075 = vadd.xlane.f32.xlu0 %v3074
        %v3076 = vpop.xlane.xlu0 %3075
        %v3077 = vadd.f32 %v2515, %v2516
        %v3078 = vadd.f32 %v3077, %v2517
        %v3079 = vadd.f32 %v3078, %v2518
        %3080 = vadd.xlane.f32.xlu0 %v3079
        %v3081 = vpop.xlane.xlu0 %3080
        %v3082 = vadd.f32 %v2519, %v2520
        %v3083 = vadd.f32 %v3082, %v2521
        %v3084 = vadd.f32 %v3083, %v2522
        %3085 = vadd.xlane.f32.xlu0 %v3084
        %v3086 = vpop.xlane.xlu0 %3085
        %v3087 = vadd.f32 %v2523, %v2524
        %v3088 = vadd.f32 %v3087, %v2525
        %v3089 = vadd.f32 %v3088, %v2526
        %3090 = vadd.xlane.f32.xlu0 %v3089
        %v3091 = vpop.xlane.xlu0 %3090
        %v3092 = vadd.f32 %v2527, %v2528
        %v3093 = vadd.f32 %v3092, %v2529
        %v3094 = vadd.f32 %v3093, %v2530
        %3095 = vadd.xlane.f32.xlu0 %v3094
        %v3096 = vpop.xlane.xlu0 %3095
        %v3097 = vadd.f32 %v2531, %v2532
        %v3098 = vadd.f32 %v3097, %v2533
        %v3099 = vadd.f32 %v3098, %v2534
        %3100 = vadd.xlane.f32.xlu0 %v3099
        %v3101 = vpop.xlane.xlu0 %3100
        %v3102 = vadd.f32 %v2535, %v2536
        %v3103 = vadd.f32 %v3102, %v2537
        %v3104 = vadd.f32 %v3103, %v2538
        %3105 = vadd.xlane.f32.xlu0 %v3104
        %v3106 = vpop.xlane.xlu0 %3105
        %v3107 = vadd.f32 %v2539, %v2540
        %v3108 = vadd.f32 %v3107, %v2541
        %v3109 = vadd.f32 %v3108, %v2542
        %3110 = vadd.xlane.f32.xlu0 %v3109
        %v3111 = vpop.xlane.xlu0 %3110
        %v3112 = vadd.f32 %v2543, %v2544
        %v3113 = vadd.f32 %v3112, %v2545
        %v3114 = vadd.f32 %v3113, %v2546
        %3115 = vadd.xlane.f32.xlu0 %v3114
        %v3116 = vpop.xlane.xlu0 %3115
        %v3117 = vadd.f32 %v2547, %v2548
        %v3118 = vadd.f32 %v3117, %v2549
        %v3119 = vadd.f32 %v3118, %v2550
        %3120 = vadd.xlane.f32.xlu0 %v3119
        %v3121 = vpop.xlane.xlu0 %3120
        %v3122 = vadd.f32 %v2551, %v2552
        %v3123 = vadd.f32 %v3122, %v2553
        %v3124 = vadd.f32 %v3123, %v2554
        %3125 = vadd.xlane.f32.xlu0 %v3124
        %v3126 = vpop.xlane.xlu0 %3125
        %v3127 = vadd.f32 %v2555, %v2556
        %v3128 = vadd.f32 %v3127, %v2557
        %v3129 = vadd.f32 %v3128, %v2558
        %3130 = vadd.xlane.f32.xlu0 %v3129
        %v3131 = vpop.xlane.xlu0 %3130
        %v3132 = vadd.f32 %v2559, %v2560
        %v3133 = vadd.f32 %v3132, %v2561
        %v3134 = vadd.f32 %v3133, %v2562
        %3135 = vadd.xlane.f32.xlu0 %v3134
        %v3136 = vpop.xlane.xlu0 %3135
        %v3137 = vadd.f32 %v2563, %v2564
        %v3138 = vadd.f32 %v3137, %v2565
        %v3139 = vadd.f32 %v3138, %v2566
        %3140 = vadd.xlane.f32.xlu0 %v3139
        %v3141 = vpop.xlane.xlu0 %3140
        %v3142 = vadd.f32 %v2567, %v2568
        %v3143 = vadd.f32 %v3142, %v2569
        %v3144 = vadd.f32 %v3143, %v2570
        %3145 = vadd.xlane.f32.xlu0 %v3144
        %v3146 = vpop.xlane.xlu0 %3145
        %v3147 = vadd.f32 %v2571, %v2572
        %v3148 = vadd.f32 %v3147, %v2573
        %v3149 = vadd.f32 %v3148, %v2574
        %3150 = vadd.xlane.f32.xlu0 %v3149
        %v3151 = vpop.xlane.xlu0 %3150
        %v3152 = vadd.f32 %v2960, %v2996
        %v3153 = vadd.f32 %v2961, %v3001
        %v3154 = vadd.f32 %v2962, %v3006
        %v3155 = vadd.f32 %v2963, %v3011
        %v3156 = vadd.f32 %v2964, %v3016
        %v3157 = vadd.f32 %v2965, %v3021
        %v3158 = vadd.f32 %v2966, %v3026
        %v3159 = vadd.f32 %v2967, %v3031
        %v3160 = vadd.f32 %v2968, %v3036
        %v3161 = vadd.f32 %v2969, %v3041
        %v3162 = vadd.f32 %v2970, %v3046
        %v3163 = vadd.f32 %v2971, %v3051
        %v3164 = vadd.f32 %v2972, %v3056
        %v3165 = vadd.f32 %v2973, %v3061
        %v3166 = vadd.f32 %v2974, %v3066
        %v3167 = vadd.f32 %v2975, %v3071
        %v3168 = vadd.f32 %v2976, %v3076
        %v3169 = vadd.f32 %v2977, %v3081
        %v3170 = vadd.f32 %v2978, %v3086
        %v3171 = vadd.f32 %v2979, %v3091
        %v3172 = vadd.f32 %v2980, %v3096
        %v3173 = vadd.f32 %v2981, %v3101
        %v3174 = vadd.f32 %v2982, %v3106
        %v3175 = vadd.f32 %v2983, %v3111
        %v3176 = vadd.f32 %v2984, %v3116
        %v3177 = vadd.f32 %v2985, %v3121
        %v3178 = vadd.f32 %v2986, %v3126
        %v3179 = vadd.f32 %v2987, %v3131
        %v3180 = vadd.f32 %v2988, %v3136
        %v3181 = vadd.f32 %v2989, %v3141
        %v3182 = vadd.f32 %v2990, %v3146
        %v3183 = vadd.f32 %v2991, %v3151
        %3184 = vst.msk [vmem:[#allocation5] sm:$0xff] %vm2927, %v3152
        %3185 = vst.msk [vmem:[#allocation5 + $0x8] sm:$0xff] %vm2927, %v3153
        %3186 = vst.msk [vmem:[#allocation5 + $0x10] sm:$0xff] %vm2927, %v3154
        %3187 = vst.msk [vmem:[#allocation5 + $0x18] sm:$0xff] %vm2927, %v3155
        %3188 = vst.msk [vmem:[#allocation5 + $0x20] sm:$0xff] %vm2927, %v3156
        %3189 = vst.msk [vmem:[#allocation5 + $0x28] sm:$0xff] %vm2927, %v3157
        %3190 = vst.msk [vmem:[#allocation5 + $0x30] sm:$0xff] %vm2927, %v3158
        %3191 = vst.msk [vmem:[#allocation5 + $0x38] sm:$0xff] %vm2927, %v3159
        %3192 = vst.msk [vmem:[#allocation5 + $0x40] sm:$0xff] %vm2927, %v3160
        %3193 = vst.msk [vmem:[#allocation5 + $0x48] sm:$0xff] %vm2927, %v3161
        %3194 = vst.msk [vmem:[#allocation5 + $0x50] sm:$0xff] %vm2927, %v3162
        %3195 = vst.msk [vmem:[#allocation5 + $0x58] sm:$0xff] %vm2927, %v3163
        %3196 = vst.msk [vmem:[#allocation5 + $0x60] sm:$0xff] %vm2927, %v3164
        %3197 = vst.msk [vmem:[#allocation5 + $0x68] sm:$0xff] %vm2927, %v3165
        %3198 = vst.msk [vmem:[#allocation5 + $0x70] sm:$0xff] %vm2927, %v3166
        %3199 = vst.msk [vmem:[#allocation5 + $0x78] sm:$0xff] %vm2927, %v3167
        %3200 = vst.msk [vmem:[#allocation5 + $0x80] sm:$0xff] %vm2927, %v3168
        %3201 = vst.msk [vmem:[#allocation5 + $0x88] sm:$0xff] %vm2927, %v3169
        %3202 = vst.msk [vmem:[#allocation5 + $0x90] sm:$0xff] %vm2927, %v3170
        %3203 = vst.msk [vmem:[#allocation5 + $0x98] sm:$0xff] %vm2927, %v3171
        %3204 = vst.msk [vmem:[#allocation5 + $0xa0] sm:$0xff] %vm2927, %v3172
        %3205 = vst.msk [vmem:[#allocation5 + $0xa8] sm:$0xff] %vm2927, %v3173
        %3206 = vst.msk [vmem:[#allocation5 + $0xb0] sm:$0xff] %vm2927, %v3174
        %3207 = vst.msk [vmem:[#allocation5 + $0xb8] sm:$0xff] %vm2927, %v3175
        %3208 = vst.msk [vmem:[#allocation5 + $0xc0] sm:$0xff] %vm2927, %v3176
        %3209 = vst.msk [vmem:[#allocation5 + $0xc8] sm:$0xff] %vm2927, %v3177
        %3210 = vst.msk [vmem:[#allocation5 + $0xd0] sm:$0xff] %vm2927, %v3178
        %3211 = vst.msk [vmem:[#allocation5 + $0xd8] sm:$0xff] %vm2927, %v3179
        %3212 = vst.msk [vmem:[#allocation5 + $0xe0] sm:$0xff] %vm2927, %v3180
        %3213 = vst.msk [vmem:[#allocation5 + $0xe8] sm:$0xff] %vm2927, %v3181
        %3214 = vst.msk [vmem:[#allocation5 + $0xf0] sm:$0xff] %vm2927, %v3182
        %3215 = vst.msk [vmem:[#allocation5 + $0xf8] sm:$0xff] %vm2927, %v3183
        %v3216 = vld [vmem:[#allocation2] sm:$0xff]
        %v3217 = vld [vmem:[#allocation2 + $0x8] sm:$0xff]
        %v3218 = vld [vmem:[#allocation2 + $0x10] sm:$0xff]
        %v3219 = vld [vmem:[#allocation2 + $0x18] sm:$0xff]
        %v3220 = vld [vmem:[#allocation2 + $0x20] sm:$0xff]
        %v3221 = vld [vmem:[#allocation2 + $0x28] sm:$0xff]
        %v3222 = vld [vmem:[#allocation2 + $0x30] sm:$0xff]
        %v3223 = vld [vmem:[#allocation2 + $0x38] sm:$0xff]
        %v3224 = vld [vmem:[#allocation2 + $0x40] sm:$0xff]
        %v3225 = vld [vmem:[#allocation2 + $0x48] sm:$0xff]
        %v3226 = vld [vmem:[#allocation2 + $0x50] sm:$0xff]
        %v3227 = vld [vmem:[#allocation2 + $0x58] sm:$0xff]
        %v3228 = vld [vmem:[#allocation2 + $0x60] sm:$0xff]
        %v3229 = vld [vmem:[#allocation2 + $0x68] sm:$0xff]
        %v3230 = vld [vmem:[#allocation2 + $0x70] sm:$0xff]
        %v3231 = vld [vmem:[#allocation2 + $0x78] sm:$0xff]
        %v3232 = vld [vmem:[#allocation2 + $0x80] sm:$0xff]
        %v3233 = vld [vmem:[#allocation2 + $0x88] sm:$0xff]
        %v3234 = vld [vmem:[#allocation2 + $0x90] sm:$0xff]
        %v3235 = vld [vmem:[#allocation2 + $0x98] sm:$0xff]
        %v3236 = vld [vmem:[#allocation2 + $0xa0] sm:$0xff]
        %v3237 = vld [vmem:[#allocation2 + $0xa8] sm:$0xff]
        %v3238 = vld [vmem:[#allocation2 + $0xb0] sm:$0xff]
        %v3239 = vld [vmem:[#allocation2 + $0xb8] sm:$0xff]
        %v3240 = vld [vmem:[#allocation2 + $0xc0] sm:$0xff]
        %v3241 = vld [vmem:[#allocation2 + $0xc8] sm:$0xff]
        %v3242 = vld [vmem:[#allocation2 + $0xd0] sm:$0xff]
        %v3243 = vld [vmem:[#allocation2 + $0xd8] sm:$0xff]
        %v3244 = vld [vmem:[#allocation2 + $0xe0] sm:$0xff]
        %v3245 = vld [vmem:[#allocation2 + $0xe8] sm:$0xff]
        %v3246 = vld [vmem:[#allocation2 + $0xf0] sm:$0xff]
        %v3247 = vld [vmem:[#allocation2 + $0xf8] sm:$0xff]
        %v3248 = vmax.f32 %v1695, %v1696
        %v3249 = vmax.f32 %v3248, %v1697
        %v3250 = vmax.f32 %v3249, %v1698
        %3251 = vmax.xlane.f32.xlu0 %v3250
        %v3252 = vpop.xlane.xlu0 %3251
        %v3253 = vmax.f32 %v1699, %v1700
        %v3254 = vmax.f32 %v3253, %v1701
        %v3255 = vmax.f32 %v3254, %v1702
        %3256 = vmax.xlane.f32.xlu0 %v3255
        %v3257 = vpop.xlane.xlu0 %3256
        %v3258 = vmax.f32 %v1703, %v1704
        %v3259 = vmax.f32 %v3258, %v1705
        %v3260 = vmax.f32 %v3259, %v1706
        %3261 = vmax.xlane.f32.xlu0 %v3260
        %v3262 = vpop.xlane.xlu0 %3261
        %v3263 = vmax.f32 %v1707, %v1708
        %v3264 = vmax.f32 %v3263, %v1709
        %v3265 = vmax.f32 %v3264, %v1710
        %3266 = vmax.xlane.f32.xlu0 %v3265
        %v3267 = vpop.xlane.xlu0 %3266
        %v3268 = vmax.f32 %v1711, %v1712
        %v3269 = vmax.f32 %v3268, %v1713
        %v3270 = vmax.f32 %v3269, %v1714
        %3271 = vmax.xlane.f32.xlu0 %v3270
        %v3272 = vpop.xlane.xlu0 %3271
        %v3273 = vmax.f32 %v1715, %v1716
        %v3274 = vmax.f32 %v3273, %v1717
        %v3275 = vmax.f32 %v3274, %v1718
        %3276 = vmax.xlane.f32.xlu0 %v3275
        %v3277 = vpop.xlane.xlu0 %3276
        %v3278 = vmax.f32 %v1719, %v1720
        %v3279 = vmax.f32 %v3278, %v1721
        %v3280 = vmax.f32 %v3279, %v1722
        %3281 = vmax.xlane.f32.xlu0 %v3280
        %v3282 = vpop.xlane.xlu0 %3281
        %v3283 = vmax.f32 %v1723, %v1724
        %v3284 = vmax.f32 %v3283, %v1725
        %v3285 = vmax.f32 %v3284, %v1726
        %3286 = vmax.xlane.f32.xlu0 %v3285
        %v3287 = vpop.xlane.xlu0 %3286
        %v3288 = vmax.f32 %v1727, %v1728
        %v3289 = vmax.f32 %v3288, %v1729
        %v3290 = vmax.f32 %v3289, %v1730
        %3291 = vmax.xlane.f32.xlu0 %v3290
        %v3292 = vpop.xlane.xlu0 %3291
        %v3293 = vmax.f32 %v1731, %v1732
        %v3294 = vmax.f32 %v3293, %v1733
        %v3295 = vmax.f32 %v3294, %v1734
        %3296 = vmax.xlane.f32.xlu0 %v3295
        %v3297 = vpop.xlane.xlu0 %3296
        %v3298 = vmax.f32 %v1735, %v1736
        %v3299 = vmax.f32 %v3298, %v1737
        %v3300 = vmax.f32 %v3299, %v1738
        %3301 = vmax.xlane.f32.xlu0 %v3300
        %v3302 = vpop.xlane.xlu0 %3301
        %v3303 = vmax.f32 %v1739, %v1740
        %v3304 = vmax.f32 %v3303, %v1741
        %v3305 = vmax.f32 %v3304, %v1742
        %3306 = vmax.xlane.f32.xlu0 %v3305
        %v3307 = vpop.xlane.xlu0 %3306
        %v3308 = vmax.f32 %v1743, %v1744
        %v3309 = vmax.f32 %v3308, %v1745
        %v3310 = vmax.f32 %v3309, %v1746
        %3311 = vmax.xlane.f32.xlu0 %v3310
        %v3312 = vpop.xlane.xlu0 %3311
        %v3313 = vmax.f32 %v1747, %v1748
        %v3314 = vmax.f32 %v3313, %v1749
        %v3315 = vmax.f32 %v3314, %v1750
        %3316 = vmax.xlane.f32.xlu0 %v3315
        %v3317 = vpop.xlane.xlu0 %3316
        %v3318 = vmax.f32 %v1751, %v1752
        %v3319 = vmax.f32 %v3318, %v1753
        %v3320 = vmax.f32 %v3319, %v1754
        %3321 = vmax.xlane.f32.xlu0 %v3320
        %v3322 = vpop.xlane.xlu0 %3321
        %v3323 = vmax.f32 %v1755, %v1756
        %v3324 = vmax.f32 %v3323, %v1757
        %v3325 = vmax.f32 %v3324, %v1758
        %3326 = vmax.xlane.f32.xlu0 %v3325
        %v3327 = vpop.xlane.xlu0 %3326
        %v3328 = vmax.f32 %v1759, %v1760
        %v3329 = vmax.f32 %v3328, %v1761
        %v3330 = vmax.f32 %v3329, %v1762
        %3331 = vmax.xlane.f32.xlu0 %v3330
        %v3332 = vpop.xlane.xlu0 %3331
        %v3333 = vmax.f32 %v1763, %v1764
        %v3334 = vmax.f32 %v3333, %v1765
        %v3335 = vmax.f32 %v3334, %v1766
        %3336 = vmax.xlane.f32.xlu0 %v3335
        %v3337 = vpop.xlane.xlu0 %3336
        %v3338 = vmax.f32 %v1767, %v1768
        %v3339 = vmax.f32 %v3338, %v1769
        %v3340 = vmax.f32 %v3339, %v1770
        %3341 = vmax.xlane.f32.xlu0 %v3340
        %v3342 = vpop.xlane.xlu0 %3341
        %v3343 = vmax.f32 %v1771, %v1772
        %v3344 = vmax.f32 %v3343, %v1773
        %v3345 = vmax.f32 %v3344, %v1774
        %3346 = vmax.xlane.f32.xlu0 %v3345
        %v3347 = vpop.xlane.xlu0 %3346
        %v3348 = vmax.f32 %v1775, %v1776
        %v3349 = vmax.f32 %v3348, %v1777
        %v3350 = vmax.f32 %v3349, %v1778
        %3351 = vmax.xlane.f32.xlu0 %v3350
        %v3352 = vpop.xlane.xlu0 %3351
        %v3353 = vmax.f32 %v1779, %v1780
        %v3354 = vmax.f32 %v3353, %v1781
        %v3355 = vmax.f32 %v3354, %v1782
        %3356 = vmax.xlane.f32.xlu0 %v3355
        %v3357 = vpop.xlane.xlu0 %3356
        %v3358 = vmax.f32 %v1783, %v1784
        %v3359 = vmax.f32 %v3358, %v1785
        %v3360 = vmax.f32 %v3359, %v1786
        %3361 = vmax.xlane.f32.xlu0 %v3360
        %v3362 = vpop.xlane.xlu0 %3361
        %v3363 = vmax.f32 %v1787, %v1788
        %v3364 = vmax.f32 %v3363, %v1789
        %v3365 = vmax.f32 %v3364, %v1790
        %3366 = vmax.xlane.f32.xlu0 %v3365
        %v3367 = vpop.xlane.xlu0 %3366
        %v3368 = vmax.f32 %v1791, %v1792
        %v3369 = vmax.f32 %v3368, %v1793
        %v3370 = vmax.f32 %v3369, %v1794
        %3371 = vmax.xlane.f32.xlu0 %v3370
        %v3372 = vpop.xlane.xlu0 %3371
        %v3373 = vmax.f32 %v1795, %v1796
        %v3374 = vmax.f32 %v3373, %v1797
        %v3375 = vmax.f32 %v3374, %v1798
        %3376 = vmax.xlane.f32.xlu0 %v3375
        %v3377 = vpop.xlane.xlu0 %3376
        %v3378 = vmax.f32 %v1799, %v1800
        %v3379 = vmax.f32 %v3378, %v1801
        %v3380 = vmax.f32 %v3379, %v1802
        %3381 = vmax.xlane.f32.xlu0 %v3380
        %v3382 = vpop.xlane.xlu0 %3381
        %v3383 = vmax.f32 %v1803, %v1804
        %v3384 = vmax.f32 %v3383, %v1805
        %v3385 = vmax.f32 %v3384, %v1806
        %3386 = vmax.xlane.f32.xlu0 %v3385
        %v3387 = vpop.xlane.xlu0 %3386
        %v3388 = vmax.f32 %v1807, %v1808
        %v3389 = vmax.f32 %v3388, %v1809
        %v3390 = vmax.f32 %v3389, %v1810
        %3391 = vmax.xlane.f32.xlu0 %v3390
        %v3392 = vpop.xlane.xlu0 %3391
        %v3393 = vmax.f32 %v1811, %v1812
        %v3394 = vmax.f32 %v3393, %v1813
        %v3395 = vmax.f32 %v3394, %v1814
        %3396 = vmax.xlane.f32.xlu0 %v3395
        %v3397 = vpop.xlane.xlu0 %3396
        %v3398 = vmax.f32 %v1815, %v1816
        %v3399 = vmax.f32 %v3398, %v1817
        %v3400 = vmax.f32 %v3399, %v1818
        %3401 = vmax.xlane.f32.xlu0 %v3400
        %v3402 = vpop.xlane.xlu0 %3401
        %v3403 = vmax.f32 %v1819, %v1820
        %v3404 = vmax.f32 %v3403, %v1821
        %v3405 = vmax.f32 %v3404, %v1822
        %3406 = vmax.xlane.f32.xlu0 %v3405
        %v3407 = vpop.xlane.xlu0 %3406
        %v3408 = vmax.f32 %v3216, %v3252
        %v3409 = vmax.f32 %v3217, %v3257
        %v3410 = vmax.f32 %v3218, %v3262
        %v3411 = vmax.f32 %v3219, %v3267
        %v3412 = vmax.f32 %v3220, %v3272
        %v3413 = vmax.f32 %v3221, %v3277
        %v3414 = vmax.f32 %v3222, %v3282
        %v3415 = vmax.f32 %v3223, %v3287
        %v3416 = vmax.f32 %v3224, %v3292
        %v3417 = vmax.f32 %v3225, %v3297
        %v3418 = vmax.f32 %v3226, %v3302
        %v3419 = vmax.f32 %v3227, %v3307
        %v3420 = vmax.f32 %v3228, %v3312
        %v3421 = vmax.f32 %v3229, %v3317
        %v3422 = vmax.f32 %v3230, %v3322
        %v3423 = vmax.f32 %v3231, %v3327
        %v3424 = vmax.f32 %v3232, %v3332
        %v3425 = vmax.f32 %v3233, %v3337
        %v3426 = vmax.f32 %v3234, %v3342
        %v3427 = vmax.f32 %v3235, %v3347
        %v3428 = vmax.f32 %v3236, %v3352
        %v3429 = vmax.f32 %v3237, %v3357
        %v3430 = vmax.f32 %v3238, %v3362
        %v3431 = vmax.f32 %v3239, %v3367
        %v3432 = vmax.f32 %v3240, %v3372
        %v3433 = vmax.f32 %v3241, %v3377
        %v3434 = vmax.f32 %v3242, %v3382
        %v3435 = vmax.f32 %v3243, %v3387
        %v3436 = vmax.f32 %v3244, %v3392
        %v3437 = vmax.f32 %v3245, %v3397
        %v3438 = vmax.f32 %v3246, %v3402
        %v3439 = vmax.f32 %v3247, %v3407
        %v3440 = vsub.f32 %v3216, %v3408
        %v3441 = vsub.f32 %v3217, %v3409
        %v3442 = vsub.f32 %v3218, %v3410
        %v3443 = vsub.f32 %v3219, %v3411
        %v3444 = vsub.f32 %v3220, %v3412
        %v3445 = vsub.f32 %v3221, %v3413
        %v3446 = vsub.f32 %v3222, %v3414
        %v3447 = vsub.f32 %v3223, %v3415
        %v3448 = vsub.f32 %v3224, %v3416
        %v3449 = vsub.f32 %v3225, %v3417
        %v3450 = vsub.f32 %v3226, %v3418
        %v3451 = vsub.f32 %v3227, %v3419
        %v3452 = vsub.f32 %v3228, %v3420
        %v3453 = vsub.f32 %v3229, %v3421
        %v3454 = vsub.f32 %v3230, %v3422
        %v3455 = vsub.f32 %v3231, %v3423
        %v3456 = vsub.f32 %v3232, %v3424
        %v3457 = vsub.f32 %v3233, %v3425
        %v3458 = vsub.f32 %v3234, %v3426
        %v3459 = vsub.f32 %v3235, %v3427
        %v3460 = vsub.f32 %v3236, %v3428
        %v3461 = vsub.f32 %v3237, %v3429
        %v3462 = vsub.f32 %v3238, %v3430
        %v3463 = vsub.f32 %v3239, %v3431
        %v3464 = vsub.f32 %v3240, %v3432
        %v3465 = vsub.f32 %v3241, %v3433
        %v3466 = vsub.f32 %v3242, %v3434
        %v3467 = vsub.f32 %v3243, %v3435
        %v3468 = vsub.f32 %v3244, %v3436
        %v3469 = vsub.f32 %v3245, %v3437
        %v3470 = vsub.f32 %v3246, %v3438
        %v3471 = vsub.f32 %v3247, %v3439
        %v3472 = vmul.f32 %v3440, 1.442695
        %v3473 = vpow.pop %v3472
        %v3474 = vmul.f32 %v3441, 1.442695
        %v3475 = vpow.pop %v3474
        %v3476 = vmul.f32 %v3442, 1.442695
        %v3477 = vpow.pop %v3476
        %v3478 = vmul.f32 %v3443, 1.442695
        %v3479 = vpow.pop %v3478
        %v3480 = vmul.f32 %v3444, 1.442695
        %v3481 = vpow.pop %v3480
        %v3482 = vmul.f32 %v3445, 1.442695
        %v3483 = vpow.pop %v3482
        %v3484 = vmul.f32 %v3446, 1.442695
        %v3485 = vpow.pop %v3484
        %v3486 = vmul.f32 %v3447, 1.442695
        %v3487 = vpow.pop %v3486
        %v3488 = vmul.f32 %v3448, 1.442695
        %v3489 = vpow.pop %v3488
        %v3490 = vmul.f32 %v3449, 1.442695
        %v3491 = vpow.pop %v3490
        %v3492 = vmul.f32 %v3450, 1.442695
        %v3493 = vpow.pop %v3492
        %v3494 = vmul.f32 %v3451, 1.442695
        %v3495 = vpow.pop %v3494
        %v3496 = vmul.f32 %v3452, 1.442695
        %v3497 = vpow.pop %v3496
        %v3498 = vmul.f32 %v3453, 1.442695
        %v3499 = vpow.pop %v3498
        %v3500 = vmul.f32 %v3454, 1.442695
        %v3501 = vpow.pop %v3500
        %v3502 = vmul.f32 %v3455, 1.442695
        %v3503 = vpow.pop %v3502
        %v3504 = vmul.f32 %v3456, 1.442695
        %v3505 = vpow.pop %v3504
        %v3506 = vmul.f32 %v3457, 1.442695
        %v3507 = vpow.pop %v3506
        %v3508 = vmul.f32 %v3458, 1.442695
        %v3509 = vpow.pop %v3508
        %v3510 = vmul.f32 %v3459, 1.442695
        %v3511 = vpow.pop %v3510
        %v3512 = vmul.f32 %v3460, 1.442695
        %v3513 = vpow.pop %v3512
        %v3514 = vmul.f32 %v3461, 1.442695
        %v3515 = vpow.pop %v3514
        %v3516 = vmul.f32 %v3462, 1.442695
        %v3517 = vpow.pop %v3516
        %v3518 = vmul.f32 %v3463, 1.442695
        %v3519 = vpow.pop %v3518
        %v3520 = vmul.f32 %v3464, 1.442695
        %v3521 = vpow.pop %v3520
        %v3522 = vmul.f32 %v3465, 1.442695
        %v3523 = vpow.pop %v3522
        %v3524 = vmul.f32 %v3466, 1.442695
        %v3525 = vpow.pop %v3524
        %v3526 = vmul.f32 %v3467, 1.442695
        %v3527 = vpow.pop %v3526
        %v3528 = vmul.f32 %v3468, 1.442695
        %v3529 = vpow.pop %v3528
        %v3530 = vmul.f32 %v3469, 1.442695
        %v3531 = vpow.pop %v3530
        %v3532 = vmul.f32 %v3470, 1.442695
        %v3533 = vpow.pop %v3532
        %v3534 = vmul.f32 %v3471, 1.442695
        %v3535 = vpow.pop %v3534
        %v3536 = vld [vmem:[#allocation3] sm:$0xff]
        %v3537 = vld [vmem:[#allocation3 + $0x8] sm:$0xff]
        %v3538 = vld [vmem:[#allocation3 + $0x10] sm:$0xff]
        %v3539 = vld [vmem:[#allocation3 + $0x18] sm:$0xff]
        %v3540 = vld [vmem:[#allocation3 + $0x20] sm:$0xff]
        %v3541 = vld [vmem:[#allocation3 + $0x28] sm:$0xff]
        %v3542 = vld [vmem:[#allocation3 + $0x30] sm:$0xff]
        %v3543 = vld [vmem:[#allocation3 + $0x38] sm:$0xff]
        %v3544 = vld [vmem:[#allocation3 + $0x40] sm:$0xff]
        %v3545 = vld [vmem:[#allocation3 + $0x48] sm:$0xff]
        %v3546 = vld [vmem:[#allocation3 + $0x50] sm:$0xff]
        %v3547 = vld [vmem:[#allocation3 + $0x58] sm:$0xff]
        %v3548 = vld [vmem:[#allocation3 + $0x60] sm:$0xff]
        %v3549 = vld [vmem:[#allocation3 + $0x68] sm:$0xff]
        %v3550 = vld [vmem:[#allocation3 + $0x70] sm:$0xff]
        %v3551 = vld [vmem:[#allocation3 + $0x78] sm:$0xff]
        %v3552 = vld [vmem:[#allocation3 + $0x80] sm:$0xff]
        %v3553 = vld [vmem:[#allocation3 + $0x88] sm:$0xff]
        %v3554 = vld [vmem:[#allocation3 + $0x90] sm:$0xff]
        %v3555 = vld [vmem:[#allocation3 + $0x98] sm:$0xff]
        %v3556 = vld [vmem:[#allocation3 + $0xa0] sm:$0xff]
        %v3557 = vld [vmem:[#allocation3 + $0xa8] sm:$0xff]
        %v3558 = vld [vmem:[#allocation3 + $0xb0] sm:$0xff]
        %v3559 = vld [vmem:[#allocation3 + $0xb8] sm:$0xff]
        %v3560 = vld [vmem:[#allocation3 + $0xc0] sm:$0xff]
        %v3561 = vld [vmem:[#allocation3 + $0xc8] sm:$0xff]
        %v3562 = vld [vmem:[#allocation3 + $0xd0] sm:$0xff]
        %v3563 = vld [vmem:[#allocation3 + $0xd8] sm:$0xff]
        %v3564 = vld [vmem:[#allocation3 + $0xe0] sm:$0xff]
        %v3565 = vld [vmem:[#allocation3 + $0xe8] sm:$0xff]
        %v3566 = vld [vmem:[#allocation3 + $0xf0] sm:$0xff]
        %v3567 = vld [vmem:[#allocation3 + $0xf8] sm:$0xff]
        %v3568 = vmul.f32 %v3473, %v3536
        %v3569 = vmul.f32 %v3475, %v3537
        %v3570 = vmul.f32 %v3477, %v3538
        %v3571 = vmul.f32 %v3479, %v3539
        %v3572 = vmul.f32 %v3481, %v3540
        %v3573 = vmul.f32 %v3483, %v3541
        %v3574 = vmul.f32 %v3485, %v3542
        %v3575 = vmul.f32 %v3487, %v3543
        %v3576 = vmul.f32 %v3489, %v3544
        %v3577 = vmul.f32 %v3491, %v3545
        %v3578 = vmul.f32 %v3493, %v3546
        %v3579 = vmul.f32 %v3495, %v3547
        %v3580 = vmul.f32 %v3497, %v3548
        %v3581 = vmul.f32 %v3499, %v3549
        %v3582 = vmul.f32 %v3501, %v3550
        %v3583 = vmul.f32 %v3503, %v3551
        %v3584 = vmul.f32 %v3505, %v3552
        %v3585 = vmul.f32 %v3507, %v3553
        %v3586 = vmul.f32 %v3509, %v3554
        %v3587 = vmul.f32 %v3511, %v3555
        %v3588 = vmul.f32 %v3513, %v3556
        %v3589 = vmul.f32 %v3515, %v3557
        %v3590 = vmul.f32 %v3517, %v3558
        %v3591 = vmul.f32 %v3519, %v3559
        %v3592 = vmul.f32 %v3521, %v3560
        %v3593 = vmul.f32 %v3523, %v3561
        %v3594 = vmul.f32 %v3525, %v3562
        %v3595 = vmul.f32 %v3527, %v3563
        %v3596 = vmul.f32 %v3529, %v3564
        %v3597 = vmul.f32 %v3531, %v3565
        %v3598 = vmul.f32 %v3533, %v3566
        %v3599 = vmul.f32 %v3535, %v3567
        %3601 = vset.pattern.permute.xlu0 0
        %3602 = vperm.xlu0 %3601, %v3408
        %v3603 = vpop.permute.xlu0 %3602
        %3606 = vset.pattern.permute.xlu0 0
        %3607 = vperm.xlu0 %3606, %v3409
        %v3608 = vpop.permute.xlu0 %3607
        %3611 = vset.pattern.permute.xlu0 0
        %3612 = vperm.xlu0 %3611, %v3410
        %v3613 = vpop.permute.xlu0 %3612
        %3616 = vset.pattern.permute.xlu0 0
        %3617 = vperm.xlu0 %3616, %v3411
        %v3618 = vpop.permute.xlu0 %3617
        %3621 = vset.pattern.permute.xlu0 0
        %3622 = vperm.xlu0 %3621, %v3412
        %v3623 = vpop.permute.xlu0 %3622
        %3626 = vset.pattern.permute.xlu0 0
        %3627 = vperm.xlu0 %3626, %v3413
        %v3628 = vpop.permute.xlu0 %3627
        %3631 = vset.pattern.permute.xlu0 0
        %3632 = vperm.xlu0 %3631, %v3414
        %v3633 = vpop.permute.xlu0 %3632
        %3636 = vset.pattern.permute.xlu0 0
        %3637 = vperm.xlu0 %3636, %v3415
        %v3638 = vpop.permute.xlu0 %3637
        %3641 = vset.pattern.permute.xlu0 0
        %3642 = vperm.xlu0 %3641, %v3416
        %v3643 = vpop.permute.xlu0 %3642
        %3646 = vset.pattern.permute.xlu0 0
        %3647 = vperm.xlu0 %3646, %v3417
        %v3648 = vpop.permute.xlu0 %3647
        %3651 = vset.pattern.permute.xlu0 0
        %3652 = vperm.xlu0 %3651, %v3418
        %v3653 = vpop.permute.xlu0 %3652
        %3656 = vset.pattern.permute.xlu0 0
        %3657 = vperm.xlu0 %3656, %v3419
        %v3658 = vpop.permute.xlu0 %3657
        %3661 = vset.pattern.permute.xlu0 0
        %3662 = vperm.xlu0 %3661, %v3420
        %v3663 = vpop.permute.xlu0 %3662
        %3666 = vset.pattern.permute.xlu0 0
        %3667 = vperm.xlu0 %3666, %v3421
        %v3668 = vpop.permute.xlu0 %3667
        %3671 = vset.pattern.permute.xlu0 0
        %3672 = vperm.xlu0 %3671, %v3422
        %v3673 = vpop.permute.xlu0 %3672
        %3676 = vset.pattern.permute.xlu0 0
        %3677 = vperm.xlu0 %3676, %v3423
        %v3678 = vpop.permute.xlu0 %3677
        %3681 = vset.pattern.permute.xlu0 0
        %3682 = vperm.xlu0 %3681, %v3424
        %v3683 = vpop.permute.xlu0 %3682
        %3686 = vset.pattern.permute.xlu0 0
        %3687 = vperm.xlu0 %3686, %v3425
        %v3688 = vpop.permute.xlu0 %3687
        %3691 = vset.pattern.permute.xlu0 0
        %3692 = vperm.xlu0 %3691, %v3426
        %v3693 = vpop.permute.xlu0 %3692
        %3696 = vset.pattern.permute.xlu0 0
        %3697 = vperm.xlu0 %3696, %v3427
        %v3698 = vpop.permute.xlu0 %3697
        %3701 = vset.pattern.permute.xlu0 0
        %3702 = vperm.xlu0 %3701, %v3428
        %v3703 = vpop.permute.xlu0 %3702
        %3706 = vset.pattern.permute.xlu0 0
        %3707 = vperm.xlu0 %3706, %v3429
        %v3708 = vpop.permute.xlu0 %3707
        %3711 = vset.pattern.permute.xlu0 0
        %3712 = vperm.xlu0 %3711, %v3430
        %v3713 = vpop.permute.xlu0 %3712
        %3716 = vset.pattern.permute.xlu0 0
        %3717 = vperm.xlu0 %3716, %v3431
        %v3718 = vpop.permute.xlu0 %3717
        %3721 = vset.pattern.permute.xlu0 0
        %3722 = vperm.xlu0 %3721, %v3432
        %v3723 = vpop.permute.xlu0 %3722
        %3726 = vset.pattern.permute.xlu0 0
        %3727 = vperm.xlu0 %3726, %v3433
        %v3728 = vpop.permute.xlu0 %3727
        %3731 = vset.pattern.permute.xlu0 0
        %3732 = vperm.xlu0 %3731, %v3434
        %v3733 = vpop.permute.xlu0 %3732
        %3736 = vset.pattern.permute.xlu0 0
        %3737 = vperm.xlu0 %3736, %v3435
        %v3738 = vpop.permute.xlu0 %3737
        %3741 = vset.pattern.permute.xlu0 0
        %3742 = vperm.xlu0 %3741, %v3436
        %v3743 = vpop.permute.xlu0 %3742
        %3746 = vset.pattern.permute.xlu0 0
        %3747 = vperm.xlu0 %3746, %v3437
        %v3748 = vpop.permute.xlu0 %3747
        %3751 = vset.pattern.permute.xlu0 0
        %3752 = vperm.xlu0 %3751, %v3438
        %v3753 = vpop.permute.xlu0 %3752
        %3756 = vset.pattern.permute.xlu0 0
        %3757 = vperm.xlu0 %3756, %v3439
        %v3758 = vpop.permute.xlu0 %3757
        %v3760 = vsub.f32 %v1695, %v3603
        %v3761 = vsub.f32 %v1696, %v3603
        %v3762 = vsub.f32 %v1697, %v3603
        %v3763 = vsub.f32 %v1698, %v3603
        %v3764 = vsub.f32 %v1699, %v3608
        %v3765 = vsub.f32 %v1700, %v3608
        %v3766 = vsub.f32 %v1701, %v3608
        %v3767 = vsub.f32 %v1702, %v3608
        %v3768 = vsub.f32 %v1703, %v3613
        %v3769 = vsub.f32 %v1704, %v3613
        %v3770 = vsub.f32 %v1705, %v3613
        %v3771 = vsub.f32 %v1706, %v3613
        %v3772 = vsub.f32 %v1707, %v3618
        %v3773 = vsub.f32 %v1708, %v3618
        %v3774 = vsub.f32 %v1709, %v3618
        %v3775 = vsub.f32 %v1710, %v3618
        %v3776 = vsub.f32 %v1711, %v3623
        %v3777 = vsub.f32 %v1712, %v3623
        %v3778 = vsub.f32 %v1713, %v3623
        %v3779 = vsub.f32 %v1714, %v3623
        %v3780 = vsub.f32 %v1715, %v3628
        %v3781 = vsub.f32 %v1716, %v3628
        %v3782 = vsub.f32 %v1717, %v3628
        %v3783 = vsub.f32 %v1718, %v3628
        %v3784 = vsub.f32 %v1719, %v3633
        %v3785 = vsub.f32 %v1720, %v3633
        %v3786 = vsub.f32 %v1721, %v3633
        %v3787 = vsub.f32 %v1722, %v3633
        %v3788 = vsub.f32 %v1723, %v3638
        %v3789 = vsub.f32 %v1724, %v3638
        %v3790 = vsub.f32 %v1725, %v3638
        %v3791 = vsub.f32 %v1726, %v3638
        %v3792 = vsub.f32 %v1727, %v3643
        %v3793 = vsub.f32 %v1728, %v3643
        %v3794 = vsub.f32 %v1729, %v3643
        %v3795 = vsub.f32 %v1730, %v3643
        %v3796 = vsub.f32 %v1731, %v3648
        %v3797 = vsub.f32 %v1732, %v3648
        %v3798 = vsub.f32 %v1733, %v3648
        %v3799 = vsub.f32 %v1734, %v3648
        %v3800 = vsub.f32 %v1735, %v3653
        %v3801 = vsub.f32 %v1736, %v3653
        %v3802 = vsub.f32 %v1737, %v3653
        %v3803 = vsub.f32 %v1738, %v3653
        %v3804 = vsub.f32 %v1739, %v3658
        %v3805 = vsub.f32 %v1740, %v3658
        %v3806 = vsub.f32 %v1741, %v3658
        %v3807 = vsub.f32 %v1742, %v3658
        %v3808 = vsub.f32 %v1743, %v3663
        %v3809 = vsub.f32 %v1744, %v3663
        %v3810 = vsub.f32 %v1745, %v3663
        %v3811 = vsub.f32 %v1746, %v3663
        %v3812 = vsub.f32 %v1747, %v3668
        %v3813 = vsub.f32 %v1748, %v3668
        %v3814 = vsub.f32 %v1749, %v3668
        %v3815 = vsub.f32 %v1750, %v3668
        %v3816 = vsub.f32 %v1751, %v3673
        %v3817 = vsub.f32 %v1752, %v3673
        %v3818 = vsub.f32 %v1753, %v3673
        %v3819 = vsub.f32 %v1754, %v3673
        %v3820 = vsub.f32 %v1755, %v3678
        %v3821 = vsub.f32 %v1756, %v3678
        %v3822 = vsub.f32 %v1757, %v3678
        %v3823 = vsub.f32 %v1758, %v3678
        %v3824 = vsub.f32 %v1759, %v3683
        %v3825 = vsub.f32 %v1760, %v3683
        %v3826 = vsub.f32 %v1761, %v3683
        %v3827 = vsub.f32 %v1762, %v3683
        %v3828 = vsub.f32 %v1763, %v3688
        %v3829 = vsub.f32 %v1764, %v3688
        %v3830 = vsub.f32 %v1765, %v3688
        %v3831 = vsub.f32 %v1766, %v3688
        %v3832 = vsub.f32 %v1767, %v3693
        %v3833 = vsub.f32 %v1768, %v3693
        %v3834 = vsub.f32 %v1769, %v3693
        %v3835 = vsub.f32 %v1770, %v3693
        %v3836 = vsub.f32 %v1771, %v3698
        %v3837 = vsub.f32 %v1772, %v3698
        %v3838 = vsub.f32 %v1773, %v3698
        %v3839 = vsub.f32 %v1774, %v3698
        %v3840 = vsub.f32 %v1775, %v3703
        %v3841 = vsub.f32 %v1776, %v3703
        %v3842 = vsub.f32 %v1777, %v3703
        %v3843 = vsub.f32 %v1778, %v3703
        %v3844 = vsub.f32 %v1779, %v3708
        %v3845 = vsub.f32 %v1780, %v3708
        %v3846 = vsub.f32 %v1781, %v3708
        %v3847 = vsub.f32 %v1782, %v3708
        %v3848 = vsub.f32 %v1783, %v3713
        %v3849 = vsub.f32 %v1784, %v3713
        %v3850 = vsub.f32 %v1785, %v3713
        %v3851 = vsub.f32 %v1786, %v3713
        %v3852 = vsub.f32 %v1787, %v3718
        %v3853 = vsub.f32 %v1788, %v3718
        %v3854 = vsub.f32 %v1789, %v3718
        %v3855 = vsub.f32 %v1790, %v3718
        %v3856 = vsub.f32 %v1791, %v3723
        %v3857 = vsub.f32 %v1792, %v3723
        %v3858 = vsub.f32 %v1793, %v3723
        %v3859 = vsub.f32 %v1794, %v3723
        %v3860 = vsub.f32 %v1795, %v3728
        %v3861 = vsub.f32 %v1796, %v3728
        %v3862 = vsub.f32 %v1797, %v3728
        %v3863 = vsub.f32 %v1798, %v3728
        %v3864 = vsub.f32 %v1799, %v3733
        %v3865 = vsub.f32 %v1800, %v3733
        %v3866 = vsub.f32 %v1801, %v3733
        %v3867 = vsub.f32 %v1802, %v3733
        %v3868 = vsub.f32 %v1803, %v3738
        %v3869 = vsub.f32 %v1804, %v3738
        %v3870 = vsub.f32 %v1805, %v3738
        %v3871 = vsub.f32 %v1806, %v3738
        %v3872 = vsub.f32 %v1807, %v3743
        %v3873 = vsub.f32 %v1808, %v3743
        %v3874 = vsub.f32 %v1809, %v3743
        %v3875 = vsub.f32 %v1810, %v3743
        %v3876 = vsub.f32 %v1811, %v3748
        %v3877 = vsub.f32 %v1812, %v3748
        %v3878 = vsub.f32 %v1813, %v3748
        %v3879 = vsub.f32 %v1814, %v3748
        %v3880 = vsub.f32 %v1815, %v3753
        %v3881 = vsub.f32 %v1816, %v3753
        %v3882 = vsub.f32 %v1817, %v3753
        %v3883 = vsub.f32 %v1818, %v3753
        %v3884 = vsub.f32 %v1819, %v3758
        %v3885 = vsub.f32 %v1820, %v3758
        %v3886 = vsub.f32 %v1821, %v3758
        %v3887 = vsub.f32 %v1822, %v3758
        %v3888 = vmul.f32 %v3760, 1.442695
        %v3889 = vpow.pop %v3888
        %v3890 = vmul.f32 %v3761, 1.442695
        %v3891 = vpow.pop %v3890
        %v3892 = vmul.f32 %v3762, 1.442695
        %v3893 = vpow.pop %v3892
        %v3894 = vmul.f32 %v3763, 1.442695
        %v3895 = vpow.pop %v3894
        %v3896 = vmul.f32 %v3764, 1.442695
        %v3897 = vpow.pop %v3896
        %v3898 = vmul.f32 %v3765, 1.442695
        %v3899 = vpow.pop %v3898
        %v3900 = vmul.f32 %v3766, 1.442695
        %v3901 = vpow.pop %v3900
        %v3902 = vmul.f32 %v3767, 1.442695
        %v3903 = vpow.pop %v3902
        %v3904 = vmul.f32 %v3768, 1.442695
        %v3905 = vpow.pop %v3904
        %v3906 = vmul.f32 %v3769, 1.442695
        %v3907 = vpow.pop %v3906
        %v3908 = vmul.f32 %v3770, 1.442695
        %v3909 = vpow.pop %v3908
        %v3910 = vmul.f32 %v3771, 1.442695
        %v3911 = vpow.pop %v3910
        %v3912 = vmul.f32 %v3772, 1.442695
        %v3913 = vpow.pop %v3912
        %v3914 = vmul.f32 %v3773, 1.442695
        %v3915 = vpow.pop %v3914
        %v3916 = vmul.f32 %v3774, 1.442695
        %v3917 = vpow.pop %v3916
        %v3918 = vmul.f32 %v3775, 1.442695
        %v3919 = vpow.pop %v3918
        %v3920 = vmul.f32 %v3776, 1.442695
        %v3921 = vpow.pop %v3920
        %v3922 = vmul.f32 %v3777, 1.442695
        %v3923 = vpow.pop %v3922
        %v3924 = vmul.f32 %v3778, 1.442695
        %v3925 = vpow.pop %v3924
        %v3926 = vmul.f32 %v3779, 1.442695
        %v3927 = vpow.pop %v3926
        %v3928 = vmul.f32 %v3780, 1.442695
        %v3929 = vpow.pop %v3928
        %v3930 = vmul.f32 %v3781, 1.442695
        %v3931 = vpow.pop %v3930
        %v3932 = vmul.f32 %v3782, 1.442695
        %v3933 = vpow.pop %v3932
        %v3934 = vmul.f32 %v3783, 1.442695
        %v3935 = vpow.pop %v3934
        %v3936 = vmul.f32 %v3784, 1.442695
        %v3937 = vpow.pop %v3936
        %v3938 = vmul.f32 %v3785, 1.442695
        %v3939 = vpow.pop %v3938
        %v3940 = vmul.f32 %v3786, 1.442695
        %v3941 = vpow.pop %v3940
        %v3942 = vmul.f32 %v3787, 1.442695
        %v3943 = vpow.pop %v3942
        %v3944 = vmul.f32 %v3788, 1.442695
        %v3945 = vpow.pop %v3944
        %v3946 = vmul.f32 %v3789, 1.442695
        %v3947 = vpow.pop %v3946
        %v3948 = vmul.f32 %v3790, 1.442695
        %v3949 = vpow.pop %v3948
        %v3950 = vmul.f32 %v3791, 1.442695
        %v3951 = vpow.pop %v3950
        %v3952 = vmul.f32 %v3792, 1.442695
        %v3953 = vpow.pop %v3952
        %v3954 = vmul.f32 %v3793, 1.442695
        %v3955 = vpow.pop %v3954
        %v3956 = vmul.f32 %v3794, 1.442695
        %v3957 = vpow.pop %v3956
        %v3958 = vmul.f32 %v3795, 1.442695
        %v3959 = vpow.pop %v3958
        %v3960 = vmul.f32 %v3796, 1.442695
        %v3961 = vpow.pop %v3960
        %v3962 = vmul.f32 %v3797, 1.442695
        %v3963 = vpow.pop %v3962
        %v3964 = vmul.f32 %v3798, 1.442695
        %v3965 = vpow.pop %v3964
        %v3966 = vmul.f32 %v3799, 1.442695
        %v3967 = vpow.pop %v3966
        %v3968 = vmul.f32 %v3800, 1.442695
        %v3969 = vpow.pop %v3968
        %v3970 = vmul.f32 %v3801, 1.442695
        %v3971 = vpow.pop %v3970
        %v3972 = vmul.f32 %v3802, 1.442695
        %v3973 = vpow.pop %v3972
        %v3974 = vmul.f32 %v3803, 1.442695
        %v3975 = vpow.pop %v3974
        %v3976 = vmul.f32 %v3804, 1.442695
        %v3977 = vpow.pop %v3976
        %v3978 = vmul.f32 %v3805, 1.442695
        %v3979 = vpow.pop %v3978
        %v3980 = vmul.f32 %v3806, 1.442695
        %v3981 = vpow.pop %v3980
        %v3982 = vmul.f32 %v3807, 1.442695
        %v3983 = vpow.pop %v3982
        %v3984 = vmul.f32 %v3808, 1.442695
        %v3985 = vpow.pop %v3984
        %v3986 = vmul.f32 %v3809, 1.442695
        %v3987 = vpow.pop %v3986
        %v3988 = vmul.f32 %v3810, 1.442695
        %v3989 = vpow.pop %v3988
        %v3990 = vmul.f32 %v3811, 1.442695
        %v3991 = vpow.pop %v3990
        %v3992 = vmul.f32 %v3812, 1.442695
        %v3993 = vpow.pop %v3992
        %v3994 = vmul.f32 %v3813, 1.442695
        %v3995 = vpow.pop %v3994
        %v3996 = vmul.f32 %v3814, 1.442695
        %v3997 = vpow.pop %v3996
        %v3998 = vmul.f32 %v3815, 1.442695
        %v3999 = vpow.pop %v3998
        %v4000 = vmul.f32 %v3816, 1.442695
        %v4001 = vpow.pop %v4000
        %v4002 = vmul.f32 %v3817, 1.442695
        %v4003 = vpow.pop %v4002
        %v4004 = vmul.f32 %v3818, 1.442695
        %v4005 = vpow.pop %v4004
        %v4006 = vmul.f32 %v3819, 1.442695
        %v4007 = vpow.pop %v4006
        %v4008 = vmul.f32 %v3820, 1.442695
        %v4009 = vpow.pop %v4008
        %v4010 = vmul.f32 %v3821, 1.442695
        %v4011 = vpow.pop %v4010
        %v4012 = vmul.f32 %v3822, 1.442695
        %v4013 = vpow.pop %v4012
        %v4014 = vmul.f32 %v3823, 1.442695
        %v4015 = vpow.pop %v4014
        %v4016 = vmul.f32 %v3824, 1.442695
        %v4017 = vpow.pop %v4016
        %v4018 = vmul.f32 %v3825, 1.442695
        %v4019 = vpow.pop %v4018
        %v4020 = vmul.f32 %v3826, 1.442695
        %v4021 = vpow.pop %v4020
        %v4022 = vmul.f32 %v3827, 1.442695
        %v4023 = vpow.pop %v4022
        %v4024 = vmul.f32 %v3828, 1.442695
        %v4025 = vpow.pop %v4024
        %v4026 = vmul.f32 %v3829, 1.442695
        %v4027 = vpow.pop %v4026
        %v4028 = vmul.f32 %v3830, 1.442695
        %v4029 = vpow.pop %v4028
        %v4030 = vmul.f32 %v3831, 1.442695
        %v4031 = vpow.pop %v4030
        %v4032 = vmul.f32 %v3832, 1.442695
        %v4033 = vpow.pop %v4032
        %v4034 = vmul.f32 %v3833, 1.442695
        %v4035 = vpow.pop %v4034
        %v4036 = vmul.f32 %v3834, 1.442695
        %v4037 = vpow.pop %v4036
        %v4038 = vmul.f32 %v3835, 1.442695
        %v4039 = vpow.pop %v4038
        %v4040 = vmul.f32 %v3836, 1.442695
        %v4041 = vpow.pop %v4040
        %v4042 = vmul.f32 %v3837, 1.442695
        %v4043 = vpow.pop %v4042
        %v4044 = vmul.f32 %v3838, 1.442695
        %v4045 = vpow.pop %v4044
        %v4046 = vmul.f32 %v3839, 1.442695
        %v4047 = vpow.pop %v4046
        %v4048 = vmul.f32 %v3840, 1.442695
        %v4049 = vpow.pop %v4048
        %v4050 = vmul.f32 %v3841, 1.442695
        %v4051 = vpow.pop %v4050
        %v4052 = vmul.f32 %v3842, 1.442695
        %v4053 = vpow.pop %v4052
        %v4054 = vmul.f32 %v3843, 1.442695
        %v4055 = vpow.pop %v4054
        %v4056 = vmul.f32 %v3844, 1.442695
        %v4057 = vpow.pop %v4056
        %v4058 = vmul.f32 %v3845, 1.442695
        %v4059 = vpow.pop %v4058
        %v4060 = vmul.f32 %v3846, 1.442695
        %v4061 = vpow.pop %v4060
        %v4062 = vmul.f32 %v3847, 1.442695
        %v4063 = vpow.pop %v4062
        %v4064 = vmul.f32 %v3848, 1.442695
        %v4065 = vpow.pop %v4064
        %v4066 = vmul.f32 %v3849, 1.442695
        %v4067 = vpow.pop %v4066
        %v4068 = vmul.f32 %v3850, 1.442695
        %v4069 = vpow.pop %v4068
        %v4070 = vmul.f32 %v3851, 1.442695
        %v4071 = vpow.pop %v4070
        %v4072 = vmul.f32 %v3852, 1.442695
        %v4073 = vpow.pop %v4072
        %v4074 = vmul.f32 %v3853, 1.442695
        %v4075 = vpow.pop %v4074
        %v4076 = vmul.f32 %v3854, 1.442695
        %v4077 = vpow.pop %v4076
        %v4078 = vmul.f32 %v3855, 1.442695
        %v4079 = vpow.pop %v4078
        %v4080 = vmul.f32 %v3856, 1.442695
        %v4081 = vpow.pop %v4080
        %v4082 = vmul.f32 %v3857, 1.442695
        %v4083 = vpow.pop %v4082
        %v4084 = vmul.f32 %v3858, 1.442695
        %v4085 = vpow.pop %v4084
        %v4086 = vmul.f32 %v3859, 1.442695
        %v4087 = vpow.pop %v4086
        %v4088 = vmul.f32 %v3860, 1.442695
        %v4089 = vpow.pop %v4088
        %v4090 = vmul.f32 %v3861, 1.442695
        %v4091 = vpow.pop %v4090
        %v4092 = vmul.f32 %v3862, 1.442695
        %v4093 = vpow.pop %v4092
        %v4094 = vmul.f32 %v3863, 1.442695
        %v4095 = vpow.pop %v4094
        %v4096 = vmul.f32 %v3864, 1.442695
        %v4097 = vpow.pop %v4096
        %v4098 = vmul.f32 %v3865, 1.442695
        %v4099 = vpow.pop %v4098
        %v4100 = vmul.f32 %v3866, 1.442695
        %v4101 = vpow.pop %v4100
        %v4102 = vmul.f32 %v3867, 1.442695
        %v4103 = vpow.pop %v4102
        %v4104 = vmul.f32 %v3868, 1.442695
        %v4105 = vpow.pop %v4104
        %v4106 = vmul.f32 %v3869, 1.442695
        %v4107 = vpow.pop %v4106
        %v4108 = vmul.f32 %v3870, 1.442695
        %v4109 = vpow.pop %v4108
        %v4110 = vmul.f32 %v3871, 1.442695
        %v4111 = vpow.pop %v4110
        %v4112 = vmul.f32 %v3872, 1.442695
        %v4113 = vpow.pop %v4112
        %v4114 = vmul.f32 %v3873, 1.442695
        %v4115 = vpow.pop %v4114
        %v4116 = vmul.f32 %v3874, 1.442695
        %v4117 = vpow.pop %v4116
        %v4118 = vmul.f32 %v3875, 1.442695
        %v4119 = vpow.pop %v4118
        %v4120 = vmul.f32 %v3876, 1.442695
        %v4121 = vpow.pop %v4120
        %v4122 = vmul.f32 %v3877, 1.442695
        %v4123 = vpow.pop %v4122
        %v4124 = vmul.f32 %v3878, 1.442695
        %v4125 = vpow.pop %v4124
        %v4126 = vmul.f32 %v3879, 1.442695
        %v4127 = vpow.pop %v4126
        %v4128 = vmul.f32 %v3880, 1.442695
        %v4129 = vpow.pop %v4128
        %v4130 = vmul.f32 %v3881, 1.442695
        %v4131 = vpow.pop %v4130
        %v4132 = vmul.f32 %v3882, 1.442695
        %v4133 = vpow.pop %v4132
        %v4134 = vmul.f32 %v3883, 1.442695
        %v4135 = vpow.pop %v4134
        %v4136 = vmul.f32 %v3884, 1.442695
        %v4137 = vpow.pop %v4136
        %v4138 = vmul.f32 %v3885, 1.442695
        %v4139 = vpow.pop %v4138
        %v4140 = vmul.f32 %v3886, 1.442695
        %v4141 = vpow.pop %v4140
        %v4142 = vmul.f32 %v3887, 1.442695
        %v4143 = vpow.pop %v4142
        %v4144 = vadd.f32 %v3889, %v3891
        %v4145 = vadd.f32 %v4144, %v3893
        %v4146 = vadd.f32 %v4145, %v3895
        %4147 = vadd.xlane.f32.xlu0 %v4146
        %v4148 = vpop.xlane.xlu0 %4147
        %v4149 = vadd.f32 %v3897, %v3899
        %v4150 = vadd.f32 %v4149, %v3901
        %v4151 = vadd.f32 %v4150, %v3903
        %4152 = vadd.xlane.f32.xlu0 %v4151
        %v4153 = vpop.xlane.xlu0 %4152
        %v4154 = vadd.f32 %v3905, %v3907
        %v4155 = vadd.f32 %v4154, %v3909
        %v4156 = vadd.f32 %v4155, %v3911
        %4157 = vadd.xlane.f32.xlu0 %v4156
        %v4158 = vpop.xlane.xlu0 %4157
        %v4159 = vadd.f32 %v3913, %v3915
        %v4160 = vadd.f32 %v4159, %v3917
        %v4161 = vadd.f32 %v4160, %v3919
        %4162 = vadd.xlane.f32.xlu0 %v4161
        %v4163 = vpop.xlane.xlu0 %4162
        %v4164 = vadd.f32 %v3921, %v3923
        %v4165 = vadd.f32 %v4164, %v3925
        %v4166 = vadd.f32 %v4165, %v3927
        %4167 = vadd.xlane.f32.xlu0 %v4166
        %v4168 = vpop.xlane.xlu0 %4167
        %v4169 = vadd.f32 %v3929, %v3931
        %v4170 = vadd.f32 %v4169, %v3933
        %v4171 = vadd.f32 %v4170, %v3935
        %4172 = vadd.xlane.f32.xlu0 %v4171
        %v4173 = vpop.xlane.xlu0 %4172
        %v4174 = vadd.f32 %v3937, %v3939
        %v4175 = vadd.f32 %v4174, %v3941
        %v4176 = vadd.f32 %v4175, %v3943
        %4177 = vadd.xlane.f32.xlu0 %v4176
        %v4178 = vpop.xlane.xlu0 %4177
        %v4179 = vadd.f32 %v3945, %v3947
        %v4180 = vadd.f32 %v4179, %v3949
        %v4181 = vadd.f32 %v4180, %v3951
        %4182 = vadd.xlane.f32.xlu0 %v4181
        %v4183 = vpop.xlane.xlu0 %4182
        %v4184 = vadd.f32 %v3953, %v3955
        %v4185 = vadd.f32 %v4184, %v3957
        %v4186 = vadd.f32 %v4185, %v3959
        %4187 = vadd.xlane.f32.xlu0 %v4186
        %v4188 = vpop.xlane.xlu0 %4187
        %v4189 = vadd.f32 %v3961, %v3963
        %v4190 = vadd.f32 %v4189, %v3965
        %v4191 = vadd.f32 %v4190, %v3967
        %4192 = vadd.xlane.f32.xlu0 %v4191
        %v4193 = vpop.xlane.xlu0 %4192
        %v4194 = vadd.f32 %v3969, %v3971
        %v4195 = vadd.f32 %v4194, %v3973
        %v4196 = vadd.f32 %v4195, %v3975
        %4197 = vadd.xlane.f32.xlu0 %v4196
        %v4198 = vpop.xlane.xlu0 %4197
        %v4199 = vadd.f32 %v3977, %v3979
        %v4200 = vadd.f32 %v4199, %v3981
        %v4201 = vadd.f32 %v4200, %v3983
        %4202 = vadd.xlane.f32.xlu0 %v4201
        %v4203 = vpop.xlane.xlu0 %4202
        %v4204 = vadd.f32 %v3985, %v3987
        %v4205 = vadd.f32 %v4204, %v3989
        %v4206 = vadd.f32 %v4205, %v3991
        %4207 = vadd.xlane.f32.xlu0 %v4206
        %v4208 = vpop.xlane.xlu0 %4207
        %v4209 = vadd.f32 %v3993, %v3995
        %v4210 = vadd.f32 %v4209, %v3997
        %v4211 = vadd.f32 %v4210, %v3999
        %4212 = vadd.xlane.f32.xlu0 %v4211
        %v4213 = vpop.xlane.xlu0 %4212
        %v4214 = vadd.f32 %v4001, %v4003
        %v4215 = vadd.f32 %v4214, %v4005
        %v4216 = vadd.f32 %v4215, %v4007
        %4217 = vadd.xlane.f32.xlu0 %v4216
        %v4218 = vpop.xlane.xlu0 %4217
        %v4219 = vadd.f32 %v4009, %v4011
        %v4220 = vadd.f32 %v4219, %v4013
        %v4221 = vadd.f32 %v4220, %v4015
        %4222 = vadd.xlane.f32.xlu0 %v4221
        %v4223 = vpop.xlane.xlu0 %4222
        %v4224 = vadd.f32 %v4017, %v4019
        %v4225 = vadd.f32 %v4224, %v4021
        %v4226 = vadd.f32 %v4225, %v4023
        %4227 = vadd.xlane.f32.xlu0 %v4226
        %v4228 = vpop.xlane.xlu0 %4227
        %v4229 = vadd.f32 %v4025, %v4027
        %v4230 = vadd.f32 %v4229, %v4029
        %v4231 = vadd.f32 %v4230, %v4031
        %4232 = vadd.xlane.f32.xlu0 %v4231
        %v4233 = vpop.xlane.xlu0 %4232
        %v4234 = vadd.f32 %v4033, %v4035
        %v4235 = vadd.f32 %v4234, %v4037
        %v4236 = vadd.f32 %v4235, %v4039
        %4237 = vadd.xlane.f32.xlu0 %v4236
        %v4238 = vpop.xlane.xlu0 %4237
        %v4239 = vadd.f32 %v4041, %v4043
        %v4240 = vadd.f32 %v4239, %v4045
        %v4241 = vadd.f32 %v4240, %v4047
        %4242 = vadd.xlane.f32.xlu0 %v4241
        %v4243 = vpop.xlane.xlu0 %4242
        %v4244 = vadd.f32 %v4049, %v4051
        %v4245 = vadd.f32 %v4244, %v4053
        %v4246 = vadd.f32 %v4245, %v4055
        %4247 = vadd.xlane.f32.xlu0 %v4246
        %v4248 = vpop.xlane.xlu0 %4247
        %v4249 = vadd.f32 %v4057, %v4059
        %v4250 = vadd.f32 %v4249, %v4061
        %v4251 = vadd.f32 %v4250, %v4063
        %4252 = vadd.xlane.f32.xlu0 %v4251
        %v4253 = vpop.xlane.xlu0 %4252
        %v4254 = vadd.f32 %v4065, %v4067
        %v4255 = vadd.f32 %v4254, %v4069
        %v4256 = vadd.f32 %v4255, %v4071
        %4257 = vadd.xlane.f32.xlu0 %v4256
        %v4258 = vpop.xlane.xlu0 %4257
        %v4259 = vadd.f32 %v4073, %v4075
        %v4260 = vadd.f32 %v4259, %v4077
        %v4261 = vadd.f32 %v4260, %v4079
        %4262 = vadd.xlane.f32.xlu0 %v4261
        %v4263 = vpop.xlane.xlu0 %4262
        %v4264 = vadd.f32 %v4081, %v4083
        %v4265 = vadd.f32 %v4264, %v4085
        %v4266 = vadd.f32 %v4265, %v4087
        %4267 = vadd.xlane.f32.xlu0 %v4266
        %v4268 = vpop.xlane.xlu0 %4267
        %v4269 = vadd.f32 %v4089, %v4091
        %v4270 = vadd.f32 %v4269, %v4093
        %v4271 = vadd.f32 %v4270, %v4095
        %4272 = vadd.xlane.f32.xlu0 %v4271
        %v4273 = vpop.xlane.xlu0 %4272
        %v4274 = vadd.f32 %v4097, %v4099
        %v4275 = vadd.f32 %v4274, %v4101
        %v4276 = vadd.f32 %v4275, %v4103
        %4277 = vadd.xlane.f32.xlu0 %v4276
        %v4278 = vpop.xlane.xlu0 %4277
        %v4279 = vadd.f32 %v4105, %v4107
        %v4280 = vadd.f32 %v4279, %v4109
        %v4281 = vadd.f32 %v4280, %v4111
        %4282 = vadd.xlane.f32.xlu0 %v4281
        %v4283 = vpop.xlane.xlu0 %4282
        %v4284 = vadd.f32 %v4113, %v4115
        %v4285 = vadd.f32 %v4284, %v4117
        %v4286 = vadd.f32 %v4285, %v4119
        %4287 = vadd.xlane.f32.xlu0 %v4286
        %v4288 = vpop.xlane.xlu0 %4287
        %v4289 = vadd.f32 %v4121, %v4123
        %v4290 = vadd.f32 %v4289, %v4125
        %v4291 = vadd.f32 %v4290, %v4127
        %4292 = vadd.xlane.f32.xlu0 %v4291
        %v4293 = vpop.xlane.xlu0 %4292
        %v4294 = vadd.f32 %v4129, %v4131
        %v4295 = vadd.f32 %v4294, %v4133
        %v4296 = vadd.f32 %v4295, %v4135
        %4297 = vadd.xlane.f32.xlu0 %v4296
        %v4298 = vpop.xlane.xlu0 %4297
        %v4299 = vadd.f32 %v4137, %v4139
        %v4300 = vadd.f32 %v4299, %v4141
        %v4301 = vadd.f32 %v4300, %v4143
        %4302 = vadd.xlane.f32.xlu0 %v4301
        %v4303 = vpop.xlane.xlu0 %4302
        %v4304 = vadd.f32 %v3568, %v4148
        %v4305 = vadd.f32 %v3569, %v4153
        %v4306 = vadd.f32 %v3570, %v4158
        %v4307 = vadd.f32 %v3571, %v4163
        %v4308 = vadd.f32 %v3572, %v4168
        %v4309 = vadd.f32 %v3573, %v4173
        %v4310 = vadd.f32 %v3574, %v4178
        %v4311 = vadd.f32 %v3575, %v4183
        %v4312 = vadd.f32 %v3576, %v4188
        %v4313 = vadd.f32 %v3577, %v4193
        %v4314 = vadd.f32 %v3578, %v4198
        %v4315 = vadd.f32 %v3579, %v4203
        %v4316 = vadd.f32 %v3580, %v4208
        %v4317 = vadd.f32 %v3581, %v4213
        %v4318 = vadd.f32 %v3582, %v4218
        %v4319 = vadd.f32 %v3583, %v4223
        %v4320 = vadd.f32 %v3584, %v4228
        %v4321 = vadd.f32 %v3585, %v4233
        %v4322 = vadd.f32 %v3586, %v4238
        %v4323 = vadd.f32 %v3587, %v4243
        %v4324 = vadd.f32 %v3588, %v4248
        %v4325 = vadd.f32 %v3589, %v4253
        %v4326 = vadd.f32 %v3590, %v4258
        %v4327 = vadd.f32 %v3591, %v4263
        %v4328 = vadd.f32 %v3592, %v4268
        %v4329 = vadd.f32 %v3593, %v4273
        %v4330 = vadd.f32 %v3594, %v4278
        %v4331 = vadd.f32 %v3595, %v4283
        %v4332 = vadd.f32 %v3596, %v4288
        %v4333 = vadd.f32 %v3597, %v4293
        %v4334 = vadd.f32 %v3598, %v4298
        %v4335 = vadd.f32 %v3599, %v4303
        %4336 = vst.msk [vmem:[#allocation3] sm:$0xff] %vm2927, %v4304
        %4337 = vst.msk [vmem:[#allocation3 + $0x8] sm:$0xff] %vm2927, %v4305
        %4338 = vst.msk [vmem:[#allocation3 + $0x10] sm:$0xff] %vm2927, %v4306
        %4339 = vst.msk [vmem:[#allocation3 + $0x18] sm:$0xff] %vm2927, %v4307
        %4340 = vst.msk [vmem:[#allocation3 + $0x20] sm:$0xff] %vm2927, %v4308
        %4341 = vst.msk [vmem:[#allocation3 + $0x28] sm:$0xff] %vm2927, %v4309
        %4342 = vst.msk [vmem:[#allocation3 + $0x30] sm:$0xff] %vm2927, %v4310
        %4343 = vst.msk [vmem:[#allocation3 + $0x38] sm:$0xff] %vm2927, %v4311
        %4344 = vst.msk [vmem:[#allocation3 + $0x40] sm:$0xff] %vm2927, %v4312
        %4345 = vst.msk [vmem:[#allocation3 + $0x48] sm:$0xff] %vm2927, %v4313
        %4346 = vst.msk [vmem:[#allocation3 + $0x50] sm:$0xff] %vm2927, %v4314
        %4347 = vst.msk [vmem:[#allocation3 + $0x58] sm:$0xff] %vm2927, %v4315
        %4348 = vst.msk [vmem:[#allocation3 + $0x60] sm:$0xff] %vm2927, %v4316
        %4349 = vst.msk [vmem:[#allocation3 + $0x68] sm:$0xff] %vm2927, %v4317
        %4350 = vst.msk [vmem:[#allocation3 + $0x70] sm:$0xff] %vm2927, %v4318
        %4351 = vst.msk [vmem:[#allocation3 + $0x78] sm:$0xff] %vm2927, %v4319
        %4352 = vst.msk [vmem:[#allocation3 + $0x80] sm:$0xff] %vm2927, %v4320
        %4353 = vst.msk [vmem:[#allocation3 + $0x88] sm:$0xff] %vm2927, %v4321
        %4354 = vst.msk [vmem:[#allocation3 + $0x90] sm:$0xff] %vm2927, %v4322
        %4355 = vst.msk [vmem:[#allocation3 + $0x98] sm:$0xff] %vm2927, %v4323
        %4356 = vst.msk [vmem:[#allocation3 + $0xa0] sm:$0xff] %vm2927, %v4324
        %4357 = vst.msk [vmem:[#allocation3 + $0xa8] sm:$0xff] %vm2927, %v4325
        %4358 = vst.msk [vmem:[#allocation3 + $0xb0] sm:$0xff] %vm2927, %v4326
        %4359 = vst.msk [vmem:[#allocation3 + $0xb8] sm:$0xff] %vm2927, %v4327
        %4360 = vst.msk [vmem:[#allocation3 + $0xc0] sm:$0xff] %vm2927, %v4328
        %4361 = vst.msk [vmem:[#allocation3 + $0xc8] sm:$0xff] %vm2927, %v4329
        %4362 = vst.msk [vmem:[#allocation3 + $0xd0] sm:$0xff] %vm2927, %v4330
        %4363 = vst.msk [vmem:[#allocation3 + $0xd8] sm:$0xff] %vm2927, %v4331
        %4364 = vst.msk [vmem:[#allocation3 + $0xe0] sm:$0xff] %vm2927, %v4332
        %4365 = vst.msk [vmem:[#allocation3 + $0xe8] sm:$0xff] %vm2927, %v4333
        %4366 = vst.msk [vmem:[#allocation3 + $0xf0] sm:$0xff] %vm2927, %v4334
        %4367 = vst.msk [vmem:[#allocation3 + $0xf8] sm:$0xff] %vm2927, %v4335
        %4368 = vst.msk [vmem:[#allocation2] sm:$0xff] %vm2927, %v3408
        %4369 = vst.msk [vmem:[#allocation2 + $0x8] sm:$0xff] %vm2927, %v3409
        %4370 = vst.msk [vmem:[#allocation2 + $0x10] sm:$0xff] %vm2927, %v3410
        %4371 = vst.msk [vmem:[#allocation2 + $0x18] sm:$0xff] %vm2927, %v3411
        %4372 = vst.msk [vmem:[#allocation2 + $0x20] sm:$0xff] %vm2927, %v3412
        %4373 = vst.msk [vmem:[#allocation2 + $0x28] sm:$0xff] %vm2927, %v3413
        %4374 = vst.msk [vmem:[#allocation2 + $0x30] sm:$0xff] %vm2927, %v3414
        %4375 = vst.msk [vmem:[#allocation2 + $0x38] sm:$0xff] %vm2927, %v3415
        %4376 = vst.msk [vmem:[#allocation2 + $0x40] sm:$0xff] %vm2927, %v3416
        %4377 = vst.msk [vmem:[#allocation2 + $0x48] sm:$0xff] %vm2927, %v3417
        %4378 = vst.msk [vmem:[#allocation2 + $0x50] sm:$0xff] %vm2927, %v3418
        %4379 = vst.msk [vmem:[#allocation2 + $0x58] sm:$0xff] %vm2927, %v3419
        %4380 = vst.msk [vmem:[#allocation2 + $0x60] sm:$0xff] %vm2927, %v3420
        %4381 = vst.msk [vmem:[#allocation2 + $0x68] sm:$0xff] %vm2927, %v3421
        %4382 = vst.msk [vmem:[#allocation2 + $0x70] sm:$0xff] %vm2927, %v3422
        %4383 = vst.msk [vmem:[#allocation2 + $0x78] sm:$0xff] %vm2927, %v3423
        %4384 = vst.msk [vmem:[#allocation2 + $0x80] sm:$0xff] %vm2927, %v3424
        %4385 = vst.msk [vmem:[#allocation2 + $0x88] sm:$0xff] %vm2927, %v3425
        %4386 = vst.msk [vmem:[#allocation2 + $0x90] sm:$0xff] %vm2927, %v3426
        %4387 = vst.msk [vmem:[#allocation2 + $0x98] sm:$0xff] %vm2927, %v3427
        %4388 = vst.msk [vmem:[#allocation2 + $0xa0] sm:$0xff] %vm2927, %v3428
        %4389 = vst.msk [vmem:[#allocation2 + $0xa8] sm:$0xff] %vm2927, %v3429
        %4390 = vst.msk [vmem:[#allocation2 + $0xb0] sm:$0xff] %vm2927, %v3430
        %4391 = vst.msk [vmem:[#allocation2 + $0xb8] sm:$0xff] %vm2927, %v3431
        %4392 = vst.msk [vmem:[#allocation2 + $0xc0] sm:$0xff] %vm2927, %v3432
        %4393 = vst.msk [vmem:[#allocation2 + $0xc8] sm:$0xff] %vm2927, %v3433
        %4394 = vst.msk [vmem:[#allocation2 + $0xd0] sm:$0xff] %vm2927, %v3434
        %4395 = vst.msk [vmem:[#allocation2 + $0xd8] sm:$0xff] %vm2927, %v3435
        %4396 = vst.msk [vmem:[#allocation2 + $0xe0] sm:$0xff] %vm2927, %v3436
        %4397 = vst.msk [vmem:[#allocation2 + $0xe8] sm:$0xff] %vm2927, %v3437
        %4398 = vst.msk [vmem:[#allocation2 + $0xf0] sm:$0xff] %vm2927, %v3438
        %4399 = vst.msk [vmem:[#allocation2 + $0xf8] sm:$0xff] %vm2927, %v3439
        // Predicated region
        $region41: #{tpu_custom_call.1} parent=35 // pred_check
          %p4400 = pneg %p275
        $region42: #{tpu_custom_call.1} parent=35 // pred_check_branch
          %4402 = sbr.rel (%p4400) target = $region44
        $region43: #{tpu_custom_call.1} parent=35 // pred_region
          %v4403 = vld [vmem:[#allocation2] sm:$0xff]
          %v4404 = vld [vmem:[#allocation2 + $0x8] sm:$0xff]
          %v4405 = vld [vmem:[#allocation2 + $0x10] sm:$0xff]
          %v4406 = vld [vmem:[#allocation2 + $0x18] sm:$0xff]
          %v4407 = vld [vmem:[#allocation2 + $0x20] sm:$0xff]
          %v4408 = vld [vmem:[#allocation2 + $0x28] sm:$0xff]
          %v4409 = vld [vmem:[#allocation2 + $0x30] sm:$0xff]
          %v4410 = vld [vmem:[#allocation2 + $0x38] sm:$0xff]
          %v4411 = vld [vmem:[#allocation2 + $0x40] sm:$0xff]
          %v4412 = vld [vmem:[#allocation2 + $0x48] sm:$0xff]
          %v4413 = vld [vmem:[#allocation2 + $0x50] sm:$0xff]
          %v4414 = vld [vmem:[#allocation2 + $0x58] sm:$0xff]
          %v4415 = vld [vmem:[#allocation2 + $0x60] sm:$0xff]
          %v4416 = vld [vmem:[#allocation2 + $0x68] sm:$0xff]
          %v4417 = vld [vmem:[#allocation2 + $0x70] sm:$0xff]
          %v4418 = vld [vmem:[#allocation2 + $0x78] sm:$0xff]
          %v4419 = vld [vmem:[#allocation2 + $0x80] sm:$0xff]
          %v4420 = vld [vmem:[#allocation2 + $0x88] sm:$0xff]
          %v4421 = vld [vmem:[#allocation2 + $0x90] sm:$0xff]
          %v4422 = vld [vmem:[#allocation2 + $0x98] sm:$0xff]
          %v4423 = vld [vmem:[#allocation2 + $0xa0] sm:$0xff]
          %v4424 = vld [vmem:[#allocation2 + $0xa8] sm:$0xff]
          %v4425 = vld [vmem:[#allocation2 + $0xb0] sm:$0xff]
          %v4426 = vld [vmem:[#allocation2 + $0xb8] sm:$0xff]
          %v4427 = vld [vmem:[#allocation2 + $0xc0] sm:$0xff]
          %v4428 = vld [vmem:[#allocation2 + $0xc8] sm:$0xff]
          %v4429 = vld [vmem:[#allocation2 + $0xd0] sm:$0xff]
          %v4430 = vld [vmem:[#allocation2 + $0xd8] sm:$0xff]
          %v4431 = vld [vmem:[#allocation2 + $0xe0] sm:$0xff]
          %v4432 = vld [vmem:[#allocation2 + $0xe8] sm:$0xff]
          %v4433 = vld [vmem:[#allocation2 + $0xf0] sm:$0xff]
          %v4434 = vld [vmem:[#allocation2 + $0xf8] sm:$0xff]
          %v4435 = vld [vmem:[#allocation3] sm:$0xff]
          %v4436 = vld [vmem:[#allocation3 + $0x8] sm:$0xff]
          %v4437 = vld [vmem:[#allocation3 + $0x10] sm:$0xff]
          %v4438 = vld [vmem:[#allocation3 + $0x18] sm:$0xff]
          %v4439 = vld [vmem:[#allocation3 + $0x20] sm:$0xff]
          %v4440 = vld [vmem:[#allocation3 + $0x28] sm:$0xff]
          %v4441 = vld [vmem:[#allocation3 + $0x30] sm:$0xff]
          %v4442 = vld [vmem:[#allocation3 + $0x38] sm:$0xff]
          %v4443 = vld [vmem:[#allocation3 + $0x40] sm:$0xff]
          %v4444 = vld [vmem:[#allocation3 + $0x48] sm:$0xff]
          %v4445 = vld [vmem:[#allocation3 + $0x50] sm:$0xff]
          %v4446 = vld [vmem:[#allocation3 + $0x58] sm:$0xff]
          %v4447 = vld [vmem:[#allocation3 + $0x60] sm:$0xff]
          %v4448 = vld [vmem:[#allocation3 + $0x68] sm:$0xff]
          %v4449 = vld [vmem:[#allocation3 + $0x70] sm:$0xff]
          %v4450 = vld [vmem:[#allocation3 + $0x78] sm:$0xff]
          %v4451 = vld [vmem:[#allocation3 + $0x80] sm:$0xff]
          %v4452 = vld [vmem:[#allocation3 + $0x88] sm:$0xff]
          %v4453 = vld [vmem:[#allocation3 + $0x90] sm:$0xff]
          %v4454 = vld [vmem:[#allocation3 + $0x98] sm:$0xff]
          %v4455 = vld [vmem:[#allocation3 + $0xa0] sm:$0xff]
          %v4456 = vld [vmem:[#allocation3 + $0xa8] sm:$0xff]
          %v4457 = vld [vmem:[#allocation3 + $0xb0] sm:$0xff]
          %v4458 = vld [vmem:[#allocation3 + $0xb8] sm:$0xff]
          %v4459 = vld [vmem:[#allocation3 + $0xc0] sm:$0xff]
          %v4460 = vld [vmem:[#allocation3 + $0xc8] sm:$0xff]
          %v4461 = vld [vmem:[#allocation3 + $0xd0] sm:$0xff]
          %v4462 = vld [vmem:[#allocation3 + $0xd8] sm:$0xff]
          %v4463 = vld [vmem:[#allocation3 + $0xe0] sm:$0xff]
          %v4464 = vld [vmem:[#allocation3 + $0xe8] sm:$0xff]
          %v4465 = vld [vmem:[#allocation3 + $0xf0] sm:$0xff]
          %v4466 = vld [vmem:[#allocation3 + $0xf8] sm:$0xff]
          %v4467 = vlog2.pop %v4435
          %v4468 = vmul.f32 %v4467, 0.6931472
          %v4469 = vlog2.pop %v4436
          %v4470 = vmul.f32 %v4469, 0.6931472
          %v4471 = vlog2.pop %v4437
          %v4472 = vmul.f32 %v4471, 0.6931472
          %v4473 = vlog2.pop %v4438
          %v4474 = vmul.f32 %v4473, 0.6931472
          %v4475 = vlog2.pop %v4439
          %v4476 = vmul.f32 %v4475, 0.6931472
          %v4477 = vlog2.pop %v4440
          %v4478 = vmul.f32 %v4477, 0.6931472
          %v4479 = vlog2.pop %v4441
          %v4480 = vmul.f32 %v4479, 0.6931472
          %v4481 = vlog2.pop %v4442
          %v4482 = vmul.f32 %v4481, 0.6931472
          %v4483 = vlog2.pop %v4443
          %v4484 = vmul.f32 %v4483, 0.6931472
          %v4485 = vlog2.pop %v4444
          %v4486 = vmul.f32 %v4485, 0.6931472
          %v4487 = vlog2.pop %v4445
          %v4488 = vmul.f32 %v4487, 0.6931472
          %v4489 = vlog2.pop %v4446
          %v4490 = vmul.f32 %v4489, 0.6931472
          %v4491 = vlog2.pop %v4447
          %v4492 = vmul.f32 %v4491, 0.6931472
          %v4493 = vlog2.pop %v4448
          %v4494 = vmul.f32 %v4493, 0.6931472
          %v4495 = vlog2.pop %v4449
          %v4496 = vmul.f32 %v4495, 0.6931472
          %v4497 = vlog2.pop %v4450
          %v4498 = vmul.f32 %v4497, 0.6931472
          %v4499 = vlog2.pop %v4451
          %v4500 = vmul.f32 %v4499, 0.6931472
          %v4501 = vlog2.pop %v4452
          %v4502 = vmul.f32 %v4501, 0.6931472
          %v4503 = vlog2.pop %v4453
          %v4504 = vmul.f32 %v4503, 0.6931472
          %v4505 = vlog2.pop %v4454
          %v4506 = vmul.f32 %v4505, 0.6931472
          %v4507 = vlog2.pop %v4455
          %v4508 = vmul.f32 %v4507, 0.6931472
          %v4509 = vlog2.pop %v4456
          %v4510 = vmul.f32 %v4509, 0.6931472
          %v4511 = vlog2.pop %v4457
          %v4512 = vmul.f32 %v4511, 0.6931472
          %v4513 = vlog2.pop %v4458
          %v4514 = vmul.f32 %v4513, 0.6931472
          %v4515 = vlog2.pop %v4459
          %v4516 = vmul.f32 %v4515, 0.6931472
          %v4517 = vlog2.pop %v4460
          %v4518 = vmul.f32 %v4517, 0.6931472
          %v4519 = vlog2.pop %v4461
          %v4520 = vmul.f32 %v4519, 0.6931472
          %v4521 = vlog2.pop %v4462
          %v4522 = vmul.f32 %v4521, 0.6931472
          %v4523 = vlog2.pop %v4463
          %v4524 = vmul.f32 %v4523, 0.6931472
          %v4525 = vlog2.pop %v4464
          %v4526 = vmul.f32 %v4525, 0.6931472
          %v4527 = vlog2.pop %v4465
          %v4528 = vmul.f32 %v4527, 0.6931472
          %v4529 = vlog2.pop %v4466
          %v4530 = vmul.f32 %v4529, 0.6931472
          %v4531 = vadd.f32 %v4403, %v4468
          %v4532 = vadd.f32 %v4404, %v4470
          %v4533 = vadd.f32 %v4405, %v4472
          %v4534 = vadd.f32 %v4406, %v4474
          %v4535 = vadd.f32 %v4407, %v4476
          %v4536 = vadd.f32 %v4408, %v4478
          %v4537 = vadd.f32 %v4409, %v4480
          %v4538 = vadd.f32 %v4410, %v4482
          %v4539 = vadd.f32 %v4411, %v4484
          %v4540 = vadd.f32 %v4412, %v4486
          %v4541 = vadd.f32 %v4413, %v4488
          %v4542 = vadd.f32 %v4414, %v4490
          %v4543 = vadd.f32 %v4415, %v4492
          %v4544 = vadd.f32 %v4416, %v4494
          %v4545 = vadd.f32 %v4417, %v4496
          %v4546 = vadd.f32 %v4418, %v4498
          %v4547 = vadd.f32 %v4419, %v4500
          %v4548 = vadd.f32 %v4420, %v4502
          %v4549 = vadd.f32 %v4421, %v4504
          %v4550 = vadd.f32 %v4422, %v4506
          %v4551 = vadd.f32 %v4423, %v4508
          %v4552 = vadd.f32 %v4424, %v4510
          %v4553 = vadd.f32 %v4425, %v4512
          %v4554 = vadd.f32 %v4426, %v4514
          %v4555 = vadd.f32 %v4427, %v4516
          %v4556 = vadd.f32 %v4428, %v4518
          %v4557 = vadd.f32 %v4429, %v4520
          %v4558 = vadd.f32 %v4430, %v4522
          %v4559 = vadd.f32 %v4431, %v4524
          %v4560 = vadd.f32 %v4432, %v4526
          %v4561 = vadd.f32 %v4433, %v4528
          %v4562 = vadd.f32 %v4434, %v4530
          %v4563 = vld [vmem:[#allocation5] sm:$0xff]
          %v4564 = vld [vmem:[#allocation5 + $0x8] sm:$0xff]
          %v4565 = vld [vmem:[#allocation5 + $0x10] sm:$0xff]
          %v4566 = vld [vmem:[#allocation5 + $0x18] sm:$0xff]
          %v4567 = vld [vmem:[#allocation5 + $0x20] sm:$0xff]
          %v4568 = vld [vmem:[#allocation5 + $0x28] sm:$0xff]
          %v4569 = vld [vmem:[#allocation5 + $0x30] sm:$0xff]
          %v4570 = vld [vmem:[#allocation5 + $0x38] sm:$0xff]
          %v4571 = vld [vmem:[#allocation5 + $0x40] sm:$0xff]
          %v4572 = vld [vmem:[#allocation5 + $0x48] sm:$0xff]
          %v4573 = vld [vmem:[#allocation5 + $0x50] sm:$0xff]
          %v4574 = vld [vmem:[#allocation5 + $0x58] sm:$0xff]
          %v4575 = vld [vmem:[#allocation5 + $0x60] sm:$0xff]
          %v4576 = vld [vmem:[#allocation5 + $0x68] sm:$0xff]
          %v4577 = vld [vmem:[#allocation5 + $0x70] sm:$0xff]
          %v4578 = vld [vmem:[#allocation5 + $0x78] sm:$0xff]
          %v4579 = vld [vmem:[#allocation5 + $0x80] sm:$0xff]
          %v4580 = vld [vmem:[#allocation5 + $0x88] sm:$0xff]
          %v4581 = vld [vmem:[#allocation5 + $0x90] sm:$0xff]
          %v4582 = vld [vmem:[#allocation5 + $0x98] sm:$0xff]
          %v4583 = vld [vmem:[#allocation5 + $0xa0] sm:$0xff]
          %v4584 = vld [vmem:[#allocation5 + $0xa8] sm:$0xff]
          %v4585 = vld [vmem:[#allocation5 + $0xb0] sm:$0xff]
          %v4586 = vld [vmem:[#allocation5 + $0xb8] sm:$0xff]
          %v4587 = vld [vmem:[#allocation5 + $0xc0] sm:$0xff]
          %v4588 = vld [vmem:[#allocation5 + $0xc8] sm:$0xff]
          %v4589 = vld [vmem:[#allocation5 + $0xd0] sm:$0xff]
          %v4590 = vld [vmem:[#allocation5 + $0xd8] sm:$0xff]
          %v4591 = vld [vmem:[#allocation5 + $0xe0] sm:$0xff]
          %v4592 = vld [vmem:[#allocation5 + $0xe8] sm:$0xff]
          %v4593 = vld [vmem:[#allocation5 + $0xf0] sm:$0xff]
          %v4594 = vld [vmem:[#allocation5 + $0xf8] sm:$0xff]
          %v4595 = vld [vmem:[#allocation4] sm:$0xff]
          %v4596 = vld [vmem:[#allocation4 + $0x8] sm:$0xff]
          %v4597 = vld [vmem:[#allocation4 + $0x10] sm:$0xff]
          %v4598 = vld [vmem:[#allocation4 + $0x18] sm:$0xff]
          %v4599 = vld [vmem:[#allocation4 + $0x20] sm:$0xff]
          %v4600 = vld [vmem:[#allocation4 + $0x28] sm:$0xff]
          %v4601 = vld [vmem:[#allocation4 + $0x30] sm:$0xff]
          %v4602 = vld [vmem:[#allocation4 + $0x38] sm:$0xff]
          %v4603 = vld [vmem:[#allocation4 + $0x40] sm:$0xff]
          %v4604 = vld [vmem:[#allocation4 + $0x48] sm:$0xff]
          %v4605 = vld [vmem:[#allocation4 + $0x50] sm:$0xff]
          %v4606 = vld [vmem:[#allocation4 + $0x58] sm:$0xff]
          %v4607 = vld [vmem:[#allocation4 + $0x60] sm:$0xff]
          %v4608 = vld [vmem:[#allocation4 + $0x68] sm:$0xff]
          %v4609 = vld [vmem:[#allocation4 + $0x70] sm:$0xff]
          %v4610 = vld [vmem:[#allocation4 + $0x78] sm:$0xff]
          %v4611 = vld [vmem:[#allocation4 + $0x80] sm:$0xff]
          %v4612 = vld [vmem:[#allocation4 + $0x88] sm:$0xff]
          %v4613 = vld [vmem:[#allocation4 + $0x90] sm:$0xff]
          %v4614 = vld [vmem:[#allocation4 + $0x98] sm:$0xff]
          %v4615 = vld [vmem:[#allocation4 + $0xa0] sm:$0xff]
          %v4616 = vld [vmem:[#allocation4 + $0xa8] sm:$0xff]
          %v4617 = vld [vmem:[#allocation4 + $0xb0] sm:$0xff]
          %v4618 = vld [vmem:[#allocation4 + $0xb8] sm:$0xff]
          %v4619 = vld [vmem:[#allocation4 + $0xc0] sm:$0xff]
          %v4620 = vld [vmem:[#allocation4 + $0xc8] sm:$0xff]
          %v4621 = vld [vmem:[#allocation4 + $0xd0] sm:$0xff]
          %v4622 = vld [vmem:[#allocation4 + $0xd8] sm:$0xff]
          %v4623 = vld [vmem:[#allocation4 + $0xe0] sm:$0xff]
          %v4624 = vld [vmem:[#allocation4 + $0xe8] sm:$0xff]
          %v4625 = vld [vmem:[#allocation4 + $0xf0] sm:$0xff]
          %v4626 = vld [vmem:[#allocation4 + $0xf8] sm:$0xff]
          %v4627 = vmul.f32 %v4563, %v4531
          %v4628 = vmul.f32 %v4564, %v4532
          %v4629 = vmul.f32 %v4565, %v4533
          %v4630 = vmul.f32 %v4566, %v4534
          %v4631 = vmul.f32 %v4567, %v4535
          %v4632 = vmul.f32 %v4568, %v4536
          %v4633 = vmul.f32 %v4569, %v4537
          %v4634 = vmul.f32 %v4570, %v4538
          %v4635 = vmul.f32 %v4571, %v4539
          %v4636 = vmul.f32 %v4572, %v4540
          %v4637 = vmul.f32 %v4573, %v4541
          %v4638 = vmul.f32 %v4574, %v4542
          %v4639 = vmul.f32 %v4575, %v4543
          %v4640 = vmul.f32 %v4576, %v4544
          %v4641 = vmul.f32 %v4577, %v4545
          %v4642 = vmul.f32 %v4578, %v4546
          %v4643 = vmul.f32 %v4579, %v4547
          %v4644 = vmul.f32 %v4580, %v4548
          %v4645 = vmul.f32 %v4581, %v4549
          %v4646 = vmul.f32 %v4582, %v4550
          %v4647 = vmul.f32 %v4583, %v4551
          %v4648 = vmul.f32 %v4584, %v4552
          %v4649 = vmul.f32 %v4585, %v4553
          %v4650 = vmul.f32 %v4586, %v4554
          %v4651 = vmul.f32 %v4587, %v4555
          %v4652 = vmul.f32 %v4588, %v4556
          %v4653 = vmul.f32 %v4589, %v4557
          %v4654 = vmul.f32 %v4590, %v4558
          %v4655 = vmul.f32 %v4591, %v4559
          %v4656 = vmul.f32 %v4592, %v4560
          %v4657 = vmul.f32 %v4593, %v4561
          %v4658 = vmul.f32 %v4594, %v4562
          %v4659 = vsub.f32 %v4595, %v4627
          %v4660 = vsub.f32 %v4596, %v4628
          %v4661 = vsub.f32 %v4597, %v4629
          %v4662 = vsub.f32 %v4598, %v4630
          %v4663 = vsub.f32 %v4599, %v4631
          %v4664 = vsub.f32 %v4600, %v4632
          %v4665 = vsub.f32 %v4601, %v4633
          %v4666 = vsub.f32 %v4602, %v4634
          %v4667 = vsub.f32 %v4603, %v4635
          %v4668 = vsub.f32 %v4604, %v4636
          %v4669 = vsub.f32 %v4605, %v4637
          %v4670 = vsub.f32 %v4606, %v4638
          %v4671 = vsub.f32 %v4607, %v4639
          %v4672 = vsub.f32 %v4608, %v4640
          %v4673 = vsub.f32 %v4609, %v4641
          %v4674 = vsub.f32 %v4610, %v4642
          %v4675 = vsub.f32 %v4611, %v4643
          %v4676 = vsub.f32 %v4612, %v4644
          %v4677 = vsub.f32 %v4613, %v4645
          %v4678 = vsub.f32 %v4614, %v4646
          %v4679 = vsub.f32 %v4615, %v4647
          %v4680 = vsub.f32 %v4616, %v4648
          %v4681 = vsub.f32 %v4617, %v4649
          %v4682 = vsub.f32 %v4618, %v4650
          %v4683 = vsub.f32 %v4619, %v4651
          %v4684 = vsub.f32 %v4620, %v4652
          %v4685 = vsub.f32 %v4621, %v4653
          %v4686 = vsub.f32 %v4622, %v4654
          %v4687 = vsub.f32 %v4623, %v4655
          %v4688 = vsub.f32 %v4624, %v4656
          %v4689 = vsub.f32 %v4625, %v4657
          %v4690 = vsub.f32 %v4626, %v4658
          %v4691 = vsub.f32 0.0, %v4659
          %v4692 = vsub.f32 0.0, %v4660
          %v4693 = vsub.f32 0.0, %v4661
          %v4694 = vsub.f32 0.0, %v4662
          %v4695 = vsub.f32 0.0, %v4663
          %v4696 = vsub.f32 0.0, %v4664
          %v4697 = vsub.f32 0.0, %v4665
          %v4698 = vsub.f32 0.0, %v4666
          %v4699 = vsub.f32 0.0, %v4667
          %v4700 = vsub.f32 0.0, %v4668
          %v4701 = vsub.f32 0.0, %v4669
          %v4702 = vsub.f32 0.0, %v4670
          %v4703 = vsub.f32 0.0, %v4671
          %v4704 = vsub.f32 0.0, %v4672
          %v4705 = vsub.f32 0.0, %v4673
          %v4706 = vsub.f32 0.0, %v4674
          %v4707 = vsub.f32 0.0, %v4675
          %v4708 = vsub.f32 0.0, %v4676
          %v4709 = vsub.f32 0.0, %v4677
          %v4710 = vsub.f32 0.0, %v4678
          %v4711 = vsub.f32 0.0, %v4679
          %v4712 = vsub.f32 0.0, %v4680
          %v4713 = vsub.f32 0.0, %v4681
          %v4714 = vsub.f32 0.0, %v4682
          %v4715 = vsub.f32 0.0, %v4683
          %v4716 = vsub.f32 0.0, %v4684
          %v4717 = vsub.f32 0.0, %v4685
          %v4718 = vsub.f32 0.0, %v4686
          %v4719 = vsub.f32 0.0, %v4687
          %v4720 = vsub.f32 0.0, %v4688
          %v4721 = vsub.f32 0.0, %v4689
          %v4722 = vsub.f32 0.0, %v4690
          %v4723 = vmax.f32 %v4563, 1.0
          %v4724 = vmax.f32 %v4564, 1.0
          %v4725 = vmax.f32 %v4565, 1.0
          %v4726 = vmax.f32 %v4566, 1.0
          %v4727 = vmax.f32 %v4567, 1.0
          %v4728 = vmax.f32 %v4568, 1.0
          %v4729 = vmax.f32 %v4569, 1.0
          %v4730 = vmax.f32 %v4570, 1.0
          %v4731 = vmax.f32 %v4571, 1.0
          %v4732 = vmax.f32 %v4572, 1.0
          %v4733 = vmax.f32 %v4573, 1.0
          %v4734 = vmax.f32 %v4574, 1.0
          %v4735 = vmax.f32 %v4575, 1.0
          %v4736 = vmax.f32 %v4576, 1.0
          %v4737 = vmax.f32 %v4577, 1.0
          %v4738 = vmax.f32 %v4578, 1.0
          %v4739 = vmax.f32 %v4579, 1.0
          %v4740 = vmax.f32 %v4580, 1.0
          %v4741 = vmax.f32 %v4581, 1.0
          %v4742 = vmax.f32 %v4582, 1.0
          %v4743 = vmax.f32 %v4583, 1.0
          %v4744 = vmax.f32 %v4584, 1.0
          %v4745 = vmax.f32 %v4585, 1.0
          %v4746 = vmax.f32 %v4586, 1.0
          %v4747 = vmax.f32 %v4587, 1.0
          %v4748 = vmax.f32 %v4588, 1.0
          %v4749 = vmax.f32 %v4589, 1.0
          %v4750 = vmax.f32 %v4590, 1.0
          %v4751 = vmax.f32 %v4591, 1.0
          %v4752 = vmax.f32 %v4592, 1.0
          %v4753 = vmax.f32 %v4593, 1.0
          %v4754 = vmax.f32 %v4594, 1.0
          %v4755 = vrcp.pop %v4723
          %v4756 = vmul.f32 %v4691, %v4755
          %v4757 = vrcp.pop %v4724
          %v4758 = vmul.f32 %v4692, %v4757
          %v4759 = vrcp.pop %v4725
          %v4760 = vmul.f32 %v4693, %v4759
          %v4761 = vrcp.pop %v4726
          %v4762 = vmul.f32 %v4694, %v4761
          %v4763 = vrcp.pop %v4727
          %v4764 = vmul.f32 %v4695, %v4763
          %v4765 = vrcp.pop %v4728
          %v4766 = vmul.f32 %v4696, %v4765
          %v4767 = vrcp.pop %v4729
          %v4768 = vmul.f32 %v4697, %v4767
          %v4769 = vrcp.pop %v4730
          %v4770 = vmul.f32 %v4698, %v4769
          %v4771 = vrcp.pop %v4731
          %v4772 = vmul.f32 %v4699, %v4771
          %v4773 = vrcp.pop %v4732
          %v4774 = vmul.f32 %v4700, %v4773
          %v4775 = vrcp.pop %v4733
          %v4776 = vmul.f32 %v4701, %v4775
          %v4777 = vrcp.pop %v4734
          %v4778 = vmul.f32 %v4702, %v4777
          %v4779 = vrcp.pop %v4735
          %v4780 = vmul.f32 %v4703, %v4779
          %v4781 = vrcp.pop %v4736
          %v4782 = vmul.f32 %v4704, %v4781
          %v4783 = vrcp.pop %v4737
          %v4784 = vmul.f32 %v4705, %v4783
          %v4785 = vrcp.pop %v4738
          %v4786 = vmul.f32 %v4706, %v4785
          %v4787 = vrcp.pop %v4739
          %v4788 = vmul.f32 %v4707, %v4787
          %v4789 = vrcp.pop %v4740
          %v4790 = vmul.f32 %v4708, %v4789
          %v4791 = vrcp.pop %v4741
          %v4792 = vmul.f32 %v4709, %v4791
          %v4793 = vrcp.pop %v4742
          %v4794 = vmul.f32 %v4710, %v4793
          %v4795 = vrcp.pop %v4743
          %v4796 = vmul.f32 %v4711, %v4795
          %v4797 = vrcp.pop %v4744
          %v4798 = vmul.f32 %v4712, %v4797
          %v4799 = vrcp.pop %v4745
          %v4800 = vmul.f32 %v4713, %v4799
          %v4801 = vrcp.pop %v4746
          %v4802 = vmul.f32 %v4714, %v4801
          %v4803 = vrcp.pop %v4747
          %v4804 = vmul.f32 %v4715, %v4803
          %v4805 = vrcp.pop %v4748
          %v4806 = vmul.f32 %v4716, %v4805
          %v4807 = vrcp.pop %v4749
          %v4808 = vmul.f32 %v4717, %v4807
          %v4809 = vrcp.pop %v4750
          %v4810 = vmul.f32 %v4718, %v4809
          %v4811 = vrcp.pop %v4751
          %v4812 = vmul.f32 %v4719, %v4811
          %v4813 = vrcp.pop %v4752
          %v4814 = vmul.f32 %v4720, %v4813
          %v4815 = vrcp.pop %v4753
          %v4816 = vmul.f32 %v4721, %v4815
          %v4817 = vrcp.pop %v4754
          %v4818 = vmul.f32 %v4722, %v4817
          %vm4819 = vcmp.gt.f32.partialorder %v4563, 0.0
          %vm4820 = vcmp.gt.f32.partialorder %v4564, 0.0
          %vm4821 = vcmp.gt.f32.partialorder %v4565, 0.0
          %vm4822 = vcmp.gt.f32.partialorder %v4566, 0.0
          %vm4823 = vcmp.gt.f32.partialorder %v4567, 0.0
          %vm4824 = vcmp.gt.f32.partialorder %v4568, 0.0
          %vm4825 = vcmp.gt.f32.partialorder %v4569, 0.0
          %vm4826 = vcmp.gt.f32.partialorder %v4570, 0.0
          %vm4827 = vcmp.gt.f32.partialorder %v4571, 0.0
          %vm4828 = vcmp.gt.f32.partialorder %v4572, 0.0
          %vm4829 = vcmp.gt.f32.partialorder %v4573, 0.0
          %vm4830 = vcmp.gt.f32.partialorder %v4574, 0.0
          %vm4831 = vcmp.gt.f32.partialorder %v4575, 0.0
          %vm4832 = vcmp.gt.f32.partialorder %v4576, 0.0
          %vm4833 = vcmp.gt.f32.partialorder %v4577, 0.0
          %vm4834 = vcmp.gt.f32.partialorder %v4578, 0.0
          %vm4835 = vcmp.gt.f32.partialorder %v4579, 0.0
          %vm4836 = vcmp.gt.f32.partialorder %v4580, 0.0
          %vm4837 = vcmp.gt.f32.partialorder %v4581, 0.0
          %vm4838 = vcmp.gt.f32.partialorder %v4582, 0.0
          %vm4839 = vcmp.gt.f32.partialorder %v4583, 0.0
          %vm4840 = vcmp.gt.f32.partialorder %v4584, 0.0
          %vm4841 = vcmp.gt.f32.partialorder %v4585, 0.0
          %vm4842 = vcmp.gt.f32.partialorder %v4586, 0.0
          %vm4843 = vcmp.gt.f32.partialorder %v4587, 0.0
          %vm4844 = vcmp.gt.f32.partialorder %v4588, 0.0
          %vm4845 = vcmp.gt.f32.partialorder %v4589, 0.0
          %vm4846 = vcmp.gt.f32.partialorder %v4590, 0.0
          %vm4847 = vcmp.gt.f32.partialorder %v4591, 0.0
          %vm4848 = vcmp.gt.f32.partialorder %v4592, 0.0
          %vm4849 = vcmp.gt.f32.partialorder %v4593, 0.0
          %vm4850 = vcmp.gt.f32.partialorder %v4594, 0.0
          %vm4851 = vcmp.ge.s32.totalorder %v1306, 0
          %vm4852 = vcmp.ge.s32.totalorder %v1307, 0
          %vm4853 = vcmp.ge.s32.totalorder %v1308, 0
          %vm4854 = vcmp.ge.s32.totalorder %v1309, 0
          %vm4855 = vcmp.ge.s32.totalorder %v1310, 0
          %vm4856 = vcmp.ge.s32.totalorder %v1311, 0
          %vm4857 = vcmp.ge.s32.totalorder %v1312, 0
          %vm4858 = vcmp.ge.s32.totalorder %v1313, 0
          %vm4859 = vcmp.ge.s32.totalorder %v1314, 0
          %vm4860 = vcmp.ge.s32.totalorder %v1315, 0
          %vm4861 = vcmp.ge.s32.totalorder %v1316, 0
          %vm4862 = vcmp.ge.s32.totalorder %v1317, 0
          %vm4863 = vcmp.ge.s32.totalorder %v1318, 0
          %vm4864 = vcmp.ge.s32.totalorder %v1319, 0
          %vm4865 = vcmp.ge.s32.totalorder %v1320, 0
          %vm4866 = vcmp.ge.s32.totalorder %v1321, 0
          %vm4867 = vcmp.ge.s32.totalorder %v1322, 0
          %vm4868 = vcmp.ge.s32.totalorder %v1323, 0
          %vm4869 = vcmp.ge.s32.totalorder %v1324, 0
          %vm4870 = vcmp.ge.s32.totalorder %v1325, 0
          %vm4871 = vcmp.ge.s32.totalorder %v1326, 0
          %vm4872 = vcmp.ge.s32.totalorder %v1327, 0
          %vm4873 = vcmp.ge.s32.totalorder %v1328, 0
          %vm4874 = vcmp.ge.s32.totalorder %v1329, 0
          %vm4875 = vcmp.ge.s32.totalorder %v1330, 0
          %vm4876 = vcmp.ge.s32.totalorder %v1331, 0
          %vm4877 = vcmp.ge.s32.totalorder %v1332, 0
          %vm4878 = vcmp.ge.s32.totalorder %v1333, 0
          %vm4879 = vcmp.ge.s32.totalorder %v1334, 0
          %vm4880 = vcmp.ge.s32.totalorder %v1335, 0
          %vm4881 = vcmp.ge.s32.totalorder %v1336, 0
          %vm4882 = vcmp.ge.s32.totalorder %v1337, 0
          %vm4883 = vmand %vm4819, %vm4851
          %vm4884 = vmand %vm4820, %vm4852
          %vm4885 = vmand %vm4821, %vm4853
          %vm4886 = vmand %vm4822, %vm4854
          %vm4887 = vmand %vm4823, %vm4855
          %vm4888 = vmand %vm4824, %vm4856
          %vm4889 = vmand %vm4825, %vm4857
          %vm4890 = vmand %vm4826, %vm4858
          %vm4891 = vmand %vm4827, %vm4859
          %vm4892 = vmand %vm4828, %vm4860
          %vm4893 = vmand %vm4829, %vm4861
          %vm4894 = vmand %vm4830, %vm4862
          %vm4895 = vmand %vm4831, %vm4863
          %vm4896 = vmand %vm4832, %vm4864
          %vm4897 = vmand %vm4833, %vm4865
          %vm4898 = vmand %vm4834, %vm4866
          %vm4899 = vmand %vm4835, %vm4867
          %vm4900 = vmand %vm4836, %vm4868
          %vm4901 = vmand %vm4837, %vm4869
          %vm4902 = vmand %vm4838, %vm4870
          %vm4903 = vmand %vm4839, %vm4871
          %vm4904 = vmand %vm4840, %vm4872
          %vm4905 = vmand %vm4841, %vm4873
          %vm4906 = vmand %vm4842, %vm4874
          %vm4907 = vmand %vm4843, %vm4875
          %vm4908 = vmand %vm4844, %vm4876
          %vm4909 = vmand %vm4845, %vm4877
          %vm4910 = vmand %vm4846, %vm4878
          %vm4911 = vmand %vm4847, %vm4879
          %vm4912 = vmand %vm4848, %vm4880
          %vm4913 = vmand %vm4849, %vm4881
          %vm4914 = vmand %vm4850, %vm4882
          %v4915 = vsel %vm4883, %v4756, 0.0
          %v4916 = vsel %vm4884, %v4758, 0.0
          %v4917 = vsel %vm4885, %v4760, 0.0
          %v4918 = vsel %vm4886, %v4762, 0.0
          %v4919 = vsel %vm4887, %v4764, 0.0
          %v4920 = vsel %vm4888, %v4766, 0.0
          %v4921 = vsel %vm4889, %v4768, 0.0
          %v4922 = vsel %vm4890, %v4770, 0.0
          %v4923 = vsel %vm4891, %v4772, 0.0
          %v4924 = vsel %vm4892, %v4774, 0.0
          %v4925 = vsel %vm4893, %v4776, 0.0
          %v4926 = vsel %vm4894, %v4778, 0.0
          %v4927 = vsel %vm4895, %v4780, 0.0
          %v4928 = vsel %vm4896, %v4782, 0.0
          %v4929 = vsel %vm4897, %v4784, 0.0
          %v4930 = vsel %vm4898, %v4786, 0.0
          %v4931 = vsel %vm4899, %v4788, 0.0
          %v4932 = vsel %vm4900, %v4790, 0.0
          %v4933 = vsel %vm4901, %v4792, 0.0
          %v4934 = vsel %vm4902, %v4794, 0.0
          %v4935 = vsel %vm4903, %v4796, 0.0
          %v4936 = vsel %vm4904, %v4798, 0.0
          %v4937 = vsel %vm4905, %v4800, 0.0
          %v4938 = vsel %vm4906, %v4802, 0.0
          %v4939 = vsel %vm4907, %v4804, 0.0
          %v4940 = vsel %vm4908, %v4806, 0.0
          %v4941 = vsel %vm4909, %v4808, 0.0
          %v4942 = vsel %vm4910, %v4810, 0.0
          %v4943 = vsel %vm4911, %v4812, 0.0
          %v4944 = vsel %vm4912, %v4814, 0.0
          %v4945 = vsel %vm4913, %v4816, 0.0
          %v4946 = vsel %vm4914, %v4818, 0.0
          %4948 = vset.pattern.permute.xlu0 0
          %4949 = vperm.xlu0 %4948, %v4915
          %v4950 = vpop.permute.xlu0 %4949
          %4953 = vset.pattern.permute.xlu0 0
          %4954 = vperm.xlu0 %4953, %v4916
          %v4955 = vpop.permute.xlu0 %4954
          %4958 = vset.pattern.permute.xlu0 0
          %4959 = vperm.xlu0 %4958, %v4917
          %v4960 = vpop.permute.xlu0 %4959
          %4963 = vset.pattern.permute.xlu0 0
          %4964 = vperm.xlu0 %4963, %v4918
          %v4965 = vpop.permute.xlu0 %4964
          %4968 = vset.pattern.permute.xlu0 0
          %4969 = vperm.xlu0 %4968, %v4919
          %v4970 = vpop.permute.xlu0 %4969
          %4973 = vset.pattern.permute.xlu0 0
          %4974 = vperm.xlu0 %4973, %v4920
          %v4975 = vpop.permute.xlu0 %4974
          %4978 = vset.pattern.permute.xlu0 0
          %4979 = vperm.xlu0 %4978, %v4921
          %v4980 = vpop.permute.xlu0 %4979
          %4983 = vset.pattern.permute.xlu0 0
          %4984 = vperm.xlu0 %4983, %v4922
          %v4985 = vpop.permute.xlu0 %4984
          %4988 = vset.pattern.permute.xlu0 0
          %4989 = vperm.xlu0 %4988, %v4923
          %v4990 = vpop.permute.xlu0 %4989
          %4993 = vset.pattern.permute.xlu0 0
          %4994 = vperm.xlu0 %4993, %v4924
          %v4995 = vpop.permute.xlu0 %4994
          %4998 = vset.pattern.permute.xlu0 0
          %4999 = vperm.xlu0 %4998, %v4925
          %v5000 = vpop.permute.xlu0 %4999
          %5003 = vset.pattern.permute.xlu0 0
          %5004 = vperm.xlu0 %5003, %v4926
          %v5005 = vpop.permute.xlu0 %5004
          %5008 = vset.pattern.permute.xlu0 0
          %5009 = vperm.xlu0 %5008, %v4927
          %v5010 = vpop.permute.xlu0 %5009
          %5013 = vset.pattern.permute.xlu0 0
          %5014 = vperm.xlu0 %5013, %v4928
          %v5015 = vpop.permute.xlu0 %5014
          %5018 = vset.pattern.permute.xlu0 0
          %5019 = vperm.xlu0 %5018, %v4929
          %v5020 = vpop.permute.xlu0 %5019
          %5023 = vset.pattern.permute.xlu0 0
          %5024 = vperm.xlu0 %5023, %v4930
          %v5025 = vpop.permute.xlu0 %5024
          %5028 = vset.pattern.permute.xlu0 0
          %5029 = vperm.xlu0 %5028, %v4931
          %v5030 = vpop.permute.xlu0 %5029
          %5033 = vset.pattern.permute.xlu0 0
          %5034 = vperm.xlu0 %5033, %v4932
          %v5035 = vpop.permute.xlu0 %5034
          %5038 = vset.pattern.permute.xlu0 0
          %5039 = vperm.xlu0 %5038, %v4933
          %v5040 = vpop.permute.xlu0 %5039
          %5043 = vset.pattern.permute.xlu0 0
          %5044 = vperm.xlu0 %5043, %v4934
          %v5045 = vpop.permute.xlu0 %5044
          %5048 = vset.pattern.permute.xlu0 0
          %5049 = vperm.xlu0 %5048, %v4935
          %v5050 = vpop.permute.xlu0 %5049
          %5053 = vset.pattern.permute.xlu0 0
          %5054 = vperm.xlu0 %5053, %v4936
          %v5055 = vpop.permute.xlu0 %5054
          %5058 = vset.pattern.permute.xlu0 0
          %5059 = vperm.xlu0 %5058, %v4937
          %v5060 = vpop.permute.xlu0 %5059
          %5063 = vset.pattern.permute.xlu0 0
          %5064 = vperm.xlu0 %5063, %v4938
          %v5065 = vpop.permute.xlu0 %5064
          %5068 = vset.pattern.permute.xlu0 0
          %5069 = vperm.xlu0 %5068, %v4939
          %v5070 = vpop.permute.xlu0 %5069
          %5073 = vset.pattern.permute.xlu0 0
          %5074 = vperm.xlu0 %5073, %v4940
          %v5075 = vpop.permute.xlu0 %5074
          %5078 = vset.pattern.permute.xlu0 0
          %5079 = vperm.xlu0 %5078, %v4941
          %v5080 = vpop.permute.xlu0 %5079
          %5083 = vset.pattern.permute.xlu0 0
          %5084 = vperm.xlu0 %5083, %v4942
          %v5085 = vpop.permute.xlu0 %5084
          %5088 = vset.pattern.permute.xlu0 0
          %5089 = vperm.xlu0 %5088, %v4943
          %v5090 = vpop.permute.xlu0 %5089
          %5093 = vset.pattern.permute.xlu0 0
          %5094 = vperm.xlu0 %5093, %v4944
          %v5095 = vpop.permute.xlu0 %5094
          %5098 = vset.pattern.permute.xlu0 0
          %5099 = vperm.xlu0 %5098, %v4945
          %v5100 = vpop.permute.xlu0 %5099
          %5103 = vset.pattern.permute.xlu0 0
          %5104 = vperm.xlu0 %5103, %v4946
          %v5105 = vpop.permute.xlu0 %5104
          %5107 = vst [vmem:[%s249] sm:$0xff] %v4950
          %5108 = vst [vmem:[%s249 + $0x8] sm:$0xff] %v4955
          %5109 = vst [vmem:[%s249 + $0x10] sm:$0xff] %v4960
          %5110 = vst [vmem:[%s249 + $0x18] sm:$0xff] %v4965
          %5111 = vst [vmem:[%s249 + $0x20] sm:$0xff] %v4970
          %5112 = vst [vmem:[%s249 + $0x28] sm:$0xff] %v4975
          %5113 = vst [vmem:[%s249 + $0x30] sm:$0xff] %v4980
          %5114 = vst [vmem:[%s249 + $0x38] sm:$0xff] %v4985
          %5115 = vst [vmem:[%s249 + $0x40] sm:$0xff] %v4990
          %5116 = vst [vmem:[%s249 + $0x48] sm:$0xff] %v4995
          %5117 = vst [vmem:[%s249 + $0x50] sm:$0xff] %v5000
          %5118 = vst [vmem:[%s249 + $0x58] sm:$0xff] %v5005
          %5119 = vst [vmem:[%s249 + $0x60] sm:$0xff] %v5010
          %5120 = vst [vmem:[%s249 + $0x68] sm:$0xff] %v5015
          %5121 = vst [vmem:[%s249 + $0x70] sm:$0xff] %v5020
          %5122 = vst [vmem:[%s249 + $0x78] sm:$0xff] %v5025
          %5123 = vst [vmem:[%s249 + $0x80] sm:$0xff] %v5030
          %5124 = vst [vmem:[%s249 + $0x88] sm:$0xff] %v5035
          %5125 = vst [vmem:[%s249 + $0x90] sm:$0xff] %v5040
          %5126 = vst [vmem:[%s249 + $0x98] sm:$0xff] %v5045
          %5127 = vst [vmem:[%s249 + $0xa0] sm:$0xff] %v5050
          %5128 = vst [vmem:[%s249 + $0xa8] sm:$0xff] %v5055
          %5129 = vst [vmem:[%s249 + $0xb0] sm:$0xff] %v5060
          %5130 = vst [vmem:[%s249 + $0xb8] sm:$0xff] %v5065
          %5131 = vst [vmem:[%s249 + $0xc0] sm:$0xff] %v5070
          %5132 = vst [vmem:[%s249 + $0xc8] sm:$0xff] %v5075
          %5133 = vst [vmem:[%s249 + $0xd0] sm:$0xff] %v5080
          %5134 = vst [vmem:[%s249 + $0xd8] sm:$0xff] %v5085
          %5135 = vst [vmem:[%s249 + $0xe0] sm:$0xff] %v5090
          %5136 = vst [vmem:[%s249 + $0xe8] sm:$0xff] %v5095
          %5137 = vst [vmem:[%s249 + $0xf0] sm:$0xff] %v5100
          %5138 = vst [vmem:[%s249 + $0xf8] sm:$0xff] %v5105
        $region44: #{tpu_custom_call.1} parent=35 // pred_fallthru
          _
        %s5139 = sand.u32 %s142, 1
        %s5140 = scalar_lea.sflag [#allocation7], %s5139
        %s5141 = sand.u32 %s142, 1
        %s5142 = smul.addr %s5141, 256
        %s5143 = scalar_lea.vmem [#allocation6], %s5142
        // Predicated region
        $region45: #{tpu_custom_call.1} parent=35 // pred_check
          %p5144 = pneg %p152
        $region46: #{tpu_custom_call.1} parent=35 // pred_check_branch
          %5146 = sbr.rel (%p5144) target = $region48
        $region47: #{tpu_custom_call.1} parent=35 // pred_region
          %s5147 = smul.u32 32, %s22
          %s5149 = ssub.s32 4096, 4096
          %5150 = vsyncadd %s5140, %s5149
          %s5151 = smul.addr %s5147, 128
          %s5152 = scalar_lea.hbm %s4, %s5151
          %s5153 = sshll.u32 %s5143, 4
          %s5154 = int_to_ptr.vmem [resolvable:$true] %s5153
          %5159 = dma.vmem_to_hbm [thread:$0]  %s5154, 4096, %s5152, %s5140, 128, 128, 8
        $region48: #{tpu_custom_call.1} parent=35 // pred_fallthru
          _
      $region36: #{tpu_custom_call.1} parent=5 // pred_fallthru
        _
      %p5160 = scmp.le.s32.totalorder 2, %s13
      // Predicated region
      $region49: #{tpu_custom_call.1} parent=5 // pred_check
        %p5161 = pneg %p5160
      $region50: #{tpu_custom_call.1} parent=5 // pred_check_branch
        %5163 = sbr.rel (%p5161) target = $region52
      $region51: #{tpu_custom_call.1} parent=5 // pred_region
        %s5164 = ssub.s32 %s13, 2
        // Predicated region
        $region53: #{tpu_custom_call.1} parent=51 // pred_check
          %p5165 = pneg %p158
        $region54: #{tpu_custom_call.1} parent=51 // pred_check_branch
          %5167 = sbr.rel (%p5165) target = $region56
        $region55: #{tpu_custom_call.1} parent=51 // pred_region
          %s5168 = sand.u32 %s143, 1
          %s5169 = scalar_lea.sflag [#allocation7], %s5168
          %s5170 = sand.u32 %s143, 1
          %s5171 = smul.addr %s5170, 256
          %s5172 = scalar_lea.vmem [#allocation6], %s5171
          %5173 = dma.done %s5169, 4096
        $region56: #{tpu_custom_call.1} parent=51 // pred_fallthru
          _
      $region52: #{tpu_custom_call.1} parent=5 // pred_fallthru
        _
    $region6: #{tpu_custom_call.1} parent=1 // loop_footer
      %s17 = sadd.s32 1, %s13
    $region7: #{tpu_custom_call.1} parent=1 // loop_footer_branch
      %12 = sbr.rel target = $region3
    $region8: #{tpu_custom_call.1} parent=1 // loop_exit
      _
    %5174 = vsyncpa [#allocation7], 1
    %s5175 = scalar_lea.sflag [#allocation7], 1
    %5176 = vsyncpa %s5175, 1

</llo_original>
